<compile_context>
chip_gen: v7x
topology: tpu7x:2x2x1
jax: 0.10.0
libtpu: 0.0.40
codegen_flags: <defaults>
</compile_context>

<pallas_src>
import jax
import jax.numpy as jnp
from jax import lax
from jax.experimental import pallas as pl
from jax.experimental.pallas import tpu as pltpu


# ----------------------------- Pallas kernel ------------------------------ #
def _encoder_gru_kernel(
    xb_ref,    # (S, 2I)    bf16  row t = [x[t] | x[S-1-t]]
    wih_ref,   # (2I, 6Hp)  bf16  input-gate weights, stripes [r_f|r_b|z_f|z_b|n_f|n_b]
    bin_ref,   # (1, 6Hp)   f32   b_ih (all gates) + b_hh (r,z gates) folded in
    whh_ref,   # (2Hp, 6Hp) bf16  block-diagonal recurrent weights (fwd rows 0:Hp, bwd rows Hp:2Hp)
    bhn_ref,   # (1, 2Hp)   f32   [b_hn_f | b_hn_b]
    wfc_ref,   # (2Hp, Dp)  bf16  final Linear weights (padded)
    bfc_ref,   # (1, Dp)    f32
    out_ref,   # (S, 2Hp)   f32   row t = [h_f(t) | h_b(S-1-t)]
    hid_ref,   # (1, Dp)    f32
    gx_ref,    # VMEM scratch (S, 6Hp) f32
):
    S = xb_ref.shape[0]
    Hp = whh_ref.shape[0] // 2

    # Input-side gates for BOTH directions in one MXU matmul (backward inputs are
    # already time-reversed inside xb); biases folded in. Off the critical path.
    gx_ref[...] = (
        jnp.dot(xb_ref[...], wih_ref[...], preferred_element_type=jnp.float32)
        + bin_ref[...]
    )

    bhn = bhn_ref[...]   # (1, 2Hp): small, safe to hoist

    def body(i, h):      # h: (1, 2Hp) f32 carry = [h_f | h_b]
        g = gx_ref[pl.ds(i, 1), :]                                   # (1, 6Hp)
        # Stream the recurrent weights from VMEM every step; do NOT hoist the
        # (2Hp, 6Hp) matrix (it would overflow the 64-vreg file and spill).
        gh = jnp.dot(h.astype(jnp.bfloat16), whh_ref[...],
                     preferred_element_type=jnp.float32)             # (1, 6Hp)
        # One fused sigmoid over [r_f|r_b|z_f|z_b], one tanh over [n_f|n_b].
        s = jax.nn.sigmoid(g[:, : 4 * Hp] + gh[:, : 4 * Hp])
        r = s[:, : 2 * Hp]
        z = s[:, 2 * Hp: 4 * Hp]
        n = jnp.tanh(g[:, 4 * Hp:] + r * (gh[:, 4 * Hp:] + bhn))
        # Padded-lane invariant: all weight/bias padding is exactly zero, so dead
        # lanes of h stay 0 (sigmoid(0)=0.5 cancels because h and n are 0 there).
        h_new = n + z * (h - n)                                      # == (1-z)*n + z*h
        # Lane-dense 2Hp-wide store, off the carried dependency.
        out_ref[pl.ds(i, 1), :] = h_new
        return h_new

    h0 = jnp.zeros((1, 2 * Hp), jnp.float32)
    h_fin = lax.fori_loop(0, S, body, h0, unroll=True)

    # hidden = tanh(fc(cat(h_fwd_final, h_bwd_final))); h_fin is exactly that cat
    # (padded lanes are 0 and meet zero rows of wfc, so they contribute nothing).
    hid_ref[...] = jnp.tanh(
        jnp.dot(h_fin.astype(jnp.bfloat16), wfc_ref[...],
                preferred_element_type=jnp.float32)
        + bfc_ref[...]
    )


# ------------------------------- wrapper ----------------------------------- #
@jax.jit
def encoder_rnn_forward(x, params):
    """x: (S, I) float32.  Returns (output (S, 1, 2H), hidden (1, D))."""
    S, I = x.shape
    H = params["whh_f"].shape[0]
    D = params["wfc"].shape[1]
    Hp = ((H + 127) // 128) * 128
    Dp = ((D + 127) // 128) * 128
    f32, bf16 = jnp.float32, jnp.bfloat16

    # Gate stripe layout (each stripe Hp lanes): [r_f | r_b | z_f | z_b | n_f | n_b]
    def scatter_gates(w_f, w_b, rows, off_f, off_b):
        """Pack per-direction [r|z|n] (each H wide) blocks into the 6-stripe layout."""
        out = jnp.zeros((rows, 6 * Hp), f32)
        for g in range(3):                                # 0:r, 1:z, 2:n
            src_f = w_f[:, g * H:(g + 1) * H]
            src_b = w_b[:, g * H:(g + 1) * H]
            out = out.at[off_f:off_f + w_f.shape[0],
                         2 * g * Hp: 2 * g * Hp + H].set(src_f)
            out = out.at[off_b:off_b + w_b.shape[0],
                         (2 * g + 1) * Hp: (2 * g + 1) * Hp + H].set(src_b)
        return out

    def fold_rz(bih, bhh):
        # Fold b_hh for the r,z gates into the input-side bias (n-gate b_hh stays separate).
        return bih + jnp.concatenate(
            [bhh[:, : 2 * H], jnp.zeros((1, H), bhh.dtype)], axis=1)

    # Packed input: row t = [x[t] | x[S-1-t]] so the backward direction's time
    # reversal is absorbed into the one-shot input-gate precompute.
    x_both = jnp.concatenate([x, x[::-1]], axis=1).astype(bf16)          # (S, 2I)

    wih_cat = scatter_gates(params["wih_f"], params["wih_b"],
                            2 * I, 0, I).astype(bf16)                    # (2I, 6Hp)
    whh_blk = scatter_gates(params["whh_f"], params["whh_b"],
                            2 * Hp, 0, Hp).astype(bf16)                  # (2Hp, 6Hp)
    bin_cat = scatter_gates(fold_rz(params["bih_f"], params["bhh_f"]),
                            fold_rz(params["bih_b"], params["bhh_b"]),
                            1, 0, 0)                                     # (1, 6Hp) f32
    bhn_cat = (jnp.zeros((1, 2 * Hp), f32)
               .at[:, :H].set(params["bhh_f"][:, 2 * H:])
               .at[:, Hp:Hp + H].set(params["bhh_b"][:, 2 * H:]))        # (1, 2Hp)

    wfc = params["wfc"]
    wfc_pad = (jnp.zeros((2 * Hp, Dp), f32)
               .at[:H, :D].set(wfc[:H])
               .at[Hp:Hp + H, :D].set(wfc[H:2 * H])).astype(bf16)        # (2Hp, Dp)
    bfc_pad = jnp.zeros((1, Dp), f32).at[:, :D].set(params["bfc"])       # (1, Dp)

    vmem = pl.BlockSpec(memory_space=pltpu.MemorySpace.VMEM)
    args = (x_both, wih_cat, bin_cat, whh_blk, bhn_cat, wfc_pad, bfc_pad)

    hs, hid_pad = pl.pallas_call(
        _encoder_gru_kernel,
        out_shape=(
            jax.ShapeDtypeStruct((S, 2 * Hp), jnp.float32),
            jax.ShapeDtypeStruct((1, Dp), jnp.float32),
        ),
        in_specs=[vmem] * len(args),
        out_specs=(vmem, vmem),
        scratch_shapes=[pltpu.VMEM((S, 6 * Hp), jnp.float32)],
    )(*args)

    # Un-pad / un-reverse and restore PyTorch shapes: output (S, 1, 2H), hidden (1, D).
    out = jnp.concatenate([hs[:, :H], hs[::-1, Hp:Hp + H]], axis=1).reshape(S, 1, 2 * H)
    hid = hid_pad[:, :D]
    return out, hid


# --------------------------- pure-JAX reference ---------------------------- #
def _reference_forward(x, params, matmul_dtype=None):
    """Reference GRU. If matmul_dtype is set, matmul operands are rounded to that
    dtype (f32 accumulate) to mirror the kernel's bf16 MXU operand rounding."""
    S, _ = x.shape
    H = params["whh_f"].shape[0]

    def mm(a, b):
        if matmul_dtype is not None:
            a, b = a.astype(matmul_dtype), b.astype(matmul_dtype)
        return jnp.dot(a, b, preferred_element_type=jnp.float32)

    def run(wih, whh, bih, bhh, xs):
        gx = mm(xs, wih) + bih                        # (S, 3H)

        def step(h, g):
            g = g[None, :]                            # (1, 3H)
            gh = mm(h, whh) + bhh
            r = jax.nn.sigmoid(g[:, :H] + gh[:, :H])
            z = jax.nn.sigmoid(g[:, H:2 * H] + gh[:, H:2 * H])
            n = jnp.tanh(g[:, 2 * H:] + r * gh[:, 2 * H:])
            h_new = (1.0 - z) * n + z * h
            return h_new, h_new[0]

        h_last, hs = lax.scan(step, jnp.zeros((1, H), jnp.float32), gx)
        return h_last, hs                             # (1, H), (S, H)

    hf, outs_f = run(params["wih_f"], params["whh_f"], params["bih_f"], params["bhh_f"], x)
    hb, outs_b = run(params["wih_b"], params["whh_b"], params["bih_b"], params["bhh_b"], x[::-1])
    out = jnp.concatenate([outs_f, outs_b[::-1]], axis=1).reshape(S, 1, 2 * H)
    cat = jnp.concatenate([hf, hb], axis=1)
    hid = jnp.tanh(mm(cat, params["wfc"]) + params["bfc"])
    return out, hid


# --------------------------------- main ------------------------------------ #
if __name__ == "__main__":
    # Small shapes consistent with the module's forward:
    S = 8          # sequence length
    I = 16         # args.encoder_input_dim
    H = 32         # args.encoder_hidden_dim
    D = 32         # args.decoder_hidden_dim

    key = jax.random.PRNGKey(0)
    ks = jax.random.split(key, 12)
    k_init = 1.0 / jnp.sqrt(jnp.float32(H))  # PyTorch default uniform(-1/sqrt(H), 1/sqrt(H))

    def u(k, shape):
        return jax.random.uniform(k, shape, jnp.float32, -k_init, k_init)

    params = {
        # forward direction (weights stored transposed vs. PyTorch: (in, 3H) / (H, 3H), gate order r,z,n)
        "wih_f": u(ks[0], (I, 3 * H)),
        "whh_f": u(ks[1], (H, 3 * H)),
        "bih_f": u(ks[2], (1, 3 * H)),
        "bhh_f": u(ks[3], (1, 3 * H)),
        # backward direction
        "wih_b": u(ks[4], (I, 3 * H)),
        "whh_b": u(ks[5], (H, 3 * H)),
        "bih_b": u(ks[6], (1, 3 * H)),
        "bhh_b": u(ks[7], (1, 3 * H)),
        # fc: Linear(2H -> D), stored as (2H, D)
        "wfc": u(ks[8], (2 * H, D)),
        "bfc": u(ks[9], (1, D)),
    }

    x = jax.random.normal(ks[10], (S, I), jnp.float32)

    output, hidden = encoder_rnn_forward(x, params)
    jax.block_until_ready((output, hidden))
    assert output.shape == (S, 1, 2 * H) and hidden.shape == (1, D)

    # Strict check: reference with the same bf16 operand rounding the kernel's MXU
    # matmuls use -> verifies gate wiring / time ordering / bias folding exactly.
    ref_out_bf, ref_hid_bf = _reference_forward(x, params, matmul_dtype=jnp.bfloat16)
    assert jnp.allclose(output, ref_out_bf, atol=2e-3, rtol=2e-3)
    assert jnp.allclose(hidden, ref_hid_bf, atol=2e-3, rtol=2e-3)

    # Looser check against the plain-f32 reference (bf16-operand matmul precision class).
    ref_out, ref_hid = _reference_forward(x, params)
    assert jnp.allclose(output, ref_out, atol=2e-2, rtol=2e-2)
    assert jnp.allclose(hidden, ref_hid, atol=2e-2, rtol=2e-2)

    print("KERNEL_OK")
</pallas_src>

<mosaic_0001>
module attributes {stable_mosaic.version = 11 : i64} {
  func.func @_encoder_gru_kernel(%arg0: memref<8x32xbf16, #tpu.memory_space<vmem>>, %arg1: memref<32x768xbf16, #tpu.memory_space<vmem>>, %arg2: memref<1x768xf32, #tpu.memory_space<vmem>>, %arg3: memref<256x768xbf16, #tpu.memory_space<vmem>>, %arg4: memref<1x256xf32, #tpu.memory_space<vmem>>, %arg5: memref<256x128xbf16, #tpu.memory_space<vmem>>, %arg6: memref<1x128xf32, #tpu.memory_space<vmem>>, %arg7: memref<8x256xf32, #tpu.memory_space<vmem>>, %arg8: memref<1x128xf32, #tpu.memory_space<vmem>>, %arg9: memref<8x768xf32, #tpu.memory_space<vmem>>) attributes {dimension_semantics = [], scalar_prefetch = 0 : i64, scratch_operands = 1 : i64, tpu.core_type = #tpu.core_type<tc>} {
    %c0 = arith.constant 0 : index
    %c0_0 = arith.constant 0 : index
    %0 = vector.load %arg0[%c0, %c0_0] : memref<8x32xbf16, #tpu.memory_space<vmem>>, vector<8x32xbf16>
    %c0_1 = arith.constant 0 : index
    %c0_2 = arith.constant 0 : index
    %1 = vector.load %arg1[%c0_1, %c0_2] : memref<32x768xbf16, #tpu.memory_space<vmem>>, vector<32x768xbf16>
    %cst = arith.constant dense<0.000000e+00> : vector<8x768xf32>
    %2 = tpu.matmul %0, %1, %cst {dimension_numbers = #tpu.dot_dimension_numbers<[1], [0], [0], [1], [0, 0, 1, 1], [], []>} : vector<8x32xbf16>, vector<32x768xbf16>, vector<8x768xf32> -> vector<8x768xf32>
    %c0_3 = arith.constant 0 : index
    %c0_4 = arith.constant 0 : index
    %3 = vector.load %arg2[%c0_3, %c0_4] : memref<1x768xf32, #tpu.memory_space<vmem>>, vector<1x768xf32>
    %4 = vector.broadcast %3 : vector<1x768xf32> to vector<8x768xf32>
    %5 = arith.addf %2, %4 : vector<8x768xf32>
    %c0_5 = arith.constant 0 : index
    %c0_6 = arith.constant 0 : index
    %6 = vector.load %arg9[%c0_5, %c0_6] : memref<8x768xf32, #tpu.memory_space<vmem>>, vector<8x768xf32>
    tpu.vector_store %arg9[%c0_5, %c0_6], %5 {strides = array<i32>} : memref<8x768xf32, #tpu.memory_space<vmem>>, vector<8x768xf32>,
    %c0_7 = arith.constant 0 : index
    %c0_8 = arith.constant 0 : index
    %7 = vector.load %arg4[%c0_7, %c0_8] : memref<1x256xf32, #tpu.memory_space<vmem>>, vector<1x256xf32>
    %cst_9 = arith.constant 0.000000e+00 : f32
    %8 = vector.broadcast %cst_9 : f32 to vector<1x256xf32>
    %c0_i32 = arith.constant 0 : i32
    %9 = arith.index_cast %c0_i32 : i32 to index
    %c0_10 = arith.constant 0 : index
    %10 = vector.load %arg9[%9, %c0_10] : memref<8x768xf32, #tpu.memory_space<vmem>>, vector<1x768xf32>
    %11 = arith.truncf %8 : vector<1x256xf32> to vector<1x256xbf16>
    %c0_11 = arith.constant 0 : index
    %c0_12 = arith.constant 0 : index
    %12 = vector.load %arg3[%c0_11, %c0_12] : memref<256x768xbf16, #tpu.memory_space<vmem>>, vector<256x768xbf16>
    %cst_13 = arith.constant dense<0.000000e+00> : vector<1x768xf32>
    %13 = tpu.matmul %11, %12, %cst_13 {dimension_numbers = #tpu.dot_dimension_numbers<[1], [0], [0], [1], [0, 0, 1, 1], [], []>} : vector<1x256xbf16>, vector<256x768xbf16>, vector<1x768xf32> -> vector<1x768xf32>
    %14 = vector.extract_strided_slice %10 {offsets = [0, 0], sizes = [1, 512], strides = [1, 1]} : vector<1x768xf32> to vector<1x512xf32>
    %15 = vector.extract_strided_slice %13 {offsets = [0, 0], sizes = [1, 512], strides = [1, 1]} : vector<1x768xf32> to vector<1x512xf32>
    %16 = arith.addf %14, %15 : vector<1x512xf32>
    %17 = arith.negf %16 : vector<1x512xf32>
    %18 = math.exp %17 : vector<1x512xf32>
    %cst_14 = arith.constant 1.000000e+00 : f32
    %19 = vector.broadcast %cst_14 : f32 to vector<1x512xf32>
    %20 = arith.addf %19, %18 : vector<1x512xf32>
    %21 = arith.divf %19, %20 : vector<1x512xf32>
    %22 = vector.extract_strided_slice %21 {offsets = [0, 0], sizes = [1, 256], strides = [1, 1]} : vector<1x512xf32> to vector<1x256xf32>
    %23 = vector.extract_strided_slice %21 {offsets = [0, 256], sizes = [1, 256], strides = [1, 1]} : vector<1x512xf32> to vector<1x256xf32>
    %24 = vector.extract_strided_slice %10 {offsets = [0, 512], sizes = [1, 256], strides = [1, 1]} : vector<1x768xf32> to vector<1x256xf32>
    %25 = vector.extract_strided_slice %13 {offsets = [0, 512], sizes = [1, 256], strides = [1, 1]} : vector<1x768xf32> to vector<1x256xf32>
    %26 = arith.addf %25, %7 : vector<1x256xf32>
    %27 = arith.mulf %22, %26 : vector<1x256xf32>
    %28 = arith.addf %24, %27 : vector<1x256xf32>
    %29 = math.tanh %28 : vector<1x256xf32>
    %30 = arith.subf %8, %29 : vector<1x256xf32>
    %31 = arith.mulf %23, %30 : vector<1x256xf32>
    %32 = arith.addf %29, %31 : vector<1x256xf32>
    %33 = arith.index_cast %c0_i32 : i32 to index
    %c0_15 = arith.constant 0 : index
    %34 = vector.load %arg7[%33, %c0_15] : memref<8x256xf32, #tpu.memory_space<vmem>>, vector<1x256xf32>
    tpu.vector_store %arg7[%33, %c0_15], %32 {strides = array<i32>} : memref<8x256xf32, #tpu.memory_space<vmem>>, vector<1x256xf32>,
    %c1_i32 = arith.constant 1 : i32
    %35 = arith.index_cast %c1_i32 : i32 to index
    %c0_16 = arith.constant 0 : index
    %36 = vector.load %arg9[%35, %c0_16] : memref<8x768xf32, #tpu.memory_space<vmem>>, vector<1x768xf32>
    %37 = arith.truncf %32 : vector<1x256xf32> to vector<1x256xbf16>
    %c0_17 = arith.constant 0 : index
    %c0_18 = arith.constant 0 : index
    %38 = vector.load %arg3[%c0_17, %c0_18] : memref<256x768xbf16, #tpu.memory_space<vmem>>, vector<256x768xbf16>
    %cst_19 = arith.constant dense<0.000000e+00> : vector<1x768xf32>
    %39 = tpu.matmul %37, %38, %cst_19 {dimension_numbers = #tpu.dot_dimension_numbers<[1], [0], [0], [1], [0, 0, 1, 1], [], []>} : vector<1x256xbf16>, vector<256x768xbf16>, vector<1x768xf32> -> vector<1x768xf32>
    %40 = vector.extract_strided_slice %36 {offsets = [0, 0], sizes = [1, 512], strides = [1, 1]} : vector<1x768xf32> to vector<1x512xf32>
    %41 = vector.extract_strided_slice %39 {offsets = [0, 0], sizes = [1, 512], strides = [1, 1]} : vector<1x768xf32> to vector<1x512xf32>
    %42 = arith.addf %40, %41 : vector<1x512xf32>
    %43 = arith.negf %42 : vector<1x512xf32>
    %44 = math.exp %43 : vector<1x512xf32>
    %cst_20 = arith.constant 1.000000e+00 : f32
    %45 = vector.broadcast %cst_20 : f32 to vector<1x512xf32>
    %46 = arith.addf %45, %44 : vector<1x512xf32>
    %47 = arith.divf %45, %46 : vector<1x512xf32>
    %48 = vector.extract_strided_slice %47 {offsets = [0, 0], sizes = [1, 256], strides = [1, 1]} : vector<1x512xf32> to vector<1x256xf32>
    %49 = vector.extract_strided_slice %47 {offsets = [0, 256], sizes = [1, 256], strides = [1, 1]} : vector<1x512xf32> to vector<1x256xf32>
    %50 = vector.extract_strided_slice %36 {offsets = [0, 512], sizes = [1, 256], strides = [1, 1]} : vector<1x768xf32> to vector<1x256xf32>
    %51 = vector.extract_strided_slice %39 {offsets = [0, 512], sizes = [1, 256], strides = [1, 1]} : vector<1x768xf32> to vector<1x256xf32>
    %52 = arith.addf %51, %7 : vector<1x256xf32>
    %53 = arith.mulf %48, %52 : vector<1x256xf32>
    %54 = arith.addf %50, %53 : vector<1x256xf32>
    %55 = math.tanh %54 : vector<1x256xf32>
    %56 = arith.subf %32, %55 : vector<1x256xf32>
    %57 = arith.mulf %49, %56 : vector<1x256xf32>
    %58 = arith.addf %55, %57 : vector<1x256xf32>
    %59 = arith.index_cast %c1_i32 : i32 to index
    %c0_21 = arith.constant 0 : index
    %60 = vector.load %arg7[%59, %c0_21] : memref<8x256xf32, #tpu.memory_space<vmem>>, vector<1x256xf32>
    tpu.vector_store %arg7[%59, %c0_21], %58 {strides = array<i32>} : memref<8x256xf32, #tpu.memory_space<vmem>>, vector<1x256xf32>,
    %c2_i32 = arith.constant 2 : i32
    %61 = arith.index_cast %c2_i32 : i32 to index
    %c0_22 = arith.constant 0 : index
    %62 = vector.load %arg9[%61, %c0_22] : memref<8x768xf32, #tpu.memory_space<vmem>>, vector<1x768xf32>
    %63 = arith.truncf %58 : vector<1x256xf32> to vector<1x256xbf16>
    %c0_23 = arith.constant 0 : index
    %c0_24 = arith.constant 0 : index
    %64 = vector.load %arg3[%c0_23, %c0_24] : memref<256x768xbf16, #tpu.memory_space<vmem>>, vector<256x768xbf16>
    %cst_25 = arith.constant dense<0.000000e+00> : vector<1x768xf32>
    %65 = tpu.matmul %63, %64, %cst_25 {dimension_numbers = #tpu.dot_dimension_numbers<[1], [0], [0], [1], [0, 0, 1, 1], [], []>} : vector<1x256xbf16>, vector<256x768xbf16>, vector<1x768xf32> -> vector<1x768xf32>
    %66 = vector.extract_strided_slice %62 {offsets = [0, 0], sizes = [1, 512], strides = [1, 1]} : vector<1x768xf32> to vector<1x512xf32>
    %67 = vector.extract_strided_slice %65 {offsets = [0, 0], sizes = [1, 512], strides = [1, 1]} : vector<1x768xf32> to vector<1x512xf32>
    %68 = arith.addf %66, %67 : vector<1x512xf32>
    %69 = arith.negf %68 : vector<1x512xf32>
    %70 = math.exp %69 : vector<1x512xf32>
    %cst_26 = arith.constant 1.000000e+00 : f32
    %71 = vector.broadcast %cst_26 : f32 to vector<1x512xf32>
    %72 = arith.addf %71, %70 : vector<1x512xf32>
    %73 = arith.divf %71, %72 : vector<1x512xf32>
    %74 = vector.extract_strided_slice %73 {offsets = [0, 0], sizes = [1, 256], strides = [1, 1]} : vector<1x512xf32> to vector<1x256xf32>
    %75 = vector.extract_strided_slice %73 {offsets = [0, 256], sizes = [1, 256], strides = [1, 1]} : vector<1x512xf32> to vector<1x256xf32>
    %76 = vector.extract_strided_slice %62 {offsets = [0, 512], sizes = [1, 256], strides = [1, 1]} : vector<1x768xf32> to vector<1x256xf32>
    %77 = vector.extract_strided_slice %65 {offsets = [0, 512], sizes = [1, 256], strides = [1, 1]} : vector<1x768xf32> to vector<1x256xf32>
    %78 = arith.addf %77, %7 : vector<1x256xf32>
    %79 = arith.mulf %74, %78 : vector<1x256xf32>
    %80 = arith.addf %76, %79 : vector<1x256xf32>
    %81 = math.tanh %80 : vector<1x256xf32>
    %82 = arith.subf %58, %81 : vector<1x256xf32>
    %83 = arith.mulf %75, %82 : vector<1x256xf32>
    %84 = arith.addf %81, %83 : vector<1x256xf32>
    %85 = arith.index_cast %c2_i32 : i32 to index
    %c0_27 = arith.constant 0 : index
    %86 = vector.load %arg7[%85, %c0_27] : memref<8x256xf32, #tpu.memory_space<vmem>>, vector<1x256xf32>
    tpu.vector_store %arg7[%85, %c0_27], %84 {strides = array<i32>} : memref<8x256xf32, #tpu.memory_space<vmem>>, vector<1x256xf32>,
    %c3_i32 = arith.constant 3 : i32
    %87 = arith.index_cast %c3_i32 : i32 to index
    %c0_28 = arith.constant 0 : index
    %88 = vector.load %arg9[%87, %c0_28] : memref<8x768xf32, #tpu.memory_space<vmem>>, vector<1x768xf32>
    %89 = arith.truncf %84 : vector<1x256xf32> to vector<1x256xbf16>
    %c0_29 = arith.constant 0 : index
    %c0_30 = arith.constant 0 : index
    %90 = vector.load %arg3[%c0_29, %c0_30] : memref<256x768xbf16, #tpu.memory_space<vmem>>, vector<256x768xbf16>
    %cst_31 = arith.constant dense<0.000000e+00> : vector<1x768xf32>
    %91 = tpu.matmul %89, %90, %cst_31 {dimension_numbers = #tpu.dot_dimension_numbers<[1], [0], [0], [1], [0, 0, 1, 1], [], []>} : vector<1x256xbf16>, vector<256x768xbf16>, vector<1x768xf32> -> vector<1x768xf32>
    %92 = vector.extract_strided_slice %88 {offsets = [0, 0], sizes = [1, 512], strides = [1, 1]} : vector<1x768xf32> to vector<1x512xf32>
    %93 = vector.extract_strided_slice %91 {offsets = [0, 0], sizes = [1, 512], strides = [1, 1]} : vector<1x768xf32> to vector<1x512xf32>
    %94 = arith.addf %92, %93 : vector<1x512xf32>
    %95 = arith.negf %94 : vector<1x512xf32>
    %96 = math.exp %95 : vector<1x512xf32>
    %cst_32 = arith.constant 1.000000e+00 : f32
    %97 = vector.broadcast %cst_32 : f32 to vector<1x512xf32>
    %98 = arith.addf %97, %96 : vector<1x512xf32>
    %99 = arith.divf %97, %98 : vector<1x512xf32>
    %100 = vector.extract_strided_slice %99 {offsets = [0, 0], sizes = [1, 256], strides = [1, 1]} : vector<1x512xf32> to vector<1x256xf32>
    %101 = vector.extract_strided_slice %99 {offsets = [0, 256], sizes = [1, 256], strides = [1, 1]} : vector<1x512xf32> to vector<1x256xf32>
    %102 = vector.extract_strided_slice %88 {offsets = [0, 512], sizes = [1, 256], strides = [1, 1]} : vector<1x768xf32> to vector<1x256xf32>
    %103 = vector.extract_strided_slice %91 {offsets = [0, 512], sizes = [1, 256], strides = [1, 1]} : vector<1x768xf32> to vector<1x256xf32>
    %104 = arith.addf %103, %7 : vector<1x256xf32>
    %105 = arith.mulf %100, %104 : vector<1x256xf32>
    %106 = arith.addf %102, %105 : vector<1x256xf32>
    %107 = math.tanh %106 : vector<1x256xf32>
    %108 = arith.subf %84, %107 : vector<1x256xf32>
    %109 = arith.mulf %101, %108 : vector<1x256xf32>
    %110 = arith.addf %107, %109 : vector<1x256xf32>
    %111 = arith.index_cast %c3_i32 : i32 to index
    %c0_33 = arith.constant 0 : index
    %112 = vector.load %arg7[%111, %c0_33] : memref<8x256xf32, #tpu.memory_space<vmem>>, vector<1x256xf32>
    tpu.vector_store %arg7[%111, %c0_33], %110 {strides = array<i32>} : memref<8x256xf32, #tpu.memory_space<vmem>>, vector<1x256xf32>,
    %c4_i32 = arith.constant 4 : i32
    %113 = arith.index_cast %c4_i32 : i32 to index
    %c0_34 = arith.constant 0 : index
    %114 = vector.load %arg9[%113, %c0_34] : memref<8x768xf32, #tpu.memory_space<vmem>>, vector<1x768xf32>
    %115 = arith.truncf %110 : vector<1x256xf32> to vector<1x256xbf16>
    %c0_35 = arith.constant 0 : index
    %c0_36 = arith.constant 0 : index
    %116 = vector.load %arg3[%c0_35, %c0_36] : memref<256x768xbf16, #tpu.memory_space<vmem>>, vector<256x768xbf16>
    %cst_37 = arith.constant dense<0.000000e+00> : vector<1x768xf32>
    %117 = tpu.matmul %115, %116, %cst_37 {dimension_numbers = #tpu.dot_dimension_numbers<[1], [0], [0], [1], [0, 0, 1, 1], [], []>} : vector<1x256xbf16>, vector<256x768xbf16>, vector<1x768xf32> -> vector<1x768xf32>
    %118 = vector.extract_strided_slice %114 {offsets = [0, 0], sizes = [1, 512], strides = [1, 1]} : vector<1x768xf32> to vector<1x512xf32>
    %119 = vector.extract_strided_slice %117 {offsets = [0, 0], sizes = [1, 512], strides = [1, 1]} : vector<1x768xf32> to vector<1x512xf32>
    %120 = arith.addf %118, %119 : vector<1x512xf32>
    %121 = arith.negf %120 : vector<1x512xf32>
    %122 = math.exp %121 : vector<1x512xf32>
    %cst_38 = arith.constant 1.000000e+00 : f32
    %123 = vector.broadcast %cst_38 : f32 to vector<1x512xf32>
    %124 = arith.addf %123, %122 : vector<1x512xf32>
    %125 = arith.divf %123, %124 : vector<1x512xf32>
    %126 = vector.extract_strided_slice %125 {offsets = [0, 0], sizes = [1, 256], strides = [1, 1]} : vector<1x512xf32> to vector<1x256xf32>
    %127 = vector.extract_strided_slice %125 {offsets = [0, 256], sizes = [1, 256], strides = [1, 1]} : vector<1x512xf32> to vector<1x256xf32>
    %128 = vector.extract_strided_slice %114 {offsets = [0, 512], sizes = [1, 256], strides = [1, 1]} : vector<1x768xf32> to vector<1x256xf32>
    %129 = vector.extract_strided_slice %117 {offsets = [0, 512], sizes = [1, 256], strides = [1, 1]} : vector<1x768xf32> to vector<1x256xf32>
    %130 = arith.addf %129, %7 : vector<1x256xf32>
    %131 = arith.mulf %126, %130 : vector<1x256xf32>
    %132 = arith.addf %128, %131 : vector<1x256xf32>
    %133 = math.tanh %132 : vector<1x256xf32>
    %134 = arith.subf %110, %133 : vector<1x256xf32>
    %135 = arith.mulf %127, %134 : vector<1x256xf32>
    %136 = arith.addf %133, %135 : vector<1x256xf32>
    %137 = arith.index_cast %c4_i32 : i32 to index
    %c0_39 = arith.constant 0 : index
    %138 = vector.load %arg7[%137, %c0_39] : memref<8x256xf32, #tpu.memory_space<vmem>>, vector<1x256xf32>
    tpu.vector_store %arg7[%137, %c0_39], %136 {strides = array<i32>} : memref<8x256xf32, #tpu.memory_space<vmem>>, vector<1x256xf32>,
    %c5_i32 = arith.constant 5 : i32
    %139 = arith.index_cast %c5_i32 : i32 to index
    %c0_40 = arith.constant 0 : index
    %140 = vector.load %arg9[%139, %c0_40] : memref<8x768xf32, #tpu.memory_space<vmem>>, vector<1x768xf32>
    %141 = arith.truncf %136 : vector<1x256xf32> to vector<1x256xbf16>
    %c0_41 = arith.constant 0 : index
    %c0_42 = arith.constant 0 : index
    %142 = vector.load %arg3[%c0_41, %c0_42] : memref<256x768xbf16, #tpu.memory_space<vmem>>, vector<256x768xbf16>
    %cst_43 = arith.constant dense<0.000000e+00> : vector<1x768xf32>
    %143 = tpu.matmul %141, %142, %cst_43 {dimension_numbers = #tpu.dot_dimension_numbers<[1], [0], [0], [1], [0, 0, 1, 1], [], []>} : vector<1x256xbf16>, vector<256x768xbf16>, vector<1x768xf32> -> vector<1x768xf32>
    %144 = vector.extract_strided_slice %140 {offsets = [0, 0], sizes = [1, 512], strides = [1, 1]} : vector<1x768xf32> to vector<1x512xf32>
    %145 = vector.extract_strided_slice %143 {offsets = [0, 0], sizes = [1, 512], strides = [1, 1]} : vector<1x768xf32> to vector<1x512xf32>
    %146 = arith.addf %144, %145 : vector<1x512xf32>
    %147 = arith.negf %146 : vector<1x512xf32>
    %148 = math.exp %147 : vector<1x512xf32>
    %cst_44 = arith.constant 1.000000e+00 : f32
    %149 = vector.broadcast %cst_44 : f32 to vector<1x512xf32>
    %150 = arith.addf %149, %148 : vector<1x512xf32>
    %151 = arith.divf %149, %150 : vector<1x512xf32>
    %152 = vector.extract_strided_slice %151 {offsets = [0, 0], sizes = [1, 256], strides = [1, 1]} : vector<1x512xf32> to vector<1x256xf32>
    %153 = vector.extract_strided_slice %151 {offsets = [0, 256], sizes = [1, 256], strides = [1, 1]} : vector<1x512xf32> to vector<1x256xf32>
    %154 = vector.extract_strided_slice %140 {offsets = [0, 512], sizes = [1, 256], strides = [1, 1]} : vector<1x768xf32> to vector<1x256xf32>
    %155 = vector.extract_strided_slice %143 {offsets = [0, 512], sizes = [1, 256], strides = [1, 1]} : vector<1x768xf32> to vector<1x256xf32>
    %156 = arith.addf %155, %7 : vector<1x256xf32>
    %157 = arith.mulf %152, %156 : vector<1x256xf32>
    %158 = arith.addf %154, %157 : vector<1x256xf32>
    %159 = math.tanh %158 : vector<1x256xf32>
    %160 = arith.subf %136, %159 : vector<1x256xf32>
    %161 = arith.mulf %153, %160 : vector<1x256xf32>
    %162 = arith.addf %159, %161 : vector<1x256xf32>
    %163 = arith.index_cast %c5_i32 : i32 to index
    %c0_45 = arith.constant 0 : index
    %164 = vector.load %arg7[%163, %c0_45] : memref<8x256xf32, #tpu.memory_space<vmem>>, vector<1x256xf32>
    tpu.vector_store %arg7[%163, %c0_45], %162 {strides = array<i32>} : memref<8x256xf32, #tpu.memory_space<vmem>>, vector<1x256xf32>,
    %c6_i32 = arith.constant 6 : i32
    %165 = arith.index_cast %c6_i32 : i32 to index
    %c0_46 = arith.constant 0 : index
    %166 = vector.load %arg9[%165, %c0_46] : memref<8x768xf32, #tpu.memory_space<vmem>>, vector<1x768xf32>
    %167 = arith.truncf %162 : vector<1x256xf32> to vector<1x256xbf16>
    %c0_47 = arith.constant 0 : index
    %c0_48 = arith.constant 0 : index
    %168 = vector.load %arg3[%c0_47, %c0_48] : memref<256x768xbf16, #tpu.memory_space<vmem>>, vector<256x768xbf16>
    %cst_49 = arith.constant dense<0.000000e+00> : vector<1x768xf32>
    %169 = tpu.matmul %167, %168, %cst_49 {dimension_numbers = #tpu.dot_dimension_numbers<[1], [0], [0], [1], [0, 0, 1, 1], [], []>} : vector<1x256xbf16>, vector<256x768xbf16>, vector<1x768xf32> -> vector<1x768xf32>
    %170 = vector.extract_strided_slice %166 {offsets = [0, 0], sizes = [1, 512], strides = [1, 1]} : vector<1x768xf32> to vector<1x512xf32>
    %171 = vector.extract_strided_slice %169 {offsets = [0, 0], sizes = [1, 512], strides = [1, 1]} : vector<1x768xf32> to vector<1x512xf32>
    %172 = arith.addf %170, %171 : vector<1x512xf32>
    %173 = arith.negf %172 : vector<1x512xf32>
    %174 = math.exp %173 : vector<1x512xf32>
    %cst_50 = arith.constant 1.000000e+00 : f32
    %175 = vector.broadcast %cst_50 : f32 to vector<1x512xf32>
    %176 = arith.addf %175, %174 : vector<1x512xf32>
    %177 = arith.divf %175, %176 : vector<1x512xf32>
    %178 = vector.extract_strided_slice %177 {offsets = [0, 0], sizes = [1, 256], strides = [1, 1]} : vector<1x512xf32> to vector<1x256xf32>
    %179 = vector.extract_strided_slice %177 {offsets = [0, 256], sizes = [1, 256], strides = [1, 1]} : vector<1x512xf32> to vector<1x256xf32>
    %180 = vector.extract_strided_slice %166 {offsets = [0, 512], sizes = [1, 256], strides = [1, 1]} : vector<1x768xf32> to vector<1x256xf32>
    %181 = vector.extract_strided_slice %169 {offsets = [0, 512], sizes = [1, 256], strides = [1, 1]} : vector<1x768xf32> to vector<1x256xf32>
    %182 = arith.addf %181, %7 : vector<1x256xf32>
    %183 = arith.mulf %178, %182 : vector<1x256xf32>
    %184 = arith.addf %180, %183 : vector<1x256xf32>
    %185 = math.tanh %184 : vector<1x256xf32>
    %186 = arith.subf %162, %185 : vector<1x256xf32>
    %187 = arith.mulf %179, %186 : vector<1x256xf32>
    %188 = arith.addf %185, %187 : vector<1x256xf32>
    %189 = arith.index_cast %c6_i32 : i32 to index
    %c0_51 = arith.constant 0 : index
    %190 = vector.load %arg7[%189, %c0_51] : memref<8x256xf32, #tpu.memory_space<vmem>>, vector<1x256xf32>
    tpu.vector_store %arg7[%189, %c0_51], %188 {strides = array<i32>} : memref<8x256xf32, #tpu.memory_space<vmem>>, vector<1x256xf32>,
    %c7_i32 = arith.constant 7 : i32
    %191 = arith.index_cast %c7_i32 : i32 to index
    %c0_52 = arith.constant 0 : index
    %192 = vector.load %arg9[%191, %c0_52] : memref<8x768xf32, #tpu.memory_space<vmem>>, vector<1x768xf32>
    %193 = arith.truncf %188 : vector<1x256xf32> to vector<1x256xbf16>
    %c0_53 = arith.constant 0 : index
    %c0_54 = arith.constant 0 : index
    %194 = vector.load %arg3[%c0_53, %c0_54] : memref<256x768xbf16, #tpu.memory_space<vmem>>, vector<256x768xbf16>
    %cst_55 = arith.constant dense<0.000000e+00> : vector<1x768xf32>
    %195 = tpu.matmul %193, %194, %cst_55 {dimension_numbers = #tpu.dot_dimension_numbers<[1], [0], [0], [1], [0, 0, 1, 1], [], []>} : vector<1x256xbf16>, vector<256x768xbf16>, vector<1x768xf32> -> vector<1x768xf32>
    %196 = vector.extract_strided_slice %192 {offsets = [0, 0], sizes = [1, 512], strides = [1, 1]} : vector<1x768xf32> to vector<1x512xf32>
    %197 = vector.extract_strided_slice %195 {offsets = [0, 0], sizes = [1, 512], strides = [1, 1]} : vector<1x768xf32> to vector<1x512xf32>
    %198 = arith.addf %196, %197 : vector<1x512xf32>
    %199 = arith.negf %198 : vector<1x512xf32>
    %200 = math.exp %199 : vector<1x512xf32>
    %cst_56 = arith.constant 1.000000e+00 : f32
    %201 = vector.broadcast %cst_56 : f32 to vector<1x512xf32>
    %202 = arith.addf %201, %200 : vector<1x512xf32>
    %203 = arith.divf %201, %202 : vector<1x512xf32>
    %204 = vector.extract_strided_slice %203 {offsets = [0, 0], sizes = [1, 256], strides = [1, 1]} : vector<1x512xf32> to vector<1x256xf32>
    %205 = vector.extract_strided_slice %203 {offsets = [0, 256], sizes = [1, 256], strides = [1, 1]} : vector<1x512xf32> to vector<1x256xf32>
    %206 = vector.extract_strided_slice %192 {offsets = [0, 512], sizes = [1, 256], strides = [1, 1]} : vector<1x768xf32> to vector<1x256xf32>
    %207 = vector.extract_strided_slice %195 {offsets = [0, 512], sizes = [1, 256], strides = [1, 1]} : vector<1x768xf32> to vector<1x256xf32>
    %208 = arith.addf %207, %7 : vector<1x256xf32>
    %209 = arith.mulf %204, %208 : vector<1x256xf32>
    %210 = arith.addf %206, %209 : vector<1x256xf32>
    %211 = math.tanh %210 : vector<1x256xf32>
    %212 = arith.subf %188, %211 : vector<1x256xf32>
    %213 = arith.mulf %205, %212 : vector<1x256xf32>
    %214 = arith.addf %211, %213 : vector<1x256xf32>
    %215 = arith.index_cast %c7_i32 : i32 to index
    %c0_57 = arith.constant 0 : index
    %216 = vector.load %arg7[%215, %c0_57] : memref<8x256xf32, #tpu.memory_space<vmem>>, vector<1x256xf32>
    tpu.vector_store %arg7[%215, %c0_57], %214 {strides = array<i32>} : memref<8x256xf32, #tpu.memory_space<vmem>>, vector<1x256xf32>,
    %c8_i32 = arith.constant 8 : i32
    %217 = arith.truncf %214 : vector<1x256xf32> to vector<1x256xbf16>
    %c0_58 = arith.constant 0 : index
    %c0_59 = arith.constant 0 : index
    %218 = vector.load %arg5[%c0_58, %c0_59] : memref<256x128xbf16, #tpu.memory_space<vmem>>, vector<256x128xbf16>
    %cst_60 = arith.constant dense<0.000000e+00> : vector<1x128xf32>
    %219 = tpu.matmul %217, %218, %cst_60 {dimension_numbers = #tpu.dot_dimension_numbers<[1], [0], [0], [1], [0, 0, 1, 1], [], []>} : vector<1x256xbf16>, vector<256x128xbf16>, vector<1x128xf32> -> vector<1x128xf32>
    %c0_61 = arith.constant 0 : index
    %c0_62 = arith.constant 0 : index
    %220 = vector.load %arg6[%c0_61, %c0_62] : memref<1x128xf32, #tpu.memory_space<vmem>>, vector<1x128xf32>
    %221 = arith.addf %219, %220 : vector<1x128xf32>
    %222 = math.tanh %221 : vector<1x128xf32>
    %c0_63 = arith.constant 0 : index
    %c0_64 = arith.constant 0 : index
    %223 = vector.load %arg8[%c0_63, %c0_64] : memref<1x128xf32, #tpu.memory_space<vmem>>, vector<1x128xf32>
    tpu.vector_store %arg8[%c0_63, %c0_64], %222 {strides = array<i32>} : memref<1x128xf32, #tpu.memory_space<vmem>>, vector<1x128xf32>,
    return
  }
}

</mosaic_0001>

<llo_original>
// kernel: encoder_rnn_forward.1
$region0: #{encoder_rnn_forward.1}
  #allocation0 [shape = 'u32[]', space=smem, size = 0x4, offset = 0x4, fixed_abs, tag = 'smem constant byte address 0x4 - core index']
  #allocation1 [shape = 'u32[144,128]{1,0:T(1,128)}', space=vmem, size = 0x12000, scoped, tag = 'internal scratch']
  #allocation2 [shape = 'f32[8,768]{1,0:T(8,128)}', space=vmem, size = 0x6000, scoped, tag = 'scratch operand']
  %s0 = inlined_call_operand.vmem [shape: bf16[8,32], index: 0, kind: input, shape index: {}]
  %s1 = inlined_call_operand.vmem [shape: bf16[32,768], index: 1, kind: input, shape index: {}]
  %s2 = inlined_call_operand.vmem [shape: f32[1,768], index: 2, kind: input, shape index: {}]
  %s3 = inlined_call_operand.vmem [shape: bf16[256,768], index: 3, kind: input, shape index: {}]
  %s4 = inlined_call_operand.vmem [shape: f32[1,256], index: 4, kind: input, shape index: {}]
  %s5 = inlined_call_operand.vmem [shape: bf16[256,128], index: 5, kind: input, shape index: {}]
  %s6 = inlined_call_operand.vmem [shape: f32[1,128], index: 6, kind: input, shape index: {}]
  %s7 = inlined_call_operand.vmem [shape: f32[8,256], index: 7, kind: output, shape index: {0}]
  %s8 = inlined_call_operand.hbm [shape: f32[1,128], index: 8, kind: output, shape index: {1}]
  %9 = xla_tuple %s7, %s8
  %s10 = sld [smem:[#allocation0]]
  $region46: #{encoder_rnn_forward.1} parent=0
    _
  %s12 = ssub.s32 1, %s10
  %s13 = scalar_select 0, %s12, %s10
  $region1: #{encoder_rnn_forward.1} parent=0
    #allocation3 [shape = 'u8[512]{0}', space=vmem, size = 0x400, scoped, tag = 'output window, operand 1, single buffered']
    #allocation4 [shape = 's32[1]{0}', space=sflag, size = 0x4, scoped, tag = 'scoped memory for encoder_rnn_forward.1']
    %14 = vsyncpa [#allocation4], 0
    // Predicated region
    $region2: #{encoder_rnn_forward.1} parent=1 // pred_check
      _
    $region3: #{encoder_rnn_forward.1} parent=1 // pred_check_branch
      %16 = sbr.rel (0) target = $region5
    $region4: #{encoder_rnn_forward.1} parent=1 // pred_region
      _
    $region5: #{encoder_rnn_forward.1} parent=1 // pred_fallthru
      _
    // Predicated region
    $region6: #{encoder_rnn_forward.1} parent=1 // pred_check
      _
    $region7: #{encoder_rnn_forward.1} parent=1 // pred_check_branch
      %18 = sbr.rel (0) target = $region9
    $region8: #{encoder_rnn_forward.1} parent=1 // pred_region
      _
    $region9: #{encoder_rnn_forward.1} parent=1 // pred_fallthru
      _
    // Predicated region
    $region10: #{encoder_rnn_forward.1} parent=1 // pred_check
      _
    $region11: #{encoder_rnn_forward.1} parent=1 // pred_check_branch
      %20 = sbr.rel (0) target = $region13
    $region12: #{encoder_rnn_forward.1} parent=1 // pred_region
      _
    $region13: #{encoder_rnn_forward.1} parent=1 // pred_fallthru
      _
    // Predicated region
    $region14: #{encoder_rnn_forward.1} parent=1 // pred_check
      _
    $region15: #{encoder_rnn_forward.1} parent=1 // pred_check_branch
      %22 = sbr.rel (0) target = $region17
    $region16: #{encoder_rnn_forward.1} parent=1 // pred_region
      _
    $region17: #{encoder_rnn_forward.1} parent=1 // pred_fallthru
      _
    // Predicated region
    $region18: #{encoder_rnn_forward.1} parent=1 // pred_check
      _
    $region19: #{encoder_rnn_forward.1} parent=1 // pred_check_branch
      %24 = sbr.rel (0) target = $region21
    $region20: #{encoder_rnn_forward.1} parent=1 // pred_region
      _
    $region21: #{encoder_rnn_forward.1} parent=1 // pred_fallthru
      _
    // Predicated region
    $region22: #{encoder_rnn_forward.1} parent=1 // pred_check
      _
    $region23: #{encoder_rnn_forward.1} parent=1 // pred_check_branch
      %26 = sbr.rel (0) target = $region25
    $region24: #{encoder_rnn_forward.1} parent=1 // pred_region
      _
    $region25: #{encoder_rnn_forward.1} parent=1 // pred_fallthru
      _
    // Predicated region
    $region26: #{encoder_rnn_forward.1} parent=1 // pred_check
      _
    $region27: #{encoder_rnn_forward.1} parent=1 // pred_check_branch
      %28 = sbr.rel (0) target = $region29
    $region28: #{encoder_rnn_forward.1} parent=1 // pred_region
      _
    $region29: #{encoder_rnn_forward.1} parent=1 // pred_fallthru
      _
    %v30 = vld [vmem:[%s0] sm:$0xf]
    %v31 = vld [vmem:[%s1] sm:$0xff]
    %v32 = vld [vmem:[%s1 + $0x8] sm:$0xff]
    %v33 = vld [vmem:[%s1 + $0x10] sm:$0xff]
    %v34 = vld [vmem:[%s1 + $0x18] sm:$0xff]
    %v35 = vld [vmem:[%s1 + $0x20] sm:$0xff]
    %v36 = vld [vmem:[%s1 + $0x28] sm:$0xff]
    %v37 = vld [vmem:[%s1 + $0x30] sm:$0xff]
    %v38 = vld [vmem:[%s1 + $0x38] sm:$0xff]
    %v39 = vld [vmem:[%s1 + $0x40] sm:$0xff]
    %v40 = vld [vmem:[%s1 + $0x48] sm:$0xff]
    %v41 = vld [vmem:[%s1 + $0x50] sm:$0xff]
    %v42 = vld [vmem:[%s1 + $0x58] sm:$0xff]
    %v43 = vld [vmem:[%s2] sm:$0x3f]
    %v45 = vlaneseq
    %v46 = vshrl.u32 %v45, 7
    %v47 = vsub.s32 0, %v46
    %v48 = vrot.slane %v43, %v47
    %v49 = vlaneseq
    %v50 = vshrl.u32 %v49, 7
    %v51 = vsub.s32 1, %v50
    %v52 = vrot.slane %v43, %v51
    %v53 = vlaneseq
    %v54 = vshrl.u32 %v53, 7
    %v55 = vsub.s32 2, %v54
    %v56 = vrot.slane %v43, %v55
    %v57 = vlaneseq
    %v58 = vshrl.u32 %v57, 7
    %v59 = vsub.s32 3, %v58
    %v60 = vrot.slane %v43, %v59
    %v61 = vlaneseq
    %v62 = vshrl.u32 %v61, 7
    %v63 = vsub.s32 4, %v62
    %v64 = vrot.slane %v43, %v63
    %v65 = vlaneseq
    %v66 = vshrl.u32 %v65, 7
    %v67 = vsub.s32 5, %v66
    %v68 = vrot.slane %v43, %v67
    %v87 = vunpack.c.l.b16 %v31
    %v88 = vunpack.c.h.b16 %v31
    %v89 = vunpack.c.l.b16 %v32
    %v90 = vunpack.c.h.b16 %v32
    %v91 = vunpack.c.l.b16 %v33
    %v92 = vunpack.c.h.b16 %v33
    %v93 = vunpack.c.l.b16 %v34
    %v94 = vunpack.c.h.b16 %v34
    %v95 = vunpack.c.l.b16 %v35
    %v96 = vunpack.c.h.b16 %v35
    %v97 = vunpack.c.l.b16 %v36
    %v98 = vunpack.c.h.b16 %v36
    %v99 = vunpack.c.l.b16 %v37
    %v100 = vunpack.c.h.b16 %v37
    %v101 = vunpack.c.l.b16 %v38
    %v102 = vunpack.c.h.b16 %v38
    %v103 = vunpack.c.l.b16 %v39
    %v104 = vunpack.c.h.b16 %v39
    %v105 = vunpack.c.l.b16 %v40
    %v106 = vunpack.c.h.b16 %v40
    %v107 = vunpack.c.l.b16 %v41
    %v108 = vunpack.c.h.b16 %v41
    %v109 = vunpack.c.l.b16 %v42
    %v110 = vunpack.c.h.b16 %v42
    %v111 = vpack.c.b16 %v93, %v87
    %v112 = vpack.c.b16 %v94, %v88
    %v113 = vpack.c.b16 %v95, %v89
    %v114 = vpack.c.b16 %v96, %v90
    %v115 = vpack.c.b16 %v97, %v91
    %v116 = vpack.c.b16 %v98, %v92
    %v117 = vpack.c.b16 %v105, %v99
    %v118 = vpack.c.b16 %v106, %v100
    %v119 = vpack.c.b16 %v107, %v101
    %v120 = vpack.c.b16 %v108, %v102
    %v121 = vpack.c.b16 %v109, %v103
    %v122 = vpack.c.b16 %v110, %v104
    %vm135 = vcmask 261120
    %v137 = vsel %vm135, %v30, 0
    %139 = vmatprep.subr.bf16.mxu0 %v112
    %140 = vmatpush1.bf16.msra.mxu0 %v111
    %141 = vmatprep.subr.bf16.mxu0 %v118
    %142 = vmatpush1.bf16.msra.mxu0 %v117
    %143 = vmatprep.subr.bf16.mxu0 0
    %144 = vmatpush1.bf16.msra.mxu0 0
    %145 = vmatprep.subr.bf16.mxu0 0
    %146 = vmatpush1.bf16.msra.mxu0 0
    %147 = vmatprep.subr.bf16.mxu0 0
    %148 = vmatpush1.bf16.msra.mxu0 0
    %149 = vmatprep.subr.bf16.mxu0 0
    %150 = vmatpush1.bf16.msra.mxu0 0
    %151 = vmatprep.subr.bf16.mxu0 0
    %152 = vmatpush1.bf16.msra.mxu0 0
    %153 = vmatprep.subr.bf16.mxu0 0
    %154 = vmatpush1.bf16.msra.mxu0 0
    %155 = vmatprep.subr.bf16.mxu0 0
    %156 = vmatpush1.bf16.msra.mxu0 0
    %157 = vmatprep.subr.bf16.mxu0 0
    %158 = vmatpush1.bf16.msra.mxu0 0
    %159 = vmatprep.subr.bf16.mxu0 0
    %160 = vmatpush1.bf16.msra.mxu0 0
    %161 = vmatprep.subr.bf16.mxu0 0
    %162 = vmatpush1.bf16.msra.mxu0 0
    %163 = vmatprep.subr.bf16.mxu0 0
    %164 = vmatpush1.bf16.msra.mxu0 0
    %165 = vmatprep.subr.bf16.mxu0 0
    %166 = vmatpush1.bf16.msra.mxu0 0
    %167 = vmatprep.subr.bf16.mxu0 0
    %168 = vmatpush1.bf16.msra.mxu0 0
    %169 = vmatprep.subr.bf16.mxu0 0
    %170 = vmatpush1.bf16.msra.mxu0 0
    %171 = vmatprep.mubr.bf16.mxu0 0
    %172 = vmatmul.mubr.bf16.gmra.mrb[0].mxu0 %v137
    %v173 = vpop.f32.mrb[0].mxu0
    %v174 = vadd.f32 %v48, %v173
    %v175 = vpop.f32.mrb[0].mxu0
    %v176 = vadd.f32 %v52, %v175
    %v177 = vpop.f32.mrb[0].mxu0
    %v178 = vpop.f32.mrb[0].mxu0
    %179 = vdwg.mxu0
    %180 = vmatprep.subr.bf16.mxu0 %v114
    %181 = vmatpush1.bf16.msra.mxu0 %v113
    %182 = vmatprep.subr.bf16.mxu0 %v120
    %183 = vmatpush1.bf16.msra.mxu0 %v119
    %184 = vmatprep.subr.bf16.mxu0 0
    %185 = vmatpush1.bf16.msra.mxu0 0
    %186 = vmatprep.subr.bf16.mxu0 0
    %187 = vmatpush1.bf16.msra.mxu0 0
    %188 = vmatprep.subr.bf16.mxu0 0
    %189 = vmatpush1.bf16.msra.mxu0 0
    %190 = vmatprep.subr.bf16.mxu0 0
    %191 = vmatpush1.bf16.msra.mxu0 0
    %192 = vmatprep.subr.bf16.mxu0 0
    %193 = vmatpush1.bf16.msra.mxu0 0
    %194 = vmatprep.subr.bf16.mxu0 0
    %195 = vmatpush1.bf16.msra.mxu0 0
    %196 = vmatprep.subr.bf16.mxu0 0
    %197 = vmatpush1.bf16.msra.mxu0 0
    %198 = vmatprep.subr.bf16.mxu0 0
    %199 = vmatpush1.bf16.msra.mxu0 0
    %200 = vmatprep.subr.bf16.mxu0 0
    %201 = vmatpush1.bf16.msra.mxu0 0
    %202 = vmatprep.subr.bf16.mxu0 0
    %203 = vmatpush1.bf16.msra.mxu0 0
    %204 = vmatprep.subr.bf16.mxu0 0
    %205 = vmatpush1.bf16.msra.mxu0 0
    %206 = vmatprep.subr.bf16.mxu0 0
    %207 = vmatpush1.bf16.msra.mxu0 0
    %208 = vmatprep.subr.bf16.mxu0 0
    %209 = vmatpush1.bf16.msra.mxu0 0
    %210 = vmatprep.subr.bf16.mxu0 0
    %211 = vmatpush1.bf16.msra.mxu0 0
    %212 = vmatprep.mubr.bf16.mxu0 0
    %213 = vmatmul.mubr.bf16.gmra.mrb[0].mxu0 %v137
    %v214 = vpop.f32.mrb[0].mxu0
    %v215 = vadd.f32 %v56, %v214
    %v216 = vpop.f32.mrb[0].mxu0
    %v217 = vadd.f32 %v60, %v216
    %v218 = vpop.f32.mrb[0].mxu0
    %v219 = vpop.f32.mrb[0].mxu0
    %220 = vdwg.mxu0
    %221 = vmatprep.subr.bf16.mxu0 %v116
    %222 = vmatpush1.bf16.msra.mxu0 %v115
    %223 = vmatprep.subr.bf16.mxu0 %v122
    %224 = vmatpush1.bf16.msra.mxu0 %v121
    %225 = vmatprep.subr.bf16.mxu0 0
    %226 = vmatpush1.bf16.msra.mxu0 0
    %227 = vmatprep.subr.bf16.mxu0 0
    %228 = vmatpush1.bf16.msra.mxu0 0
    %229 = vmatprep.subr.bf16.mxu0 0
    %230 = vmatpush1.bf16.msra.mxu0 0
    %231 = vmatprep.subr.bf16.mxu0 0
    %232 = vmatpush1.bf16.msra.mxu0 0
    %233 = vmatprep.subr.bf16.mxu0 0
    %234 = vmatpush1.bf16.msra.mxu0 0
    %235 = vmatprep.subr.bf16.mxu0 0
    %236 = vmatpush1.bf16.msra.mxu0 0
    %237 = vmatprep.subr.bf16.mxu0 0
    %238 = vmatpush1.bf16.msra.mxu0 0
    %239 = vmatprep.subr.bf16.mxu0 0
    %240 = vmatpush1.bf16.msra.mxu0 0
    %241 = vmatprep.subr.bf16.mxu0 0
    %242 = vmatpush1.bf16.msra.mxu0 0
    %243 = vmatprep.subr.bf16.mxu0 0
    %244 = vmatpush1.bf16.msra.mxu0 0
    %245 = vmatprep.subr.bf16.mxu0 0
    %246 = vmatpush1.bf16.msra.mxu0 0
    %247 = vmatprep.subr.bf16.mxu0 0
    %248 = vmatpush1.bf16.msra.mxu0 0
    %249 = vmatprep.subr.bf16.mxu0 0
    %250 = vmatpush1.bf16.msra.mxu0 0
    %251 = vmatprep.subr.bf16.mxu0 0
    %252 = vmatpush1.bf16.msra.mxu0 0
    %253 = vmatprep.mubr.bf16.mxu0 0
    %254 = vmatmul.mubr.bf16.gmra.mrb[0].mxu0 %v137
    %v255 = vpop.f32.mrb[0].mxu0
    %v256 = vadd.f32 %v64, %v255
    %v257 = vpop.f32.mrb[0].mxu0
    %v258 = vadd.f32 %v68, %v257
    %v259 = vpop.f32.mrb[0].mxu0
    %v260 = vpop.f32.mrb[0].mxu0
    %261 = vdwg.mxu0
    %262 = vst [vmem:[#allocation2] sm:$0xff] %v174
    %263 = vst [vmem:[#allocation2 + $0x8] sm:$0xff] %v176
    %264 = vst [vmem:[#allocation2 + $0x10] sm:$0xff] %v215
    %265 = vst [vmem:[#allocation2 + $0x18] sm:$0xff] %v217
    %266 = vst [vmem:[#allocation2 + $0x20] sm:$0xff] %v256
    %267 = vst [vmem:[#allocation2 + $0x28] sm:$0xff] %v258
    %v268 = vld [vmem:[%s4] sm:$0x3]
    %v269 = vld [vmem:[#allocation2] ss:$8 sm:$0xf]
    %v270 = vld [vmem:[#allocation2] ss:$8 sm:$0x30]
    %v271 = vor.u32 %v269, %v270
    %v272 = vld [vmem:[%s3] sm:$0xff]
    %v273 = vld [vmem:[%s3 + $0x8] sm:$0xff]
    %v274 = vld [vmem:[%s3 + $0x10] sm:$0xff]
    %v275 = vld [vmem:[%s3 + $0x18] sm:$0xff]
    %v276 = vld [vmem:[%s3 + $0x20] sm:$0xff]
    %v277 = vld [vmem:[%s3 + $0x28] sm:$0xff]
    %v278 = vld [vmem:[%s3 + $0x30] sm:$0xff]
    %v279 = vld [vmem:[%s3 + $0x38] sm:$0xff]
    %v280 = vld [vmem:[%s3 + $0x40] sm:$0xff]
    %v281 = vld [vmem:[%s3 + $0x48] sm:$0xff]
    %v282 = vld [vmem:[%s3 + $0x50] sm:$0xff]
    %v283 = vld [vmem:[%s3 + $0x58] sm:$0xff]
    %v284 = vld [vmem:[%s3 + $0x60] sm:$0xff]
    %v285 = vld [vmem:[%s3 + $0x68] sm:$0xff]
    %v286 = vld [vmem:[%s3 + $0x70] sm:$0xff]
    %v287 = vld [vmem:[%s3 + $0x78] sm:$0xff]
    %v288 = vld [vmem:[%s3 + $0x80] sm:$0xff]
    %v289 = vld [vmem:[%s3 + $0x88] sm:$0xff]
    %v290 = vld [vmem:[%s3 + $0x90] sm:$0xff]
    %v291 = vld [vmem:[%s3 + $0x98] sm:$0xff]
    %v292 = vld [vmem:[%s3 + $0xa0] sm:$0xff]
    %v293 = vld [vmem:[%s3 + $0xa8] sm:$0xff]
    %v294 = vld [vmem:[%s3 + $0xb0] sm:$0xff]
    %v295 = vld [vmem:[%s3 + $0xb8] sm:$0xff]
    %v296 = vld [vmem:[%s3 + $0xc0] sm:$0xff]
    %v297 = vld [vmem:[%s3 + $0xc8] sm:$0xff]
    %v298 = vld [vmem:[%s3 + $0xd0] sm:$0xff]
    %v299 = vld [vmem:[%s3 + $0xd8] sm:$0xff]
    %v300 = vld [vmem:[%s3 + $0xe0] sm:$0xff]
    %v301 = vld [vmem:[%s3 + $0xe8] sm:$0xff]
    %v302 = vld [vmem:[%s3 + $0xf0] sm:$0xff]
    %v303 = vld [vmem:[%s3 + $0xf8] sm:$0xff]
    %v304 = vld [vmem:[%s3 + $0x100] sm:$0xff]
    %v305 = vld [vmem:[%s3 + $0x108] sm:$0xff]
    %v306 = vld [vmem:[%s3 + $0x110] sm:$0xff]
    %v307 = vld [vmem:[%s3 + $0x118] sm:$0xff]
    %v308 = vld [vmem:[%s3 + $0x120] sm:$0xff]
    %v309 = vld [vmem:[%s3 + $0x128] sm:$0xff]
    %v310 = vld [vmem:[%s3 + $0x130] sm:$0xff]
    %v311 = vld [vmem:[%s3 + $0x138] sm:$0xff]
    %v312 = vld [vmem:[%s3 + $0x140] sm:$0xff]
    %v313 = vld [vmem:[%s3 + $0x148] sm:$0xff]
    %v314 = vld [vmem:[%s3 + $0x150] sm:$0xff]
    %v315 = vld [vmem:[%s3 + $0x158] sm:$0xff]
    %v316 = vld [vmem:[%s3 + $0x160] sm:$0xff]
    %v317 = vld [vmem:[%s3 + $0x168] sm:$0xff]
    %v318 = vld [vmem:[%s3 + $0x170] sm:$0xff]
    %v319 = vld [vmem:[%s3 + $0x178] sm:$0xff]
    %v320 = vld [vmem:[%s3 + $0x180] sm:$0xff]
    %v321 = vld [vmem:[%s3 + $0x188] sm:$0xff]
    %v322 = vld [vmem:[%s3 + $0x190] sm:$0xff]
    %v323 = vld [vmem:[%s3 + $0x198] sm:$0xff]
    %v324 = vld [vmem:[%s3 + $0x1a0] sm:$0xff]
    %v325 = vld [vmem:[%s3 + $0x1a8] sm:$0xff]
    %v326 = vld [vmem:[%s3 + $0x1b0] sm:$0xff]
    %v327 = vld [vmem:[%s3 + $0x1b8] sm:$0xff]
    %v328 = vld [vmem:[%s3 + $0x1c0] sm:$0xff]
    %v329 = vld [vmem:[%s3 + $0x1c8] sm:$0xff]
    %v330 = vld [vmem:[%s3 + $0x1d0] sm:$0xff]
    %v331 = vld [vmem:[%s3 + $0x1d8] sm:$0xff]
    %v332 = vld [vmem:[%s3 + $0x1e0] sm:$0xff]
    %v333 = vld [vmem:[%s3 + $0x1e8] sm:$0xff]
    %v334 = vld [vmem:[%s3 + $0x1f0] sm:$0xff]
    %v335 = vld [vmem:[%s3 + $0x1f8] sm:$0xff]
    %v336 = vld [vmem:[%s3 + $0x200] sm:$0xff]
    %v337 = vld [vmem:[%s3 + $0x208] sm:$0xff]
    %v338 = vld [vmem:[%s3 + $0x210] sm:$0xff]
    %v339 = vld [vmem:[%s3 + $0x218] sm:$0xff]
    %v340 = vld [vmem:[%s3 + $0x220] sm:$0xff]
    %v341 = vld [vmem:[%s3 + $0x228] sm:$0xff]
    %v342 = vld [vmem:[%s3 + $0x230] sm:$0xff]
    %v343 = vld [vmem:[%s3 + $0x238] sm:$0xff]
    %v344 = vld [vmem:[%s3 + $0x240] sm:$0xff]
    %v345 = vld [vmem:[%s3 + $0x248] sm:$0xff]
    %v346 = vld [vmem:[%s3 + $0x250] sm:$0xff]
    %v347 = vld [vmem:[%s3 + $0x258] sm:$0xff]
    %v348 = vld [vmem:[%s3 + $0x260] sm:$0xff]
    %v349 = vld [vmem:[%s3 + $0x268] sm:$0xff]
    %v350 = vld [vmem:[%s3 + $0x270] sm:$0xff]
    %v351 = vld [vmem:[%s3 + $0x278] sm:$0xff]
    %v352 = vld [vmem:[%s3 + $0x280] sm:$0xff]
    %v353 = vld [vmem:[%s3 + $0x288] sm:$0xff]
    %v354 = vld [vmem:[%s3 + $0x290] sm:$0xff]
    %v355 = vld [vmem:[%s3 + $0x298] sm:$0xff]
    %v356 = vld [vmem:[%s3 + $0x2a0] sm:$0xff]
    %v357 = vld [vmem:[%s3 + $0x2a8] sm:$0xff]
    %v358 = vld [vmem:[%s3 + $0x2b0] sm:$0xff]
    %v359 = vld [vmem:[%s3 + $0x2b8] sm:$0xff]
    %v360 = vld [vmem:[%s3 + $0x2c0] sm:$0xff]
    %v361 = vld [vmem:[%s3 + $0x2c8] sm:$0xff]
    %v362 = vld [vmem:[%s3 + $0x2d0] sm:$0xff]
    %v363 = vld [vmem:[%s3 + $0x2d8] sm:$0xff]
    %v364 = vld [vmem:[%s3 + $0x2e0] sm:$0xff]
    %v365 = vld [vmem:[%s3 + $0x2e8] sm:$0xff]
    %v366 = vld [vmem:[%s3 + $0x2f0] sm:$0xff]
    %v367 = vld [vmem:[%s3 + $0x2f8] sm:$0xff]
    %v464 = vunpack.c.l.b16 %v272
    %v465 = vunpack.c.h.b16 %v272
    %v466 = vunpack.c.l.b16 %v273
    %v467 = vunpack.c.h.b16 %v273
    %v468 = vunpack.c.l.b16 %v274
    %v469 = vunpack.c.h.b16 %v274
    %v470 = vunpack.c.l.b16 %v275
    %v471 = vunpack.c.h.b16 %v275
    %v472 = vunpack.c.l.b16 %v276
    %v473 = vunpack.c.h.b16 %v276
    %v474 = vunpack.c.l.b16 %v277
    %v475 = vunpack.c.h.b16 %v277
    %v476 = vunpack.c.l.b16 %v278
    %v477 = vunpack.c.h.b16 %v278
    %v478 = vunpack.c.l.b16 %v279
    %v479 = vunpack.c.h.b16 %v279
    %v480 = vunpack.c.l.b16 %v280
    %v481 = vunpack.c.h.b16 %v280
    %v482 = vunpack.c.l.b16 %v281
    %v483 = vunpack.c.h.b16 %v281
    %v484 = vunpack.c.l.b16 %v282
    %v485 = vunpack.c.h.b16 %v282
    %v486 = vunpack.c.l.b16 %v283
    %v487 = vunpack.c.h.b16 %v283
    %v488 = vunpack.c.l.b16 %v284
    %v489 = vunpack.c.h.b16 %v284
    %v490 = vunpack.c.l.b16 %v285
    %v491 = vunpack.c.h.b16 %v285
    %v492 = vunpack.c.l.b16 %v286
    %v493 = vunpack.c.h.b16 %v286
    %v494 = vunpack.c.l.b16 %v287
    %v495 = vunpack.c.h.b16 %v287
    %v496 = vunpack.c.l.b16 %v288
    %v497 = vunpack.c.h.b16 %v288
    %v498 = vunpack.c.l.b16 %v289
    %v499 = vunpack.c.h.b16 %v289
    %v500 = vunpack.c.l.b16 %v290
    %v501 = vunpack.c.h.b16 %v290
    %v502 = vunpack.c.l.b16 %v291
    %v503 = vunpack.c.h.b16 %v291
    %v504 = vunpack.c.l.b16 %v292
    %v505 = vunpack.c.h.b16 %v292
    %v506 = vunpack.c.l.b16 %v293
    %v507 = vunpack.c.h.b16 %v293
    %v508 = vunpack.c.l.b16 %v294
    %v509 = vunpack.c.h.b16 %v294
    %v510 = vunpack.c.l.b16 %v295
    %v511 = vunpack.c.h.b16 %v295
    %v512 = vunpack.c.l.b16 %v296
    %v513 = vunpack.c.h.b16 %v296
    %v514 = vunpack.c.l.b16 %v297
    %v515 = vunpack.c.h.b16 %v297
    %v516 = vunpack.c.l.b16 %v298
    %v517 = vunpack.c.h.b16 %v298
    %v518 = vunpack.c.l.b16 %v299
    %v519 = vunpack.c.h.b16 %v299
    %v520 = vunpack.c.l.b16 %v300
    %v521 = vunpack.c.h.b16 %v300
    %v522 = vunpack.c.l.b16 %v301
    %v523 = vunpack.c.h.b16 %v301
    %v524 = vunpack.c.l.b16 %v302
    %v525 = vunpack.c.h.b16 %v302
    %v526 = vunpack.c.l.b16 %v303
    %v527 = vunpack.c.h.b16 %v303
    %v528 = vunpack.c.l.b16 %v304
    %v529 = vunpack.c.h.b16 %v304
    %v530 = vunpack.c.l.b16 %v305
    %v531 = vunpack.c.h.b16 %v305
    %v532 = vunpack.c.l.b16 %v306
    %v533 = vunpack.c.h.b16 %v306
    %v534 = vunpack.c.l.b16 %v307
    %v535 = vunpack.c.h.b16 %v307
    %v536 = vunpack.c.l.b16 %v308
    %v537 = vunpack.c.h.b16 %v308
    %v538 = vunpack.c.l.b16 %v309
    %v539 = vunpack.c.h.b16 %v309
    %v540 = vunpack.c.l.b16 %v310
    %v541 = vunpack.c.h.b16 %v310
    %v542 = vunpack.c.l.b16 %v311
    %v543 = vunpack.c.h.b16 %v311
    %v544 = vunpack.c.l.b16 %v312
    %v545 = vunpack.c.h.b16 %v312
    %v546 = vunpack.c.l.b16 %v313
    %v547 = vunpack.c.h.b16 %v313
    %v548 = vunpack.c.l.b16 %v314
    %v549 = vunpack.c.h.b16 %v314
    %v550 = vunpack.c.l.b16 %v315
    %v551 = vunpack.c.h.b16 %v315
    %v552 = vunpack.c.l.b16 %v316
    %v553 = vunpack.c.h.b16 %v316
    %v554 = vunpack.c.l.b16 %v317
    %v555 = vunpack.c.h.b16 %v317
    %v556 = vunpack.c.l.b16 %v318
    %v557 = vunpack.c.h.b16 %v318
    %v558 = vunpack.c.l.b16 %v319
    %v559 = vunpack.c.h.b16 %v319
    %v560 = vunpack.c.l.b16 %v320
    %v561 = vunpack.c.h.b16 %v320
    %v562 = vunpack.c.l.b16 %v321
    %v563 = vunpack.c.h.b16 %v321
    %v564 = vunpack.c.l.b16 %v322
    %v565 = vunpack.c.h.b16 %v322
    %v566 = vunpack.c.l.b16 %v323
    %v567 = vunpack.c.h.b16 %v323
    %v568 = vunpack.c.l.b16 %v324
    %v569 = vunpack.c.h.b16 %v324
    %v570 = vunpack.c.l.b16 %v325
    %v571 = vunpack.c.h.b16 %v325
    %v572 = vunpack.c.l.b16 %v326
    %v573 = vunpack.c.h.b16 %v326
    %v574 = vunpack.c.l.b16 %v327
    %v575 = vunpack.c.h.b16 %v327
    %v576 = vunpack.c.l.b16 %v328
    %v577 = vunpack.c.h.b16 %v328
    %v578 = vunpack.c.l.b16 %v329
    %v579 = vunpack.c.h.b16 %v329
    %v580 = vunpack.c.l.b16 %v330
    %v581 = vunpack.c.h.b16 %v330
    %v582 = vunpack.c.l.b16 %v331
    %v583 = vunpack.c.h.b16 %v331
    %v584 = vunpack.c.l.b16 %v332
    %v585 = vunpack.c.h.b16 %v332
    %v586 = vunpack.c.l.b16 %v333
    %v587 = vunpack.c.h.b16 %v333
    %v588 = vunpack.c.l.b16 %v334
    %v589 = vunpack.c.h.b16 %v334
    %v590 = vunpack.c.l.b16 %v335
    %v591 = vunpack.c.h.b16 %v335
    %v592 = vunpack.c.l.b16 %v336
    %v593 = vunpack.c.h.b16 %v336
    %v594 = vunpack.c.l.b16 %v337
    %v595 = vunpack.c.h.b16 %v337
    %v596 = vunpack.c.l.b16 %v338
    %v597 = vunpack.c.h.b16 %v338
    %v598 = vunpack.c.l.b16 %v339
    %v599 = vunpack.c.h.b16 %v339
    %v600 = vunpack.c.l.b16 %v340
    %v601 = vunpack.c.h.b16 %v340
    %v602 = vunpack.c.l.b16 %v341
    %v603 = vunpack.c.h.b16 %v341
    %v604 = vunpack.c.l.b16 %v342
    %v605 = vunpack.c.h.b16 %v342
    %v606 = vunpack.c.l.b16 %v343
    %v607 = vunpack.c.h.b16 %v343
    %v608 = vunpack.c.l.b16 %v344
    %v609 = vunpack.c.h.b16 %v344
    %v610 = vunpack.c.l.b16 %v345
    %v611 = vunpack.c.h.b16 %v345
    %v612 = vunpack.c.l.b16 %v346
    %v613 = vunpack.c.h.b16 %v346
    %v614 = vunpack.c.l.b16 %v347
    %v615 = vunpack.c.h.b16 %v347
    %v616 = vunpack.c.l.b16 %v348
    %v617 = vunpack.c.h.b16 %v348
    %v618 = vunpack.c.l.b16 %v349
    %v619 = vunpack.c.h.b16 %v349
    %v620 = vunpack.c.l.b16 %v350
    %v621 = vunpack.c.h.b16 %v350
    %v622 = vunpack.c.l.b16 %v351
    %v623 = vunpack.c.h.b16 %v351
    %v624 = vunpack.c.l.b16 %v352
    %v625 = vunpack.c.h.b16 %v352
    %v626 = vunpack.c.l.b16 %v353
    %v627 = vunpack.c.h.b16 %v353
    %v628 = vunpack.c.l.b16 %v354
    %v629 = vunpack.c.h.b16 %v354
    %v630 = vunpack.c.l.b16 %v355
    %v631 = vunpack.c.h.b16 %v355
    %v632 = vunpack.c.l.b16 %v356
    %v633 = vunpack.c.h.b16 %v356
    %v634 = vunpack.c.l.b16 %v357
    %v635 = vunpack.c.h.b16 %v357
    %v636 = vunpack.c.l.b16 %v358
    %v637 = vunpack.c.h.b16 %v358
    %v638 = vunpack.c.l.b16 %v359
    %v639 = vunpack.c.h.b16 %v359
    %v640 = vunpack.c.l.b16 %v360
    %v641 = vunpack.c.h.b16 %v360
    %v642 = vunpack.c.l.b16 %v361
    %v643 = vunpack.c.h.b16 %v361
    %v644 = vunpack.c.l.b16 %v362
    %v645 = vunpack.c.h.b16 %v362
    %v646 = vunpack.c.l.b16 %v363
    %v647 = vunpack.c.h.b16 %v363
    %v648 = vunpack.c.l.b16 %v364
    %v649 = vunpack.c.h.b16 %v364
    %v650 = vunpack.c.l.b16 %v365
    %v651 = vunpack.c.h.b16 %v365
    %v652 = vunpack.c.l.b16 %v366
    %v653 = vunpack.c.h.b16 %v366
    %v654 = vunpack.c.l.b16 %v367
    %v655 = vunpack.c.h.b16 %v367
    %v656 = vpack.c.b16 %v470, %v464
    %v657 = vpack.c.b16 %v471, %v465
    %v658 = vpack.c.b16 %v472, %v466
    %v659 = vpack.c.b16 %v473, %v467
    %v660 = vpack.c.b16 %v474, %v468
    %v661 = vpack.c.b16 %v475, %v469
    %v662 = vpack.c.b16 %v482, %v476
    %v663 = vpack.c.b16 %v483, %v477
    %v664 = vpack.c.b16 %v484, %v478
    %v665 = vpack.c.b16 %v485, %v479
    %v666 = vpack.c.b16 %v486, %v480
    %v667 = vpack.c.b16 %v487, %v481
    %v668 = vpack.c.b16 %v494, %v488
    %v669 = vpack.c.b16 %v495, %v489
    %v670 = vpack.c.b16 %v496, %v490
    %v671 = vpack.c.b16 %v497, %v491
    %v672 = vpack.c.b16 %v498, %v492
    %v673 = vpack.c.b16 %v499, %v493
    %v674 = vpack.c.b16 %v506, %v500
    %v675 = vpack.c.b16 %v507, %v501
    %v676 = vpack.c.b16 %v508, %v502
    %v677 = vpack.c.b16 %v509, %v503
    %v678 = vpack.c.b16 %v510, %v504
    %v679 = vpack.c.b16 %v511, %v505
    %v680 = vpack.c.b16 %v518, %v512
    %v681 = vpack.c.b16 %v519, %v513
    %v682 = vpack.c.b16 %v520, %v514
    %v683 = vpack.c.b16 %v521, %v515
    %v684 = vpack.c.b16 %v522, %v516
    %v685 = vpack.c.b16 %v523, %v517
    %v686 = vpack.c.b16 %v530, %v524
    %v687 = vpack.c.b16 %v531, %v525
    %v688 = vpack.c.b16 %v532, %v526
    %v689 = vpack.c.b16 %v533, %v527
    %v690 = vpack.c.b16 %v534, %v528
    %v691 = vpack.c.b16 %v535, %v529
    %v692 = vpack.c.b16 %v542, %v536
    %v693 = vpack.c.b16 %v543, %v537
    %v694 = vpack.c.b16 %v544, %v538
    %v695 = vpack.c.b16 %v545, %v539
    %v696 = vpack.c.b16 %v546, %v540
    %v697 = vpack.c.b16 %v547, %v541
    %v698 = vpack.c.b16 %v554, %v548
    %v699 = vpack.c.b16 %v555, %v549
    %v700 = vpack.c.b16 %v556, %v550
    %v701 = vpack.c.b16 %v557, %v551
    %v702 = vpack.c.b16 %v558, %v552
    %v703 = vpack.c.b16 %v559, %v553
    %v704 = vpack.c.b16 %v566, %v560
    %v705 = vpack.c.b16 %v567, %v561
    %v706 = vpack.c.b16 %v568, %v562
    %v707 = vpack.c.b16 %v569, %v563
    %v708 = vpack.c.b16 %v570, %v564
    %v709 = vpack.c.b16 %v571, %v565
    %v710 = vpack.c.b16 %v578, %v572
    %v711 = vpack.c.b16 %v579, %v573
    %v712 = vpack.c.b16 %v580, %v574
    %v713 = vpack.c.b16 %v581, %v575
    %v714 = vpack.c.b16 %v582, %v576
    %v715 = vpack.c.b16 %v583, %v577
    %v716 = vpack.c.b16 %v590, %v584
    %v717 = vpack.c.b16 %v591, %v585
    %v718 = vpack.c.b16 %v592, %v586
    %v719 = vpack.c.b16 %v593, %v587
    %v720 = vpack.c.b16 %v594, %v588
    %v721 = vpack.c.b16 %v595, %v589
    %v722 = vpack.c.b16 %v602, %v596
    %v723 = vpack.c.b16 %v603, %v597
    %v724 = vpack.c.b16 %v604, %v598
    %v725 = vpack.c.b16 %v605, %v599
    %v726 = vpack.c.b16 %v606, %v600
    %v727 = vpack.c.b16 %v607, %v601
    %v728 = vpack.c.b16 %v614, %v608
    %v729 = vpack.c.b16 %v615, %v609
    %v730 = vpack.c.b16 %v616, %v610
    %v731 = vpack.c.b16 %v617, %v611
    %v732 = vpack.c.b16 %v618, %v612
    %v733 = vpack.c.b16 %v619, %v613
    %v734 = vpack.c.b16 %v626, %v620
    %v735 = vpack.c.b16 %v627, %v621
    %v736 = vpack.c.b16 %v628, %v622
    %v737 = vpack.c.b16 %v629, %v623
    %v738 = vpack.c.b16 %v630, %v624
    %v739 = vpack.c.b16 %v631, %v625
    %v740 = vpack.c.b16 %v638, %v632
    %v741 = vpack.c.b16 %v639, %v633
    %v742 = vpack.c.b16 %v640, %v634
    %v743 = vpack.c.b16 %v641, %v635
    %v744 = vpack.c.b16 %v642, %v636
    %v745 = vpack.c.b16 %v643, %v637
    %v746 = vpack.c.b16 %v650, %v644
    %v747 = vpack.c.b16 %v651, %v645
    %v748 = vpack.c.b16 %v652, %v646
    %v749 = vpack.c.b16 %v653, %v647
    %v750 = vpack.c.b16 %v654, %v648
    %v751 = vpack.c.b16 %v655, %v649
    %848 = vmatprep.subr.bf16.mxu0 %v657
    %849 = vmatpush1.bf16.msra.mxu0 %v656
    %850 = vmatprep.subr.bf16.mxu0 %v663
    %851 = vmatpush1.bf16.msra.mxu0 %v662
    %852 = vmatprep.subr.bf16.mxu0 %v669
    %853 = vmatpush1.bf16.msra.mxu0 %v668
    %854 = vmatprep.subr.bf16.mxu0 %v675
    %855 = vmatpush1.bf16.msra.mxu0 %v674
    %856 = vmatprep.subr.bf16.mxu0 %v681
    %857 = vmatpush1.bf16.msra.mxu0 %v680
    %858 = vmatprep.subr.bf16.mxu0 %v687
    %859 = vmatpush1.bf16.msra.mxu0 %v686
    %860 = vmatprep.subr.bf16.mxu0 %v693
    %861 = vmatpush1.bf16.msra.mxu0 %v692
    %862 = vmatprep.subr.bf16.mxu0 %v699
    %863 = vmatpush1.bf16.msra.mxu0 %v698
    %864 = vmatprep.subr.bf16.mxu0 %v705
    %865 = vmatpush1.bf16.msra.mxu0 %v704
    %866 = vmatprep.subr.bf16.mxu0 %v711
    %867 = vmatpush1.bf16.msra.mxu0 %v710
    %868 = vmatprep.subr.bf16.mxu0 %v717
    %869 = vmatpush1.bf16.msra.mxu0 %v716
    %870 = vmatprep.subr.bf16.mxu0 %v723
    %871 = vmatpush1.bf16.msra.mxu0 %v722
    %872 = vmatprep.subr.bf16.mxu0 %v729
    %873 = vmatpush1.bf16.msra.mxu0 %v728
    %874 = vmatprep.subr.bf16.mxu0 %v735
    %875 = vmatpush1.bf16.msra.mxu0 %v734
    %876 = vmatprep.subr.bf16.mxu0 %v741
    %877 = vmatpush1.bf16.msra.mxu0 %v740
    %878 = vmatprep.subr.bf16.mxu0 %v747
    %879 = vmatpush1.bf16.msra.mxu0 %v746
    %880 = vmatprep.mubr.bf16.mxu0 0
    %881 = vmatmul.mubr.bf16.gmra.mrb[0].mxu0 0
    %v882 = vpop.f32.mrb[0].mxu0
    %v883 = vadd.f32 0.0, %v882
    %v884 = vpop.f32.mrb[0].mxu0
    %v885 = vadd.f32 0.0, %v884
    %v886 = vpop.f32.mrb[0].mxu0
    %v887 = vpop.f32.mrb[0].mxu0
    %888 = vdwg.mxu0
    %889 = vmatprep.subr.bf16.mxu0 %v659
    %890 = vmatpush1.bf16.msra.mxu0 %v658
    %891 = vmatprep.subr.bf16.mxu0 %v665
    %892 = vmatpush1.bf16.msra.mxu0 %v664
    %893 = vmatprep.subr.bf16.mxu0 %v671
    %894 = vmatpush1.bf16.msra.mxu0 %v670
    %895 = vmatprep.subr.bf16.mxu0 %v677
    %896 = vmatpush1.bf16.msra.mxu0 %v676
    %897 = vmatprep.subr.bf16.mxu0 %v683
    %898 = vmatpush1.bf16.msra.mxu0 %v682
    %899 = vmatprep.subr.bf16.mxu0 %v689
    %900 = vmatpush1.bf16.msra.mxu0 %v688
    %901 = vmatprep.subr.bf16.mxu0 %v695
    %902 = vmatpush1.bf16.msra.mxu0 %v694
    %903 = vmatprep.subr.bf16.mxu0 %v701
    %904 = vmatpush1.bf16.msra.mxu0 %v700
    %905 = vmatprep.subr.bf16.mxu0 %v707
    %906 = vmatpush1.bf16.msra.mxu0 %v706
    %907 = vmatprep.subr.bf16.mxu0 %v713
    %908 = vmatpush1.bf16.msra.mxu0 %v712
    %909 = vmatprep.subr.bf16.mxu0 %v719
    %910 = vmatpush1.bf16.msra.mxu0 %v718
    %911 = vmatprep.subr.bf16.mxu0 %v725
    %912 = vmatpush1.bf16.msra.mxu0 %v724
    %913 = vmatprep.subr.bf16.mxu0 %v731
    %914 = vmatpush1.bf16.msra.mxu0 %v730
    %915 = vmatprep.subr.bf16.mxu0 %v737
    %916 = vmatpush1.bf16.msra.mxu0 %v736
    %917 = vmatprep.subr.bf16.mxu0 %v743
    %918 = vmatpush1.bf16.msra.mxu0 %v742
    %919 = vmatprep.subr.bf16.mxu0 %v749
    %920 = vmatpush1.bf16.msra.mxu0 %v748
    %921 = vmatprep.mubr.bf16.mxu0 0
    %922 = vmatmul.mubr.bf16.gmra.mrb[0].mxu0 0
    %v923 = vpop.f32.mrb[0].mxu0
    %v924 = vadd.f32 0.0, %v923
    %v925 = vpop.f32.mrb[0].mxu0
    %v926 = vadd.f32 0.0, %v925
    %v927 = vpop.f32.mrb[0].mxu0
    %v928 = vpop.f32.mrb[0].mxu0
    %929 = vdwg.mxu0
    %930 = vmatprep.subr.bf16.mxu0 %v661
    %931 = vmatpush1.bf16.msra.mxu0 %v660
    %932 = vmatprep.subr.bf16.mxu0 %v667
    %933 = vmatpush1.bf16.msra.mxu0 %v666
    %934 = vmatprep.subr.bf16.mxu0 %v673
    %935 = vmatpush1.bf16.msra.mxu0 %v672
    %936 = vmatprep.subr.bf16.mxu0 %v679
    %937 = vmatpush1.bf16.msra.mxu0 %v678
    %938 = vmatprep.subr.bf16.mxu0 %v685
    %939 = vmatpush1.bf16.msra.mxu0 %v684
    %940 = vmatprep.subr.bf16.mxu0 %v691
    %941 = vmatpush1.bf16.msra.mxu0 %v690
    %942 = vmatprep.subr.bf16.mxu0 %v697
    %943 = vmatpush1.bf16.msra.mxu0 %v696
    %944 = vmatprep.subr.bf16.mxu0 %v703
    %945 = vmatpush1.bf16.msra.mxu0 %v702
    %946 = vmatprep.subr.bf16.mxu0 %v709
    %947 = vmatpush1.bf16.msra.mxu0 %v708
    %948 = vmatprep.subr.bf16.mxu0 %v715
    %949 = vmatpush1.bf16.msra.mxu0 %v714
    %950 = vmatprep.subr.bf16.mxu0 %v721
    %951 = vmatpush1.bf16.msra.mxu0 %v720
    %952 = vmatprep.subr.bf16.mxu0 %v727
    %953 = vmatpush1.bf16.msra.mxu0 %v726
    %954 = vmatprep.subr.bf16.mxu0 %v733
    %955 = vmatpush1.bf16.msra.mxu0 %v732
    %956 = vmatprep.subr.bf16.mxu0 %v739
    %957 = vmatpush1.bf16.msra.mxu0 %v738
    %958 = vmatprep.subr.bf16.mxu0 %v745
    %959 = vmatpush1.bf16.msra.mxu0 %v744
    %960 = vmatprep.subr.bf16.mxu0 %v751
    %961 = vmatpush1.bf16.msra.mxu0 %v750
    %962 = vmatprep.mubr.bf16.mxu0 0
    %963 = vmatmul.mubr.bf16.gmra.mrb[0].mxu0 0
    %v964 = vpop.f32.mrb[0].mxu0
    %v965 = vadd.f32 0.0, %v964
    %v966 = vpop.f32.mrb[0].mxu0
    %v967 = vadd.f32 0.0, %v966
    %v968 = vpop.f32.mrb[0].mxu0
    %v969 = vpop.f32.mrb[0].mxu0
    %970 = vdwg.mxu0
    %v975 = vcombine.low %v883, %v885
    %v976 = vcombine.low %v924, %v926
    %v978 = vunpack.c.l.s4 1966171168
    %v979 = vunpack.c.0.s8 %v978
    %v980 = vlaneseq
    %v981 = vshrl.u32 %v980, 7
    %v982 = vsub.s32 %v979, %v981
    %v983 = vrot.slane %v975, %v982
    %v985 = vunpack.c.l.s4 1966171168
    %v986 = vunpack.c.0.s8 %v985
    %v987 = vlaneseq
    %v988 = vshrl.u32 %v987, 7
    %v989 = vsub.s32 %v986, %v988
    %v990 = vrot.slane %v976, %v989
    %v991 = vcombine.low %v983, %v990
    %v993 = vunpack.c.l.s4 1966171168
    %v994 = vunpack.c.0.s8 %v993
    %v995 = vlaneseq
    %v996 = vshrl.u32 %v995, 7
    %v997 = vsub.s32 %v994, %v996
    %v998 = vrot.slane %v991, %v997
    %v1000 = vadd.f32 %v271, %v998
    %v1001 = vxor.u32 %v1000, 2147483648
    %v1002 = vmul.f32 %v1001, 1.442695
    %v1003 = vpow.pop %v1002
    %v1004 = vadd.f32 %v1003, 1.0
    %v1005 = vrcp.pop %v1004
    %v1006 = vmul.f32 1.0, %v1005
    %v1008 = vlaneseq
    %v1009 = vshrl.u32 %v1008, 7
    %v1010 = vsub.s32 0, %v1009
    %v1011 = vrot.slane %v268, %v1010
    %v1012 = vlaneseq
    %v1013 = vshrl.u32 %v1012, 7
    %v1014 = vsub.s32 1, %v1013
    %v1015 = vrot.slane %v268, %v1014
    %v1018 = vadd.f32 %v965, %v1011
    %v1019 = vadd.f32 %v967, %v1015
    %v1022 = vcombine.low %v1018, %v1019
    %v1024 = vunpack.c.l.s4 1966171168
    %v1025 = vunpack.c.0.s8 %v1024
    %v1026 = vlaneseq
    %v1027 = vshrl.u32 %v1026, 7
    %v1028 = vsub.s32 %v1025, %v1027
    %v1029 = vrot.slane %v1022, %v1028
    %v1031 = vunpack.c.l.s4 1966171168
    %v1032 = vunpack.c.0.s8 %v1031
    %v1033 = vlaneseq
    %v1034 = vshrl.u32 %v1033, 7
    %v1035 = vsub.s32 %v1032, %v1034
    %v1036 = vrot.slane %v1029, %v1035
    %v1038 = vmul.f32 %v1006, %v1036
    %v1040 = vrot.slane %v271, 4
    %v1042 = vadd.f32 %v1040, %v1038
    %v1043 = vtanh.pop %v1042
    %v1044 = vsub.f32 0.0, %v1043
    %v1046 = vrot.slane %v1006, 2
    %v1048 = vmul.f32 %v1046, %v1044
    %v1049 = vadd.f32 %v1043, %v1048
    %v1050 = vlaneseq
    %vm1051 = vcmp.ge.s32.totalorder %v1050, 0
    %vm1052 = vcmp.lt.s32.totalorder %v1050, 256
    %vm1053 = vmand %vm1051, %vm1052
    %1054 = vst.msk [vmem:[%s7] ss:$8 sm:$0x3] %vm1053, %v1049
    %1055 = vst.msk [vmem:[%s7] ss:$8 sm:$0x0] %vm1053, %v1049
    %s1056 = scalar_lea.vmem [#allocation2], 1
    %v1057 = vld [vmem:[%s1056] ss:$8 sm:$0xf]
    %v1058 = vld [vmem:[%s1056] ss:$8 sm:$0x30]
    %v1059 = vor.u32 %v1057, %v1058
    %v1061 = vlaneseq
    %v1062 = vshrl.u32 %v1061, 7
    %v1063 = vsub.s32 0, %v1062
    %v1064 = vrot.slane %v1049, %v1063
    %v1065 = vlaneseq
    %v1066 = vshrl.u32 %v1065, 7
    %v1067 = vsub.s32 1, %v1066
    %v1068 = vrot.slane %v1049, %v1067
    %v1071 = vpack.c.bf16 %v1064, %v1064
    %v1072 = vpack.c.bf16 %v1068, %v1068
    %v1073 = vld [vmem:[%s3] sm:$0xff]
    %v1074 = vld [vmem:[%s3 + $0x8] sm:$0xff]
    %v1075 = vld [vmem:[%s3 + $0x10] sm:$0xff]
    %v1076 = vld [vmem:[%s3 + $0x18] sm:$0xff]
    %v1077 = vld [vmem:[%s3 + $0x20] sm:$0xff]
    %v1078 = vld [vmem:[%s3 + $0x28] sm:$0xff]
    %v1079 = vld [vmem:[%s3 + $0x30] sm:$0xff]
    %v1080 = vld [vmem:[%s3 + $0x38] sm:$0xff]
    %v1081 = vld [vmem:[%s3 + $0x40] sm:$0xff]
    %v1082 = vld [vmem:[%s3 + $0x48] sm:$0xff]
    %v1083 = vld [vmem:[%s3 + $0x50] sm:$0xff]
    %v1084 = vld [vmem:[%s3 + $0x58] sm:$0xff]
    %v1085 = vld [vmem:[%s3 + $0x60] sm:$0xff]
    %v1086 = vld [vmem:[%s3 + $0x68] sm:$0xff]
    %v1087 = vld [vmem:[%s3 + $0x70] sm:$0xff]
    %v1088 = vld [vmem:[%s3 + $0x78] sm:$0xff]
    %v1089 = vld [vmem:[%s3 + $0x80] sm:$0xff]
    %v1090 = vld [vmem:[%s3 + $0x88] sm:$0xff]
    %v1091 = vld [vmem:[%s3 + $0x90] sm:$0xff]
    %v1092 = vld [vmem:[%s3 + $0x98] sm:$0xff]
    %v1093 = vld [vmem:[%s3 + $0xa0] sm:$0xff]
    %v1094 = vld [vmem:[%s3 + $0xa8] sm:$0xff]
    %v1095 = vld [vmem:[%s3 + $0xb0] sm:$0xff]
    %v1096 = vld [vmem:[%s3 + $0xb8] sm:$0xff]
    %v1097 = vld [vmem:[%s3 + $0xc0] sm:$0xff]
    %v1098 = vld [vmem:[%s3 + $0xc8] sm:$0xff]
    %v1099 = vld [vmem:[%s3 + $0xd0] sm:$0xff]
    %v1100 = vld [vmem:[%s3 + $0xd8] sm:$0xff]
    %v1101 = vld [vmem:[%s3 + $0xe0] sm:$0xff]
    %v1102 = vld [vmem:[%s3 + $0xe8] sm:$0xff]
    %v1103 = vld [vmem:[%s3 + $0xf0] sm:$0xff]
    %v1104 = vld [vmem:[%s3 + $0xf8] sm:$0xff]
    %v1105 = vld [vmem:[%s3 + $0x100] sm:$0xff]
    %v1106 = vld [vmem:[%s3 + $0x108] sm:$0xff]
    %v1107 = vld [vmem:[%s3 + $0x110] sm:$0xff]
    %v1108 = vld [vmem:[%s3 + $0x118] sm:$0xff]
    %v1109 = vld [vmem:[%s3 + $0x120] sm:$0xff]
    %v1110 = vld [vmem:[%s3 + $0x128] sm:$0xff]
    %v1111 = vld [vmem:[%s3 + $0x130] sm:$0xff]
    %v1112 = vld [vmem:[%s3 + $0x138] sm:$0xff]
    %v1113 = vld [vmem:[%s3 + $0x140] sm:$0xff]
    %v1114 = vld [vmem:[%s3 + $0x148] sm:$0xff]
    %v1115 = vld [vmem:[%s3 + $0x150] sm:$0xff]
    %v1116 = vld [vmem:[%s3 + $0x158] sm:$0xff]
    %v1117 = vld [vmem:[%s3 + $0x160] sm:$0xff]
    %v1118 = vld [vmem:[%s3 + $0x168] sm:$0xff]
    %v1119 = vld [vmem:[%s3 + $0x170] sm:$0xff]
    %v1120 = vld [vmem:[%s3 + $0x178] sm:$0xff]
    %v1121 = vld [vmem:[%s3 + $0x180] sm:$0xff]
    %v1122 = vld [vmem:[%s3 + $0x188] sm:$0xff]
    %v1123 = vld [vmem:[%s3 + $0x190] sm:$0xff]
    %v1124 = vld [vmem:[%s3 + $0x198] sm:$0xff]
    %v1125 = vld [vmem:[%s3 + $0x1a0] sm:$0xff]
    %v1126 = vld [vmem:[%s3 + $0x1a8] sm:$0xff]
    %v1127 = vld [vmem:[%s3 + $0x1b0] sm:$0xff]
    %v1128 = vld [vmem:[%s3 + $0x1b8] sm:$0xff]
    %v1129 = vld [vmem:[%s3 + $0x1c0] sm:$0xff]
    %v1130 = vld [vmem:[%s3 + $0x1c8] sm:$0xff]
    %v1131 = vld [vmem:[%s3 + $0x1d0] sm:$0xff]
    %v1132 = vld [vmem:[%s3 + $0x1d8] sm:$0xff]
    %v1133 = vld [vmem:[%s3 + $0x1e0] sm:$0xff]
    %v1134 = vld [vmem:[%s3 + $0x1e8] sm:$0xff]
    %v1135 = vld [vmem:[%s3 + $0x1f0] sm:$0xff]
    %v1136 = vld [vmem:[%s3 + $0x1f8] sm:$0xff]
    %v1137 = vld [vmem:[%s3 + $0x200] sm:$0xff]
    %v1138 = vld [vmem:[%s3 + $0x208] sm:$0xff]
    %v1139 = vld [vmem:[%s3 + $0x210] sm:$0xff]
    %v1140 = vld [vmem:[%s3 + $0x218] sm:$0xff]
    %v1141 = vld [vmem:[%s3 + $0x220] sm:$0xff]
    %v1142 = vld [vmem:[%s3 + $0x228] sm:$0xff]
    %v1143 = vld [vmem:[%s3 + $0x230] sm:$0xff]
    %v1144 = vld [vmem:[%s3 + $0x238] sm:$0xff]
    %v1145 = vld [vmem:[%s3 + $0x240] sm:$0xff]
    %v1146 = vld [vmem:[%s3 + $0x248] sm:$0xff]
    %v1147 = vld [vmem:[%s3 + $0x250] sm:$0xff]
    %v1148 = vld [vmem:[%s3 + $0x258] sm:$0xff]
    %v1149 = vld [vmem:[%s3 + $0x260] sm:$0xff]
    %v1150 = vld [vmem:[%s3 + $0x268] sm:$0xff]
    %v1151 = vld [vmem:[%s3 + $0x270] sm:$0xff]
    %v1152 = vld [vmem:[%s3 + $0x278] sm:$0xff]
    %v1153 = vld [vmem:[%s3 + $0x280] sm:$0xff]
    %v1154 = vld [vmem:[%s3 + $0x288] sm:$0xff]
    %v1155 = vld [vmem:[%s3 + $0x290] sm:$0xff]
    %v1156 = vld [vmem:[%s3 + $0x298] sm:$0xff]
    %v1157 = vld [vmem:[%s3 + $0x2a0] sm:$0xff]
    %v1158 = vld [vmem:[%s3 + $0x2a8] sm:$0xff]
    %v1159 = vld [vmem:[%s3 + $0x2b0] sm:$0xff]
    %v1160 = vld [vmem:[%s3 + $0x2b8] sm:$0xff]
    %v1161 = vld [vmem:[%s3 + $0x2c0] sm:$0xff]
    %v1162 = vld [vmem:[%s3 + $0x2c8] sm:$0xff]
    %v1163 = vld [vmem:[%s3 + $0x2d0] sm:$0xff]
    %v1164 = vld [vmem:[%s3 + $0x2d8] sm:$0xff]
    %v1165 = vld [vmem:[%s3 + $0x2e0] sm:$0xff]
    %v1166 = vld [vmem:[%s3 + $0x2e8] sm:$0xff]
    %v1167 = vld [vmem:[%s3 + $0x2f0] sm:$0xff]
    %v1168 = vld [vmem:[%s3 + $0x2f8] sm:$0xff]
    %v1265 = vunpack.c.l.b16 %v1073
    %v1266 = vunpack.c.h.b16 %v1073
    %v1267 = vunpack.c.l.b16 %v1074
    %v1268 = vunpack.c.h.b16 %v1074
    %v1269 = vunpack.c.l.b16 %v1075
    %v1270 = vunpack.c.h.b16 %v1075
    %v1271 = vunpack.c.l.b16 %v1076
    %v1272 = vunpack.c.h.b16 %v1076
    %v1273 = vunpack.c.l.b16 %v1077
    %v1274 = vunpack.c.h.b16 %v1077
    %v1275 = vunpack.c.l.b16 %v1078
    %v1276 = vunpack.c.h.b16 %v1078
    %v1277 = vunpack.c.l.b16 %v1079
    %v1278 = vunpack.c.h.b16 %v1079
    %v1279 = vunpack.c.l.b16 %v1080
    %v1280 = vunpack.c.h.b16 %v1080
    %v1281 = vunpack.c.l.b16 %v1081
    %v1282 = vunpack.c.h.b16 %v1081
    %v1283 = vunpack.c.l.b16 %v1082
    %v1284 = vunpack.c.h.b16 %v1082
    %v1285 = vunpack.c.l.b16 %v1083
    %v1286 = vunpack.c.h.b16 %v1083
    %v1287 = vunpack.c.l.b16 %v1084
    %v1288 = vunpack.c.h.b16 %v1084
    %v1289 = vunpack.c.l.b16 %v1085
    %v1290 = vunpack.c.h.b16 %v1085
    %v1291 = vunpack.c.l.b16 %v1086
    %v1292 = vunpack.c.h.b16 %v1086
    %v1293 = vunpack.c.l.b16 %v1087
    %v1294 = vunpack.c.h.b16 %v1087
    %v1295 = vunpack.c.l.b16 %v1088
    %v1296 = vunpack.c.h.b16 %v1088
    %v1297 = vunpack.c.l.b16 %v1089
    %v1298 = vunpack.c.h.b16 %v1089
    %v1299 = vunpack.c.l.b16 %v1090
    %v1300 = vunpack.c.h.b16 %v1090
    %v1301 = vunpack.c.l.b16 %v1091
    %v1302 = vunpack.c.h.b16 %v1091
    %v1303 = vunpack.c.l.b16 %v1092
    %v1304 = vunpack.c.h.b16 %v1092
    %v1305 = vunpack.c.l.b16 %v1093
    %v1306 = vunpack.c.h.b16 %v1093
    %v1307 = vunpack.c.l.b16 %v1094
    %v1308 = vunpack.c.h.b16 %v1094
    %v1309 = vunpack.c.l.b16 %v1095
    %v1310 = vunpack.c.h.b16 %v1095
    %v1311 = vunpack.c.l.b16 %v1096
    %v1312 = vunpack.c.h.b16 %v1096
    %v1313 = vunpack.c.l.b16 %v1097
    %v1314 = vunpack.c.h.b16 %v1097
    %v1315 = vunpack.c.l.b16 %v1098
    %v1316 = vunpack.c.h.b16 %v1098
    %v1317 = vunpack.c.l.b16 %v1099
    %v1318 = vunpack.c.h.b16 %v1099
    %v1319 = vunpack.c.l.b16 %v1100
    %v1320 = vunpack.c.h.b16 %v1100
    %v1321 = vunpack.c.l.b16 %v1101
    %v1322 = vunpack.c.h.b16 %v1101
    %v1323 = vunpack.c.l.b16 %v1102
    %v1324 = vunpack.c.h.b16 %v1102
    %v1325 = vunpack.c.l.b16 %v1103
    %v1326 = vunpack.c.h.b16 %v1103
    %v1327 = vunpack.c.l.b16 %v1104
    %v1328 = vunpack.c.h.b16 %v1104
    %v1329 = vunpack.c.l.b16 %v1105
    %v1330 = vunpack.c.h.b16 %v1105
    %v1331 = vunpack.c.l.b16 %v1106
    %v1332 = vunpack.c.h.b16 %v1106
    %v1333 = vunpack.c.l.b16 %v1107
    %v1334 = vunpack.c.h.b16 %v1107
    %v1335 = vunpack.c.l.b16 %v1108
    %v1336 = vunpack.c.h.b16 %v1108
    %v1337 = vunpack.c.l.b16 %v1109
    %v1338 = vunpack.c.h.b16 %v1109
    %v1339 = vunpack.c.l.b16 %v1110
    %v1340 = vunpack.c.h.b16 %v1110
    %v1341 = vunpack.c.l.b16 %v1111
    %v1342 = vunpack.c.h.b16 %v1111
    %v1343 = vunpack.c.l.b16 %v1112
    %v1344 = vunpack.c.h.b16 %v1112
    %v1345 = vunpack.c.l.b16 %v1113
    %v1346 = vunpack.c.h.b16 %v1113
    %v1347 = vunpack.c.l.b16 %v1114
    %v1348 = vunpack.c.h.b16 %v1114
    %v1349 = vunpack.c.l.b16 %v1115
    %v1350 = vunpack.c.h.b16 %v1115
    %v1351 = vunpack.c.l.b16 %v1116
    %v1352 = vunpack.c.h.b16 %v1116
    %v1353 = vunpack.c.l.b16 %v1117
    %v1354 = vunpack.c.h.b16 %v1117
    %v1355 = vunpack.c.l.b16 %v1118
    %v1356 = vunpack.c.h.b16 %v1118
    %v1357 = vunpack.c.l.b16 %v1119
    %v1358 = vunpack.c.h.b16 %v1119
    %v1359 = vunpack.c.l.b16 %v1120
    %v1360 = vunpack.c.h.b16 %v1120
    %v1361 = vunpack.c.l.b16 %v1121
    %v1362 = vunpack.c.h.b16 %v1121
    %v1363 = vunpack.c.l.b16 %v1122
    %v1364 = vunpack.c.h.b16 %v1122
    %v1365 = vunpack.c.l.b16 %v1123
    %v1366 = vunpack.c.h.b16 %v1123
    %v1367 = vunpack.c.l.b16 %v1124
    %v1368 = vunpack.c.h.b16 %v1124
    %v1369 = vunpack.c.l.b16 %v1125
    %v1370 = vunpack.c.h.b16 %v1125
    %v1371 = vunpack.c.l.b16 %v1126
    %v1372 = vunpack.c.h.b16 %v1126
    %v1373 = vunpack.c.l.b16 %v1127
    %v1374 = vunpack.c.h.b16 %v1127
    %v1375 = vunpack.c.l.b16 %v1128
    %v1376 = vunpack.c.h.b16 %v1128
    %v1377 = vunpack.c.l.b16 %v1129
    %v1378 = vunpack.c.h.b16 %v1129
    %v1379 = vunpack.c.l.b16 %v1130
    %v1380 = vunpack.c.h.b16 %v1130
    %v1381 = vunpack.c.l.b16 %v1131
    %v1382 = vunpack.c.h.b16 %v1131
    %v1383 = vunpack.c.l.b16 %v1132
    %v1384 = vunpack.c.h.b16 %v1132
    %v1385 = vunpack.c.l.b16 %v1133
    %v1386 = vunpack.c.h.b16 %v1133
    %v1387 = vunpack.c.l.b16 %v1134
    %v1388 = vunpack.c.h.b16 %v1134
    %v1389 = vunpack.c.l.b16 %v1135
    %v1390 = vunpack.c.h.b16 %v1135
    %v1391 = vunpack.c.l.b16 %v1136
    %v1392 = vunpack.c.h.b16 %v1136
    %v1393 = vunpack.c.l.b16 %v1137
    %v1394 = vunpack.c.h.b16 %v1137
    %v1395 = vunpack.c.l.b16 %v1138
    %v1396 = vunpack.c.h.b16 %v1138
    %v1397 = vunpack.c.l.b16 %v1139
    %v1398 = vunpack.c.h.b16 %v1139
    %v1399 = vunpack.c.l.b16 %v1140
    %v1400 = vunpack.c.h.b16 %v1140
    %v1401 = vunpack.c.l.b16 %v1141
    %v1402 = vunpack.c.h.b16 %v1141
    %v1403 = vunpack.c.l.b16 %v1142
    %v1404 = vunpack.c.h.b16 %v1142
    %v1405 = vunpack.c.l.b16 %v1143
    %v1406 = vunpack.c.h.b16 %v1143
    %v1407 = vunpack.c.l.b16 %v1144
    %v1408 = vunpack.c.h.b16 %v1144
    %v1409 = vunpack.c.l.b16 %v1145
    %v1410 = vunpack.c.h.b16 %v1145
    %v1411 = vunpack.c.l.b16 %v1146
    %v1412 = vunpack.c.h.b16 %v1146
    %v1413 = vunpack.c.l.b16 %v1147
    %v1414 = vunpack.c.h.b16 %v1147
    %v1415 = vunpack.c.l.b16 %v1148
    %v1416 = vunpack.c.h.b16 %v1148
    %v1417 = vunpack.c.l.b16 %v1149
    %v1418 = vunpack.c.h.b16 %v1149
    %v1419 = vunpack.c.l.b16 %v1150
    %v1420 = vunpack.c.h.b16 %v1150
    %v1421 = vunpack.c.l.b16 %v1151
    %v1422 = vunpack.c.h.b16 %v1151
    %v1423 = vunpack.c.l.b16 %v1152
    %v1424 = vunpack.c.h.b16 %v1152
    %v1425 = vunpack.c.l.b16 %v1153
    %v1426 = vunpack.c.h.b16 %v1153
    %v1427 = vunpack.c.l.b16 %v1154
    %v1428 = vunpack.c.h.b16 %v1154
    %v1429 = vunpack.c.l.b16 %v1155
    %v1430 = vunpack.c.h.b16 %v1155
    %v1431 = vunpack.c.l.b16 %v1156
    %v1432 = vunpack.c.h.b16 %v1156
    %v1433 = vunpack.c.l.b16 %v1157
    %v1434 = vunpack.c.h.b16 %v1157
    %v1435 = vunpack.c.l.b16 %v1158
    %v1436 = vunpack.c.h.b16 %v1158
    %v1437 = vunpack.c.l.b16 %v1159
    %v1438 = vunpack.c.h.b16 %v1159
    %v1439 = vunpack.c.l.b16 %v1160
    %v1440 = vunpack.c.h.b16 %v1160
    %v1441 = vunpack.c.l.b16 %v1161
    %v1442 = vunpack.c.h.b16 %v1161
    %v1443 = vunpack.c.l.b16 %v1162
    %v1444 = vunpack.c.h.b16 %v1162
    %v1445 = vunpack.c.l.b16 %v1163
    %v1446 = vunpack.c.h.b16 %v1163
    %v1447 = vunpack.c.l.b16 %v1164
    %v1448 = vunpack.c.h.b16 %v1164
    %v1449 = vunpack.c.l.b16 %v1165
    %v1450 = vunpack.c.h.b16 %v1165
    %v1451 = vunpack.c.l.b16 %v1166
    %v1452 = vunpack.c.h.b16 %v1166
    %v1453 = vunpack.c.l.b16 %v1167
    %v1454 = vunpack.c.h.b16 %v1167
    %v1455 = vunpack.c.l.b16 %v1168
    %v1456 = vunpack.c.h.b16 %v1168
    %v1457 = vpack.c.b16 %v1271, %v1265
    %v1458 = vpack.c.b16 %v1272, %v1266
    %v1459 = vpack.c.b16 %v1273, %v1267
    %v1460 = vpack.c.b16 %v1274, %v1268
    %v1461 = vpack.c.b16 %v1275, %v1269
    %v1462 = vpack.c.b16 %v1276, %v1270
    %v1463 = vpack.c.b16 %v1283, %v1277
    %v1464 = vpack.c.b16 %v1284, %v1278
    %v1465 = vpack.c.b16 %v1285, %v1279
    %v1466 = vpack.c.b16 %v1286, %v1280
    %v1467 = vpack.c.b16 %v1287, %v1281
    %v1468 = vpack.c.b16 %v1288, %v1282
    %v1469 = vpack.c.b16 %v1295, %v1289
    %v1470 = vpack.c.b16 %v1296, %v1290
    %v1471 = vpack.c.b16 %v1297, %v1291
    %v1472 = vpack.c.b16 %v1298, %v1292
    %v1473 = vpack.c.b16 %v1299, %v1293
    %v1474 = vpack.c.b16 %v1300, %v1294
    %v1475 = vpack.c.b16 %v1307, %v1301
    %v1476 = vpack.c.b16 %v1308, %v1302
    %v1477 = vpack.c.b16 %v1309, %v1303
    %v1478 = vpack.c.b16 %v1310, %v1304
    %v1479 = vpack.c.b16 %v1311, %v1305
    %v1480 = vpack.c.b16 %v1312, %v1306
    %v1481 = vpack.c.b16 %v1319, %v1313
    %v1482 = vpack.c.b16 %v1320, %v1314
    %v1483 = vpack.c.b16 %v1321, %v1315
    %v1484 = vpack.c.b16 %v1322, %v1316
    %v1485 = vpack.c.b16 %v1323, %v1317
    %v1486 = vpack.c.b16 %v1324, %v1318
    %v1487 = vpack.c.b16 %v1331, %v1325
    %v1488 = vpack.c.b16 %v1332, %v1326
    %v1489 = vpack.c.b16 %v1333, %v1327
    %v1490 = vpack.c.b16 %v1334, %v1328
    %v1491 = vpack.c.b16 %v1335, %v1329
    %v1492 = vpack.c.b16 %v1336, %v1330
    %v1493 = vpack.c.b16 %v1343, %v1337
    %v1494 = vpack.c.b16 %v1344, %v1338
    %v1495 = vpack.c.b16 %v1345, %v1339
    %v1496 = vpack.c.b16 %v1346, %v1340
    %v1497 = vpack.c.b16 %v1347, %v1341
    %v1498 = vpack.c.b16 %v1348, %v1342
    %v1499 = vpack.c.b16 %v1355, %v1349
    %v1500 = vpack.c.b16 %v1356, %v1350
    %v1501 = vpack.c.b16 %v1357, %v1351
    %v1502 = vpack.c.b16 %v1358, %v1352
    %v1503 = vpack.c.b16 %v1359, %v1353
    %v1504 = vpack.c.b16 %v1360, %v1354
    %v1505 = vpack.c.b16 %v1367, %v1361
    %v1506 = vpack.c.b16 %v1368, %v1362
    %v1507 = vpack.c.b16 %v1369, %v1363
    %v1508 = vpack.c.b16 %v1370, %v1364
    %v1509 = vpack.c.b16 %v1371, %v1365
    %v1510 = vpack.c.b16 %v1372, %v1366
    %v1511 = vpack.c.b16 %v1379, %v1373
    %v1512 = vpack.c.b16 %v1380, %v1374
    %v1513 = vpack.c.b16 %v1381, %v1375
    %v1514 = vpack.c.b16 %v1382, %v1376
    %v1515 = vpack.c.b16 %v1383, %v1377
    %v1516 = vpack.c.b16 %v1384, %v1378
    %v1517 = vpack.c.b16 %v1391, %v1385
    %v1518 = vpack.c.b16 %v1392, %v1386
    %v1519 = vpack.c.b16 %v1393, %v1387
    %v1520 = vpack.c.b16 %v1394, %v1388
    %v1521 = vpack.c.b16 %v1395, %v1389
    %v1522 = vpack.c.b16 %v1396, %v1390
    %v1523 = vpack.c.b16 %v1403, %v1397
    %v1524 = vpack.c.b16 %v1404, %v1398
    %v1525 = vpack.c.b16 %v1405, %v1399
    %v1526 = vpack.c.b16 %v1406, %v1400
    %v1527 = vpack.c.b16 %v1407, %v1401
    %v1528 = vpack.c.b16 %v1408, %v1402
    %v1529 = vpack.c.b16 %v1415, %v1409
    %v1530 = vpack.c.b16 %v1416, %v1410
    %v1531 = vpack.c.b16 %v1417, %v1411
    %v1532 = vpack.c.b16 %v1418, %v1412
    %v1533 = vpack.c.b16 %v1419, %v1413
    %v1534 = vpack.c.b16 %v1420, %v1414
    %v1535 = vpack.c.b16 %v1427, %v1421
    %v1536 = vpack.c.b16 %v1428, %v1422
    %v1537 = vpack.c.b16 %v1429, %v1423
    %v1538 = vpack.c.b16 %v1430, %v1424
    %v1539 = vpack.c.b16 %v1431, %v1425
    %v1540 = vpack.c.b16 %v1432, %v1426
    %v1541 = vpack.c.b16 %v1439, %v1433
    %v1542 = vpack.c.b16 %v1440, %v1434
    %v1543 = vpack.c.b16 %v1441, %v1435
    %v1544 = vpack.c.b16 %v1442, %v1436
    %v1545 = vpack.c.b16 %v1443, %v1437
    %v1546 = vpack.c.b16 %v1444, %v1438
    %v1547 = vpack.c.b16 %v1451, %v1445
    %v1548 = vpack.c.b16 %v1452, %v1446
    %v1549 = vpack.c.b16 %v1453, %v1447
    %v1550 = vpack.c.b16 %v1454, %v1448
    %v1551 = vpack.c.b16 %v1455, %v1449
    %v1552 = vpack.c.b16 %v1456, %v1450
    %1649 = vmatprep.subr.bf16.mxu0 %v1458
    %1650 = vmatpush1.bf16.msra.mxu0 %v1457
    %1651 = vmatprep.subr.bf16.mxu0 %v1464
    %1652 = vmatpush1.bf16.msra.mxu0 %v1463
    %1653 = vmatprep.subr.bf16.mxu0 %v1470
    %1654 = vmatpush1.bf16.msra.mxu0 %v1469
    %1655 = vmatprep.subr.bf16.mxu0 %v1476
    %1656 = vmatpush1.bf16.msra.mxu0 %v1475
    %1657 = vmatprep.subr.bf16.mxu0 %v1482
    %1658 = vmatpush1.bf16.msra.mxu0 %v1481
    %1659 = vmatprep.subr.bf16.mxu0 %v1488
    %1660 = vmatpush1.bf16.msra.mxu0 %v1487
    %1661 = vmatprep.subr.bf16.mxu0 %v1494
    %1662 = vmatpush1.bf16.msra.mxu0 %v1493
    %1663 = vmatprep.subr.bf16.mxu0 %v1500
    %1664 = vmatpush1.bf16.msra.mxu0 %v1499
    %1665 = vmatprep.subr.bf16.mxu0 %v1506
    %1666 = vmatpush1.bf16.msra.mxu0 %v1505
    %1667 = vmatprep.subr.bf16.mxu0 %v1512
    %1668 = vmatpush1.bf16.msra.mxu0 %v1511
    %1669 = vmatprep.subr.bf16.mxu0 %v1518
    %1670 = vmatpush1.bf16.msra.mxu0 %v1517
    %1671 = vmatprep.subr.bf16.mxu0 %v1524
    %1672 = vmatpush1.bf16.msra.mxu0 %v1523
    %1673 = vmatprep.subr.bf16.mxu0 %v1530
    %1674 = vmatpush1.bf16.msra.mxu0 %v1529
    %1675 = vmatprep.subr.bf16.mxu0 %v1536
    %1676 = vmatpush1.bf16.msra.mxu0 %v1535
    %1677 = vmatprep.subr.bf16.mxu0 %v1542
    %1678 = vmatpush1.bf16.msra.mxu0 %v1541
    %1679 = vmatprep.subr.bf16.mxu0 %v1548
    %1680 = vmatpush1.bf16.msra.mxu0 %v1547
    %1681 = vmatprep.mubr.bf16.mxu0 %v1072
    %1682 = vmatmul.mubr.bf16.gmra.mrb[0].mxu0 %v1071
    %v1683 = vpop.f32.mrb[0].mxu0
    %v1684 = vadd.f32 0.0, %v1683
    %v1685 = vpop.f32.mrb[0].mxu0
    %v1686 = vadd.f32 0.0, %v1685
    %v1687 = vpop.f32.mrb[0].mxu0
    %v1688 = vpop.f32.mrb[0].mxu0
    %1689 = vdwg.mxu0
    %1690 = vmatprep.subr.bf16.mxu0 %v1460
    %1691 = vmatpush1.bf16.msra.mxu0 %v1459
    %1692 = vmatprep.subr.bf16.mxu0 %v1466
    %1693 = vmatpush1.bf16.msra.mxu0 %v1465
    %1694 = vmatprep.subr.bf16.mxu0 %v1472
    %1695 = vmatpush1.bf16.msra.mxu0 %v1471
    %1696 = vmatprep.subr.bf16.mxu0 %v1478
    %1697 = vmatpush1.bf16.msra.mxu0 %v1477
    %1698 = vmatprep.subr.bf16.mxu0 %v1484
    %1699 = vmatpush1.bf16.msra.mxu0 %v1483
    %1700 = vmatprep.subr.bf16.mxu0 %v1490
    %1701 = vmatpush1.bf16.msra.mxu0 %v1489
    %1702 = vmatprep.subr.bf16.mxu0 %v1496
    %1703 = vmatpush1.bf16.msra.mxu0 %v1495
    %1704 = vmatprep.subr.bf16.mxu0 %v1502
    %1705 = vmatpush1.bf16.msra.mxu0 %v1501
    %1706 = vmatprep.subr.bf16.mxu0 %v1508
    %1707 = vmatpush1.bf16.msra.mxu0 %v1507
    %1708 = vmatprep.subr.bf16.mxu0 %v1514
    %1709 = vmatpush1.bf16.msra.mxu0 %v1513
    %1710 = vmatprep.subr.bf16.mxu0 %v1520
    %1711 = vmatpush1.bf16.msra.mxu0 %v1519
    %1712 = vmatprep.subr.bf16.mxu0 %v1526
    %1713 = vmatpush1.bf16.msra.mxu0 %v1525
    %1714 = vmatprep.subr.bf16.mxu0 %v1532
    %1715 = vmatpush1.bf16.msra.mxu0 %v1531
    %1716 = vmatprep.subr.bf16.mxu0 %v1538
    %1717 = vmatpush1.bf16.msra.mxu0 %v1537
    %1718 = vmatprep.subr.bf16.mxu0 %v1544
    %1719 = vmatpush1.bf16.msra.mxu0 %v1543
    %1720 = vmatprep.subr.bf16.mxu0 %v1550
    %1721 = vmatpush1.bf16.msra.mxu0 %v1549
    %1722 = vmatprep.mubr.bf16.mxu0 %v1072
    %1723 = vmatmul.mubr.bf16.gmra.mrb[0].mxu0 %v1071
    %v1724 = vpop.f32.mrb[0].mxu0
    %v1725 = vadd.f32 0.0, %v1724
    %v1726 = vpop.f32.mrb[0].mxu0
    %v1727 = vadd.f32 0.0, %v1726
    %v1728 = vpop.f32.mrb[0].mxu0
    %v1729 = vpop.f32.mrb[0].mxu0
    %1730 = vdwg.mxu0
    %1731 = vmatprep.subr.bf16.mxu0 %v1462
    %1732 = vmatpush1.bf16.msra.mxu0 %v1461
    %1733 = vmatprep.subr.bf16.mxu0 %v1468
    %1734 = vmatpush1.bf16.msra.mxu0 %v1467
    %1735 = vmatprep.subr.bf16.mxu0 %v1474
    %1736 = vmatpush1.bf16.msra.mxu0 %v1473
    %1737 = vmatprep.subr.bf16.mxu0 %v1480
    %1738 = vmatpush1.bf16.msra.mxu0 %v1479
    %1739 = vmatprep.subr.bf16.mxu0 %v1486
    %1740 = vmatpush1.bf16.msra.mxu0 %v1485
    %1741 = vmatprep.subr.bf16.mxu0 %v1492
    %1742 = vmatpush1.bf16.msra.mxu0 %v1491
    %1743 = vmatprep.subr.bf16.mxu0 %v1498
    %1744 = vmatpush1.bf16.msra.mxu0 %v1497
    %1745 = vmatprep.subr.bf16.mxu0 %v1504
    %1746 = vmatpush1.bf16.msra.mxu0 %v1503
    %1747 = vmatprep.subr.bf16.mxu0 %v1510
    %1748 = vmatpush1.bf16.msra.mxu0 %v1509
    %1749 = vmatprep.subr.bf16.mxu0 %v1516
    %1750 = vmatpush1.bf16.msra.mxu0 %v1515
    %1751 = vmatprep.subr.bf16.mxu0 %v1522
    %1752 = vmatpush1.bf16.msra.mxu0 %v1521
    %1753 = vmatprep.subr.bf16.mxu0 %v1528
    %1754 = vmatpush1.bf16.msra.mxu0 %v1527
    %1755 = vmatprep.subr.bf16.mxu0 %v1534
    %1756 = vmatpush1.bf16.msra.mxu0 %v1533
    %1757 = vmatprep.subr.bf16.mxu0 %v1540
    %1758 = vmatpush1.bf16.msra.mxu0 %v1539
    %1759 = vmatprep.subr.bf16.mxu0 %v1546
    %1760 = vmatpush1.bf16.msra.mxu0 %v1545
    %1761 = vmatprep.subr.bf16.mxu0 %v1552
    %1762 = vmatpush1.bf16.msra.mxu0 %v1551
    %1763 = vmatprep.mubr.bf16.mxu0 %v1072
    %1764 = vmatmul.mubr.bf16.gmra.mrb[0].mxu0 %v1071
    %v1765 = vpop.f32.mrb[0].mxu0
    %v1766 = vadd.f32 0.0, %v1765
    %v1767 = vpop.f32.mrb[0].mxu0
    %v1768 = vadd.f32 0.0, %v1767
    %v1769 = vpop.f32.mrb[0].mxu0
    %v1770 = vpop.f32.mrb[0].mxu0
    %1771 = vdwg.mxu0
    %v1776 = vcombine.low %v1684, %v1686
    %v1777 = vcombine.low %v1725, %v1727
    %v1779 = vunpack.c.l.s4 1966171168
    %v1780 = vunpack.c.0.s8 %v1779
    %v1781 = vlaneseq
    %v1782 = vshrl.u32 %v1781, 7
    %v1783 = vsub.s32 %v1780, %v1782
    %v1784 = vrot.slane %v1776, %v1783
    %v1786 = vunpack.c.l.s4 1966171168
    %v1787 = vunpack.c.0.s8 %v1786
    %v1788 = vlaneseq
    %v1789 = vshrl.u32 %v1788, 7
    %v1790 = vsub.s32 %v1787, %v1789
    %v1791 = vrot.slane %v1777, %v1790
    %v1792 = vcombine.low %v1784, %v1791
    %v1794 = vunpack.c.l.s4 1966171168
    %v1795 = vunpack.c.0.s8 %v1794
    %v1796 = vlaneseq
    %v1797 = vshrl.u32 %v1796, 7
    %v1798 = vsub.s32 %v1795, %v1797
    %v1799 = vrot.slane %v1792, %v1798
    %v1801 = vadd.f32 %v1059, %v1799
    %v1802 = vxor.u32 %v1801, 2147483648
    %v1803 = vmul.f32 %v1802, 1.442695
    %v1804 = vpow.pop %v1803
    %v1805 = vadd.f32 %v1804, 1.0
    %v1806 = vrcp.pop %v1805
    %v1807 = vmul.f32 1.0, %v1806
    %v1808 = vadd.f32 %v1766, %v1011
    %v1809 = vadd.f32 %v1768, %v1015
    %v1812 = vcombine.low %v1808, %v1809
    %v1814 = vunpack.c.l.s4 1966171168
    %v1815 = vunpack.c.0.s8 %v1814
    %v1816 = vlaneseq
    %v1817 = vshrl.u32 %v1816, 7
    %v1818 = vsub.s32 %v1815, %v1817
    %v1819 = vrot.slane %v1812, %v1818
    %v1821 = vunpack.c.l.s4 1966171168
    %v1822 = vunpack.c.0.s8 %v1821
    %v1823 = vlaneseq
    %v1824 = vshrl.u32 %v1823, 7
    %v1825 = vsub.s32 %v1822, %v1824
    %v1826 = vrot.slane %v1819, %v1825
    %v1828 = vmul.f32 %v1807, %v1826
    %v1830 = vrot.slane %v1059, 4
    %v1832 = vadd.f32 %v1830, %v1828
    %v1833 = vtanh.pop %v1832
    %v1834 = vsub.f32 %v1049, %v1833
    %v1836 = vrot.slane %v1807, 2
    %v1838 = vmul.f32 %v1836, %v1834
    %v1839 = vadd.f32 %v1833, %v1838
    %s1840 = scalar_lea.vmem %s7, 1
    %1841 = vst.msk [vmem:[%s1840] ss:$8 sm:$0x3] %vm1053, %v1839
    %1842 = vst.msk [vmem:[%s1840] ss:$8 sm:$0x0] %vm1053, %v1839
    %s1843 = scalar_lea.vmem [#allocation2], 2
    %v1844 = vld [vmem:[%s1843] ss:$8 sm:$0xf]
    %v1845 = vld [vmem:[%s1843] ss:$8 sm:$0x30]
    %v1846 = vor.u32 %v1844, %v1845
    %v1848 = vlaneseq
    %v1849 = vshrl.u32 %v1848, 7
    %v1850 = vsub.s32 0, %v1849
    %v1851 = vrot.slane %v1839, %v1850
    %v1852 = vlaneseq
    %v1853 = vshrl.u32 %v1852, 7
    %v1854 = vsub.s32 1, %v1853
    %v1855 = vrot.slane %v1839, %v1854
    %v1858 = vpack.c.bf16 %v1851, %v1851
    %v1859 = vpack.c.bf16 %v1855, %v1855
    %v1860 = vld [vmem:[%s3] sm:$0xff]
    %v1861 = vld [vmem:[%s3 + $0x8] sm:$0xff]
    %v1862 = vld [vmem:[%s3 + $0x10] sm:$0xff]
    %v1863 = vld [vmem:[%s3 + $0x18] sm:$0xff]
    %v1864 = vld [vmem:[%s3 + $0x20] sm:$0xff]
    %v1865 = vld [vmem:[%s3 + $0x28] sm:$0xff]
    %v1866 = vld [vmem:[%s3 + $0x30] sm:$0xff]
    %v1867 = vld [vmem:[%s3 + $0x38] sm:$0xff]
    %v1868 = vld [vmem:[%s3 + $0x40] sm:$0xff]
    %v1869 = vld [vmem:[%s3 + $0x48] sm:$0xff]
    %v1870 = vld [vmem:[%s3 + $0x50] sm:$0xff]
    %v1871 = vld [vmem:[%s3 + $0x58] sm:$0xff]
    %v1872 = vld [vmem:[%s3 + $0x60] sm:$0xff]
    %v1873 = vld [vmem:[%s3 + $0x68] sm:$0xff]
    %v1874 = vld [vmem:[%s3 + $0x70] sm:$0xff]
    %v1875 = vld [vmem:[%s3 + $0x78] sm:$0xff]
    %v1876 = vld [vmem:[%s3 + $0x80] sm:$0xff]
    %v1877 = vld [vmem:[%s3 + $0x88] sm:$0xff]
    %v1878 = vld [vmem:[%s3 + $0x90] sm:$0xff]
    %v1879 = vld [vmem:[%s3 + $0x98] sm:$0xff]
    %v1880 = vld [vmem:[%s3 + $0xa0] sm:$0xff]
    %v1881 = vld [vmem:[%s3 + $0xa8] sm:$0xff]
    %v1882 = vld [vmem:[%s3 + $0xb0] sm:$0xff]
    %v1883 = vld [vmem:[%s3 + $0xb8] sm:$0xff]
    %v1884 = vld [vmem:[%s3 + $0xc0] sm:$0xff]
    %v1885 = vld [vmem:[%s3 + $0xc8] sm:$0xff]
    %v1886 = vld [vmem:[%s3 + $0xd0] sm:$0xff]
    %v1887 = vld [vmem:[%s3 + $0xd8] sm:$0xff]
    %v1888 = vld [vmem:[%s3 + $0xe0] sm:$0xff]
    %v1889 = vld [vmem:[%s3 + $0xe8] sm:$0xff]
    %v1890 = vld [vmem:[%s3 + $0xf0] sm:$0xff]
    %v1891 = vld [vmem:[%s3 + $0xf8] sm:$0xff]
    %v1892 = vld [vmem:[%s3 + $0x100] sm:$0xff]
    %v1893 = vld [vmem:[%s3 + $0x108] sm:$0xff]
    %v1894 = vld [vmem:[%s3 + $0x110] sm:$0xff]
    %v1895 = vld [vmem:[%s3 + $0x118] sm:$0xff]
    %v1896 = vld [vmem:[%s3 + $0x120] sm:$0xff]
    %v1897 = vld [vmem:[%s3 + $0x128] sm:$0xff]
    %v1898 = vld [vmem:[%s3 + $0x130] sm:$0xff]
    %v1899 = vld [vmem:[%s3 + $0x138] sm:$0xff]
    %v1900 = vld [vmem:[%s3 + $0x140] sm:$0xff]
    %v1901 = vld [vmem:[%s3 + $0x148] sm:$0xff]
    %v1902 = vld [vmem:[%s3 + $0x150] sm:$0xff]
    %v1903 = vld [vmem:[%s3 + $0x158] sm:$0xff]
    %v1904 = vld [vmem:[%s3 + $0x160] sm:$0xff]
    %v1905 = vld [vmem:[%s3 + $0x168] sm:$0xff]
    %v1906 = vld [vmem:[%s3 + $0x170] sm:$0xff]
    %v1907 = vld [vmem:[%s3 + $0x178] sm:$0xff]
    %v1908 = vld [vmem:[%s3 + $0x180] sm:$0xff]
    %v1909 = vld [vmem:[%s3 + $0x188] sm:$0xff]
    %v1910 = vld [vmem:[%s3 + $0x190] sm:$0xff]
    %v1911 = vld [vmem:[%s3 + $0x198] sm:$0xff]
    %v1912 = vld [vmem:[%s3 + $0x1a0] sm:$0xff]
    %v1913 = vld [vmem:[%s3 + $0x1a8] sm:$0xff]
    %v1914 = vld [vmem:[%s3 + $0x1b0] sm:$0xff]
    %v1915 = vld [vmem:[%s3 + $0x1b8] sm:$0xff]
    %v1916 = vld [vmem:[%s3 + $0x1c0] sm:$0xff]
    %v1917 = vld [vmem:[%s3 + $0x1c8] sm:$0xff]
    %v1918 = vld [vmem:[%s3 + $0x1d0] sm:$0xff]
    %v1919 = vld [vmem:[%s3 + $0x1d8] sm:$0xff]
    %v1920 = vld [vmem:[%s3 + $0x1e0] sm:$0xff]
    %v1921 = vld [vmem:[%s3 + $0x1e8] sm:$0xff]
    %v1922 = vld [vmem:[%s3 + $0x1f0] sm:$0xff]
    %v1923 = vld [vmem:[%s3 + $0x1f8] sm:$0xff]
    %v1924 = vld [vmem:[%s3 + $0x200] sm:$0xff]
    %v1925 = vld [vmem:[%s3 + $0x208] sm:$0xff]
    %v1926 = vld [vmem:[%s3 + $0x210] sm:$0xff]
    %v1927 = vld [vmem:[%s3 + $0x218] sm:$0xff]
    %v1928 = vld [vmem:[%s3 + $0x220] sm:$0xff]
    %v1929 = vld [vmem:[%s3 + $0x228] sm:$0xff]
    %v1930 = vld [vmem:[%s3 + $0x230] sm:$0xff]
    %v1931 = vld [vmem:[%s3 + $0x238] sm:$0xff]
    %v1932 = vld [vmem:[%s3 + $0x240] sm:$0xff]
    %v1933 = vld [vmem:[%s3 + $0x248] sm:$0xff]
    %v1934 = vld [vmem:[%s3 + $0x250] sm:$0xff]
    %v1935 = vld [vmem:[%s3 + $0x258] sm:$0xff]
    %v1936 = vld [vmem:[%s3 + $0x260] sm:$0xff]
    %v1937 = vld [vmem:[%s3 + $0x268] sm:$0xff]
    %v1938 = vld [vmem:[%s3 + $0x270] sm:$0xff]
    %v1939 = vld [vmem:[%s3 + $0x278] sm:$0xff]
    %v1940 = vld [vmem:[%s3 + $0x280] sm:$0xff]
    %v1941 = vld [vmem:[%s3 + $0x288] sm:$0xff]
    %v1942 = vld [vmem:[%s3 + $0x290] sm:$0xff]
    %v1943 = vld [vmem:[%s3 + $0x298] sm:$0xff]
    %v1944 = vld [vmem:[%s3 + $0x2a0] sm:$0xff]
    %v1945 = vld [vmem:[%s3 + $0x2a8] sm:$0xff]
    %v1946 = vld [vmem:[%s3 + $0x2b0] sm:$0xff]
    %v1947 = vld [vmem:[%s3 + $0x2b8] sm:$0xff]
    %v1948 = vld [vmem:[%s3 + $0x2c0] sm:$0xff]
    %v1949 = vld [vmem:[%s3 + $0x2c8] sm:$0xff]
    %v1950 = vld [vmem:[%s3 + $0x2d0] sm:$0xff]
    %v1951 = vld [vmem:[%s3 + $0x2d8] sm:$0xff]
    %v1952 = vld [vmem:[%s3 + $0x2e0] sm:$0xff]
    %v1953 = vld [vmem:[%s3 + $0x2e8] sm:$0xff]
    %v1954 = vld [vmem:[%s3 + $0x2f0] sm:$0xff]
    %v1955 = vld [vmem:[%s3 + $0x2f8] sm:$0xff]
    %v2052 = vunpack.c.l.b16 %v1860
    %v2053 = vunpack.c.h.b16 %v1860
    %v2054 = vunpack.c.l.b16 %v1861
    %v2055 = vunpack.c.h.b16 %v1861
    %v2056 = vunpack.c.l.b16 %v1862
    %v2057 = vunpack.c.h.b16 %v1862
    %v2058 = vunpack.c.l.b16 %v1863
    %v2059 = vunpack.c.h.b16 %v1863
    %v2060 = vunpack.c.l.b16 %v1864
    %v2061 = vunpack.c.h.b16 %v1864
    %v2062 = vunpack.c.l.b16 %v1865
    %v2063 = vunpack.c.h.b16 %v1865
    %v2064 = vunpack.c.l.b16 %v1866
    %v2065 = vunpack.c.h.b16 %v1866
    %v2066 = vunpack.c.l.b16 %v1867
    %v2067 = vunpack.c.h.b16 %v1867
    %v2068 = vunpack.c.l.b16 %v1868
    %v2069 = vunpack.c.h.b16 %v1868
    %v2070 = vunpack.c.l.b16 %v1869
    %v2071 = vunpack.c.h.b16 %v1869
    %v2072 = vunpack.c.l.b16 %v1870
    %v2073 = vunpack.c.h.b16 %v1870
    %v2074 = vunpack.c.l.b16 %v1871
    %v2075 = vunpack.c.h.b16 %v1871
    %v2076 = vunpack.c.l.b16 %v1872
    %v2077 = vunpack.c.h.b16 %v1872
    %v2078 = vunpack.c.l.b16 %v1873
    %v2079 = vunpack.c.h.b16 %v1873
    %v2080 = vunpack.c.l.b16 %v1874
    %v2081 = vunpack.c.h.b16 %v1874
    %v2082 = vunpack.c.l.b16 %v1875
    %v2083 = vunpack.c.h.b16 %v1875
    %v2084 = vunpack.c.l.b16 %v1876
    %v2085 = vunpack.c.h.b16 %v1876
    %v2086 = vunpack.c.l.b16 %v1877
    %v2087 = vunpack.c.h.b16 %v1877
    %v2088 = vunpack.c.l.b16 %v1878
    %v2089 = vunpack.c.h.b16 %v1878
    %v2090 = vunpack.c.l.b16 %v1879
    %v2091 = vunpack.c.h.b16 %v1879
    %v2092 = vunpack.c.l.b16 %v1880
    %v2093 = vunpack.c.h.b16 %v1880
    %v2094 = vunpack.c.l.b16 %v1881
    %v2095 = vunpack.c.h.b16 %v1881
    %v2096 = vunpack.c.l.b16 %v1882
    %v2097 = vunpack.c.h.b16 %v1882
    %v2098 = vunpack.c.l.b16 %v1883
    %v2099 = vunpack.c.h.b16 %v1883
    %v2100 = vunpack.c.l.b16 %v1884
    %v2101 = vunpack.c.h.b16 %v1884
    %v2102 = vunpack.c.l.b16 %v1885
    %v2103 = vunpack.c.h.b16 %v1885
    %v2104 = vunpack.c.l.b16 %v1886
    %v2105 = vunpack.c.h.b16 %v1886
    %v2106 = vunpack.c.l.b16 %v1887
    %v2107 = vunpack.c.h.b16 %v1887
    %v2108 = vunpack.c.l.b16 %v1888
    %v2109 = vunpack.c.h.b16 %v1888
    %v2110 = vunpack.c.l.b16 %v1889
    %v2111 = vunpack.c.h.b16 %v1889
    %v2112 = vunpack.c.l.b16 %v1890
    %v2113 = vunpack.c.h.b16 %v1890
    %v2114 = vunpack.c.l.b16 %v1891
    %v2115 = vunpack.c.h.b16 %v1891
    %v2116 = vunpack.c.l.b16 %v1892
    %v2117 = vunpack.c.h.b16 %v1892
    %v2118 = vunpack.c.l.b16 %v1893
    %v2119 = vunpack.c.h.b16 %v1893
    %v2120 = vunpack.c.l.b16 %v1894
    %v2121 = vunpack.c.h.b16 %v1894
    %v2122 = vunpack.c.l.b16 %v1895
    %v2123 = vunpack.c.h.b16 %v1895
    %v2124 = vunpack.c.l.b16 %v1896
    %v2125 = vunpack.c.h.b16 %v1896
    %v2126 = vunpack.c.l.b16 %v1897
    %v2127 = vunpack.c.h.b16 %v1897
    %v2128 = vunpack.c.l.b16 %v1898
    %v2129 = vunpack.c.h.b16 %v1898
    %v2130 = vunpack.c.l.b16 %v1899
    %v2131 = vunpack.c.h.b16 %v1899
    %v2132 = vunpack.c.l.b16 %v1900
    %v2133 = vunpack.c.h.b16 %v1900
    %v2134 = vunpack.c.l.b16 %v1901
    %v2135 = vunpack.c.h.b16 %v1901
    %v2136 = vunpack.c.l.b16 %v1902
    %v2137 = vunpack.c.h.b16 %v1902
    %v2138 = vunpack.c.l.b16 %v1903
    %v2139 = vunpack.c.h.b16 %v1903
    %v2140 = vunpack.c.l.b16 %v1904
    %v2141 = vunpack.c.h.b16 %v1904
    %v2142 = vunpack.c.l.b16 %v1905
    %v2143 = vunpack.c.h.b16 %v1905
    %v2144 = vunpack.c.l.b16 %v1906
    %v2145 = vunpack.c.h.b16 %v1906
    %v2146 = vunpack.c.l.b16 %v1907
    %v2147 = vunpack.c.h.b16 %v1907
    %v2148 = vunpack.c.l.b16 %v1908
    %v2149 = vunpack.c.h.b16 %v1908
    %v2150 = vunpack.c.l.b16 %v1909
    %v2151 = vunpack.c.h.b16 %v1909
    %v2152 = vunpack.c.l.b16 %v1910
    %v2153 = vunpack.c.h.b16 %v1910
    %v2154 = vunpack.c.l.b16 %v1911
    %v2155 = vunpack.c.h.b16 %v1911
    %v2156 = vunpack.c.l.b16 %v1912
    %v2157 = vunpack.c.h.b16 %v1912
    %v2158 = vunpack.c.l.b16 %v1913
    %v2159 = vunpack.c.h.b16 %v1913
    %v2160 = vunpack.c.l.b16 %v1914
    %v2161 = vunpack.c.h.b16 %v1914
    %v2162 = vunpack.c.l.b16 %v1915
    %v2163 = vunpack.c.h.b16 %v1915
    %v2164 = vunpack.c.l.b16 %v1916
    %v2165 = vunpack.c.h.b16 %v1916
    %v2166 = vunpack.c.l.b16 %v1917
    %v2167 = vunpack.c.h.b16 %v1917
    %v2168 = vunpack.c.l.b16 %v1918
    %v2169 = vunpack.c.h.b16 %v1918
    %v2170 = vunpack.c.l.b16 %v1919
    %v2171 = vunpack.c.h.b16 %v1919
    %v2172 = vunpack.c.l.b16 %v1920
    %v2173 = vunpack.c.h.b16 %v1920
    %v2174 = vunpack.c.l.b16 %v1921
    %v2175 = vunpack.c.h.b16 %v1921
    %v2176 = vunpack.c.l.b16 %v1922
    %v2177 = vunpack.c.h.b16 %v1922
    %v2178 = vunpack.c.l.b16 %v1923
    %v2179 = vunpack.c.h.b16 %v1923
    %v2180 = vunpack.c.l.b16 %v1924
    %v2181 = vunpack.c.h.b16 %v1924
    %v2182 = vunpack.c.l.b16 %v1925
    %v2183 = vunpack.c.h.b16 %v1925
    %v2184 = vunpack.c.l.b16 %v1926
    %v2185 = vunpack.c.h.b16 %v1926
    %v2186 = vunpack.c.l.b16 %v1927
    %v2187 = vunpack.c.h.b16 %v1927
    %v2188 = vunpack.c.l.b16 %v1928
    %v2189 = vunpack.c.h.b16 %v1928
    %v2190 = vunpack.c.l.b16 %v1929
    %v2191 = vunpack.c.h.b16 %v1929
    %v2192 = vunpack.c.l.b16 %v1930
    %v2193 = vunpack.c.h.b16 %v1930
    %v2194 = vunpack.c.l.b16 %v1931
    %v2195 = vunpack.c.h.b16 %v1931
    %v2196 = vunpack.c.l.b16 %v1932
    %v2197 = vunpack.c.h.b16 %v1932
    %v2198 = vunpack.c.l.b16 %v1933
    %v2199 = vunpack.c.h.b16 %v1933
    %v2200 = vunpack.c.l.b16 %v1934
    %v2201 = vunpack.c.h.b16 %v1934
    %v2202 = vunpack.c.l.b16 %v1935
    %v2203 = vunpack.c.h.b16 %v1935
    %v2204 = vunpack.c.l.b16 %v1936
    %v2205 = vunpack.c.h.b16 %v1936
    %v2206 = vunpack.c.l.b16 %v1937
    %v2207 = vunpack.c.h.b16 %v1937
    %v2208 = vunpack.c.l.b16 %v1938
    %v2209 = vunpack.c.h.b16 %v1938
    %v2210 = vunpack.c.l.b16 %v1939
    %v2211 = vunpack.c.h.b16 %v1939
    %v2212 = vunpack.c.l.b16 %v1940
    %v2213 = vunpack.c.h.b16 %v1940
    %v2214 = vunpack.c.l.b16 %v1941
    %v2215 = vunpack.c.h.b16 %v1941
    %v2216 = vunpack.c.l.b16 %v1942
    %v2217 = vunpack.c.h.b16 %v1942
    %v2218 = vunpack.c.l.b16 %v1943
    %v2219 = vunpack.c.h.b16 %v1943
    %v2220 = vunpack.c.l.b16 %v1944
    %v2221 = vunpack.c.h.b16 %v1944
    %v2222 = vunpack.c.l.b16 %v1945
    %v2223 = vunpack.c.h.b16 %v1945
    %v2224 = vunpack.c.l.b16 %v1946
    %v2225 = vunpack.c.h.b16 %v1946
    %v2226 = vunpack.c.l.b16 %v1947
    %v2227 = vunpack.c.h.b16 %v1947
    %v2228 = vunpack.c.l.b16 %v1948
    %v2229 = vunpack.c.h.b16 %v1948
    %v2230 = vunpack.c.l.b16 %v1949
    %v2231 = vunpack.c.h.b16 %v1949
    %v2232 = vunpack.c.l.b16 %v1950
    %v2233 = vunpack.c.h.b16 %v1950
    %v2234 = vunpack.c.l.b16 %v1951
    %v2235 = vunpack.c.h.b16 %v1951
    %v2236 = vunpack.c.l.b16 %v1952
    %v2237 = vunpack.c.h.b16 %v1952
    %v2238 = vunpack.c.l.b16 %v1953
    %v2239 = vunpack.c.h.b16 %v1953
    %v2240 = vunpack.c.l.b16 %v1954
    %v2241 = vunpack.c.h.b16 %v1954
    %v2242 = vunpack.c.l.b16 %v1955
    %v2243 = vunpack.c.h.b16 %v1955
    %v2244 = vpack.c.b16 %v2058, %v2052
    %v2245 = vpack.c.b16 %v2059, %v2053
    %v2246 = vpack.c.b16 %v2060, %v2054
    %v2247 = vpack.c.b16 %v2061, %v2055
    %v2248 = vpack.c.b16 %v2062, %v2056
    %v2249 = vpack.c.b16 %v2063, %v2057
    %v2250 = vpack.c.b16 %v2070, %v2064
    %v2251 = vpack.c.b16 %v2071, %v2065
    %v2252 = vpack.c.b16 %v2072, %v2066
    %v2253 = vpack.c.b16 %v2073, %v2067
    %v2254 = vpack.c.b16 %v2074, %v2068
    %v2255 = vpack.c.b16 %v2075, %v2069
    %v2256 = vpack.c.b16 %v2082, %v2076
    %v2257 = vpack.c.b16 %v2083, %v2077
    %v2258 = vpack.c.b16 %v2084, %v2078
    %v2259 = vpack.c.b16 %v2085, %v2079
    %v2260 = vpack.c.b16 %v2086, %v2080
    %v2261 = vpack.c.b16 %v2087, %v2081
    %v2262 = vpack.c.b16 %v2094, %v2088
    %v2263 = vpack.c.b16 %v2095, %v2089
    %v2264 = vpack.c.b16 %v2096, %v2090
    %v2265 = vpack.c.b16 %v2097, %v2091
    %v2266 = vpack.c.b16 %v2098, %v2092
    %v2267 = vpack.c.b16 %v2099, %v2093
    %v2268 = vpack.c.b16 %v2106, %v2100
    %v2269 = vpack.c.b16 %v2107, %v2101
    %v2270 = vpack.c.b16 %v2108, %v2102
    %v2271 = vpack.c.b16 %v2109, %v2103
    %v2272 = vpack.c.b16 %v2110, %v2104
    %v2273 = vpack.c.b16 %v2111, %v2105
    %v2274 = vpack.c.b16 %v2118, %v2112
    %v2275 = vpack.c.b16 %v2119, %v2113
    %v2276 = vpack.c.b16 %v2120, %v2114
    %v2277 = vpack.c.b16 %v2121, %v2115
    %v2278 = vpack.c.b16 %v2122, %v2116
    %v2279 = vpack.c.b16 %v2123, %v2117
    %v2280 = vpack.c.b16 %v2130, %v2124
    %v2281 = vpack.c.b16 %v2131, %v2125
    %v2282 = vpack.c.b16 %v2132, %v2126
    %v2283 = vpack.c.b16 %v2133, %v2127
    %v2284 = vpack.c.b16 %v2134, %v2128
    %v2285 = vpack.c.b16 %v2135, %v2129
    %v2286 = vpack.c.b16 %v2142, %v2136
    %v2287 = vpack.c.b16 %v2143, %v2137
    %v2288 = vpack.c.b16 %v2144, %v2138
    %v2289 = vpack.c.b16 %v2145, %v2139
    %v2290 = vpack.c.b16 %v2146, %v2140
    %v2291 = vpack.c.b16 %v2147, %v2141
    %v2292 = vpack.c.b16 %v2154, %v2148
    %v2293 = vpack.c.b16 %v2155, %v2149
    %v2294 = vpack.c.b16 %v2156, %v2150
    %v2295 = vpack.c.b16 %v2157, %v2151
    %v2296 = vpack.c.b16 %v2158, %v2152
    %v2297 = vpack.c.b16 %v2159, %v2153
    %v2298 = vpack.c.b16 %v2166, %v2160
    %v2299 = vpack.c.b16 %v2167, %v2161
    %v2300 = vpack.c.b16 %v2168, %v2162
    %v2301 = vpack.c.b16 %v2169, %v2163
    %v2302 = vpack.c.b16 %v2170, %v2164
    %v2303 = vpack.c.b16 %v2171, %v2165
    %v2304 = vpack.c.b16 %v2178, %v2172
    %v2305 = vpack.c.b16 %v2179, %v2173
    %v2306 = vpack.c.b16 %v2180, %v2174
    %v2307 = vpack.c.b16 %v2181, %v2175
    %v2308 = vpack.c.b16 %v2182, %v2176
    %v2309 = vpack.c.b16 %v2183, %v2177
    %v2310 = vpack.c.b16 %v2190, %v2184
    %v2311 = vpack.c.b16 %v2191, %v2185
    %v2312 = vpack.c.b16 %v2192, %v2186
    %v2313 = vpack.c.b16 %v2193, %v2187
    %v2314 = vpack.c.b16 %v2194, %v2188
    %v2315 = vpack.c.b16 %v2195, %v2189
    %v2316 = vpack.c.b16 %v2202, %v2196
    %v2317 = vpack.c.b16 %v2203, %v2197
    %v2318 = vpack.c.b16 %v2204, %v2198
    %v2319 = vpack.c.b16 %v2205, %v2199
    %v2320 = vpack.c.b16 %v2206, %v2200
    %v2321 = vpack.c.b16 %v2207, %v2201
    %v2322 = vpack.c.b16 %v2214, %v2208
    %v2323 = vpack.c.b16 %v2215, %v2209
    %v2324 = vpack.c.b16 %v2216, %v2210
    %v2325 = vpack.c.b16 %v2217, %v2211
    %v2326 = vpack.c.b16 %v2218, %v2212
    %v2327 = vpack.c.b16 %v2219, %v2213
    %v2328 = vpack.c.b16 %v2226, %v2220
    %v2329 = vpack.c.b16 %v2227, %v2221
    %v2330 = vpack.c.b16 %v2228, %v2222
    %v2331 = vpack.c.b16 %v2229, %v2223
    %v2332 = vpack.c.b16 %v2230, %v2224
    %v2333 = vpack.c.b16 %v2231, %v2225
    %v2334 = vpack.c.b16 %v2238, %v2232
    %v2335 = vpack.c.b16 %v2239, %v2233
    %v2336 = vpack.c.b16 %v2240, %v2234
    %v2337 = vpack.c.b16 %v2241, %v2235
    %v2338 = vpack.c.b16 %v2242, %v2236
    %v2339 = vpack.c.b16 %v2243, %v2237
    %2436 = vmatprep.subr.bf16.mxu0 %v2245
    %2437 = vmatpush1.bf16.msra.mxu0 %v2244
    %2438 = vmatprep.subr.bf16.mxu0 %v2251
    %2439 = vmatpush1.bf16.msra.mxu0 %v2250
    %2440 = vmatprep.subr.bf16.mxu0 %v2257
    %2441 = vmatpush1.bf16.msra.mxu0 %v2256
    %2442 = vmatprep.subr.bf16.mxu0 %v2263
    %2443 = vmatpush1.bf16.msra.mxu0 %v2262
    %2444 = vmatprep.subr.bf16.mxu0 %v2269
    %2445 = vmatpush1.bf16.msra.mxu0 %v2268
    %2446 = vmatprep.subr.bf16.mxu0 %v2275
    %2447 = vmatpush1.bf16.msra.mxu0 %v2274
    %2448 = vmatprep.subr.bf16.mxu0 %v2281
    %2449 = vmatpush1.bf16.msra.mxu0 %v2280
    %2450 = vmatprep.subr.bf16.mxu0 %v2287
    %2451 = vmatpush1.bf16.msra.mxu0 %v2286
    %2452 = vmatprep.subr.bf16.mxu0 %v2293
    %2453 = vmatpush1.bf16.msra.mxu0 %v2292
    %2454 = vmatprep.subr.bf16.mxu0 %v2299
    %2455 = vmatpush1.bf16.msra.mxu0 %v2298
    %2456 = vmatprep.subr.bf16.mxu0 %v2305
    %2457 = vmatpush1.bf16.msra.mxu0 %v2304
    %2458 = vmatprep.subr.bf16.mxu0 %v2311
    %2459 = vmatpush1.bf16.msra.mxu0 %v2310
    %2460 = vmatprep.subr.bf16.mxu0 %v2317
    %2461 = vmatpush1.bf16.msra.mxu0 %v2316
    %2462 = vmatprep.subr.bf16.mxu0 %v2323
    %2463 = vmatpush1.bf16.msra.mxu0 %v2322
    %2464 = vmatprep.subr.bf16.mxu0 %v2329
    %2465 = vmatpush1.bf16.msra.mxu0 %v2328
    %2466 = vmatprep.subr.bf16.mxu0 %v2335
    %2467 = vmatpush1.bf16.msra.mxu0 %v2334
    %2468 = vmatprep.mubr.bf16.mxu0 %v1859
    %2469 = vmatmul.mubr.bf16.gmra.mrb[0].mxu0 %v1858
    %v2470 = vpop.f32.mrb[0].mxu0
    %v2471 = vadd.f32 0.0, %v2470
    %v2472 = vpop.f32.mrb[0].mxu0
    %v2473 = vadd.f32 0.0, %v2472
    %v2474 = vpop.f32.mrb[0].mxu0
    %v2475 = vpop.f32.mrb[0].mxu0
    %2476 = vdwg.mxu0
    %2477 = vmatprep.subr.bf16.mxu0 %v2247
    %2478 = vmatpush1.bf16.msra.mxu0 %v2246
    %2479 = vmatprep.subr.bf16.mxu0 %v2253
    %2480 = vmatpush1.bf16.msra.mxu0 %v2252
    %2481 = vmatprep.subr.bf16.mxu0 %v2259
    %2482 = vmatpush1.bf16.msra.mxu0 %v2258
    %2483 = vmatprep.subr.bf16.mxu0 %v2265
    %2484 = vmatpush1.bf16.msra.mxu0 %v2264
    %2485 = vmatprep.subr.bf16.mxu0 %v2271
    %2486 = vmatpush1.bf16.msra.mxu0 %v2270
    %2487 = vmatprep.subr.bf16.mxu0 %v2277
    %2488 = vmatpush1.bf16.msra.mxu0 %v2276
    %2489 = vmatprep.subr.bf16.mxu0 %v2283
    %2490 = vmatpush1.bf16.msra.mxu0 %v2282
    %2491 = vmatprep.subr.bf16.mxu0 %v2289
    %2492 = vmatpush1.bf16.msra.mxu0 %v2288
    %2493 = vmatprep.subr.bf16.mxu0 %v2295
    %2494 = vmatpush1.bf16.msra.mxu0 %v2294
    %2495 = vmatprep.subr.bf16.mxu0 %v2301
    %2496 = vmatpush1.bf16.msra.mxu0 %v2300
    %2497 = vmatprep.subr.bf16.mxu0 %v2307
    %2498 = vmatpush1.bf16.msra.mxu0 %v2306
    %2499 = vmatprep.subr.bf16.mxu0 %v2313
    %2500 = vmatpush1.bf16.msra.mxu0 %v2312
    %2501 = vmatprep.subr.bf16.mxu0 %v2319
    %2502 = vmatpush1.bf16.msra.mxu0 %v2318
    %2503 = vmatprep.subr.bf16.mxu0 %v2325
    %2504 = vmatpush1.bf16.msra.mxu0 %v2324
    %2505 = vmatprep.subr.bf16.mxu0 %v2331
    %2506 = vmatpush1.bf16.msra.mxu0 %v2330
    %2507 = vmatprep.subr.bf16.mxu0 %v2337
    %2508 = vmatpush1.bf16.msra.mxu0 %v2336
    %2509 = vmatprep.mubr.bf16.mxu0 %v1859
    %2510 = vmatmul.mubr.bf16.gmra.mrb[0].mxu0 %v1858
    %v2511 = vpop.f32.mrb[0].mxu0
    %v2512 = vadd.f32 0.0, %v2511
    %v2513 = vpop.f32.mrb[0].mxu0
    %v2514 = vadd.f32 0.0, %v2513
    %v2515 = vpop.f32.mrb[0].mxu0
    %v2516 = vpop.f32.mrb[0].mxu0
    %2517 = vdwg.mxu0
    %2518 = vmatprep.subr.bf16.mxu0 %v2249
    %2519 = vmatpush1.bf16.msra.mxu0 %v2248
    %2520 = vmatprep.subr.bf16.mxu0 %v2255
    %2521 = vmatpush1.bf16.msra.mxu0 %v2254
    %2522 = vmatprep.subr.bf16.mxu0 %v2261
    %2523 = vmatpush1.bf16.msra.mxu0 %v2260
    %2524 = vmatprep.subr.bf16.mxu0 %v2267
    %2525 = vmatpush1.bf16.msra.mxu0 %v2266
    %2526 = vmatprep.subr.bf16.mxu0 %v2273
    %2527 = vmatpush1.bf16.msra.mxu0 %v2272
    %2528 = vmatprep.subr.bf16.mxu0 %v2279
    %2529 = vmatpush1.bf16.msra.mxu0 %v2278
    %2530 = vmatprep.subr.bf16.mxu0 %v2285
    %2531 = vmatpush1.bf16.msra.mxu0 %v2284
    %2532 = vmatprep.subr.bf16.mxu0 %v2291
    %2533 = vmatpush1.bf16.msra.mxu0 %v2290
    %2534 = vmatprep.subr.bf16.mxu0 %v2297
    %2535 = vmatpush1.bf16.msra.mxu0 %v2296
    %2536 = vmatprep.subr.bf16.mxu0 %v2303
    %2537 = vmatpush1.bf16.msra.mxu0 %v2302
    %2538 = vmatprep.subr.bf16.mxu0 %v2309
    %2539 = vmatpush1.bf16.msra.mxu0 %v2308
    %2540 = vmatprep.subr.bf16.mxu0 %v2315
    %2541 = vmatpush1.bf16.msra.mxu0 %v2314
    %2542 = vmatprep.subr.bf16.mxu0 %v2321
    %2543 = vmatpush1.bf16.msra.mxu0 %v2320
    %2544 = vmatprep.subr.bf16.mxu0 %v2327
    %2545 = vmatpush1.bf16.msra.mxu0 %v2326
    %2546 = vmatprep.subr.bf16.mxu0 %v2333
    %2547 = vmatpush1.bf16.msra.mxu0 %v2332
    %2548 = vmatprep.subr.bf16.mxu0 %v2339
    %2549 = vmatpush1.bf16.msra.mxu0 %v2338
    %2550 = vmatprep.mubr.bf16.mxu0 %v1859
    %2551 = vmatmul.mubr.bf16.gmra.mrb[0].mxu0 %v1858
    %v2552 = vpop.f32.mrb[0].mxu0
    %v2553 = vadd.f32 0.0, %v2552
    %v2554 = vpop.f32.mrb[0].mxu0
    %v2555 = vadd.f32 0.0, %v2554
    %v2556 = vpop.f32.mrb[0].mxu0
    %v2557 = vpop.f32.mrb[0].mxu0
    %2558 = vdwg.mxu0
    %v2563 = vcombine.low %v2471, %v2473
    %v2564 = vcombine.low %v2512, %v2514
    %v2566 = vunpack.c.l.s4 1966171168
    %v2567 = vunpack.c.0.s8 %v2566
    %v2568 = vlaneseq
    %v2569 = vshrl.u32 %v2568, 7
    %v2570 = vsub.s32 %v2567, %v2569
    %v2571 = vrot.slane %v2563, %v2570
    %v2573 = vunpack.c.l.s4 1966171168
    %v2574 = vunpack.c.0.s8 %v2573
    %v2575 = vlaneseq
    %v2576 = vshrl.u32 %v2575, 7
    %v2577 = vsub.s32 %v2574, %v2576
    %v2578 = vrot.slane %v2564, %v2577
    %v2579 = vcombine.low %v2571, %v2578
    %v2581 = vunpack.c.l.s4 1966171168
    %v2582 = vunpack.c.0.s8 %v2581
    %v2583 = vlaneseq
    %v2584 = vshrl.u32 %v2583, 7
    %v2585 = vsub.s32 %v2582, %v2584
    %v2586 = vrot.slane %v2579, %v2585
    %v2588 = vadd.f32 %v1846, %v2586
    %v2589 = vxor.u32 %v2588, 2147483648
    %v2590 = vmul.f32 %v2589, 1.442695
    %v2591 = vpow.pop %v2590
    %v2592 = vadd.f32 %v2591, 1.0
    %v2593 = vrcp.pop %v2592
    %v2594 = vmul.f32 1.0, %v2593
    %v2595 = vadd.f32 %v2553, %v1011
    %v2596 = vadd.f32 %v2555, %v1015
    %v2599 = vcombine.low %v2595, %v2596
    %v2601 = vunpack.c.l.s4 1966171168
    %v2602 = vunpack.c.0.s8 %v2601
    %v2603 = vlaneseq
    %v2604 = vshrl.u32 %v2603, 7
    %v2605 = vsub.s32 %v2602, %v2604
    %v2606 = vrot.slane %v2599, %v2605
    %v2608 = vunpack.c.l.s4 1966171168
    %v2609 = vunpack.c.0.s8 %v2608
    %v2610 = vlaneseq
    %v2611 = vshrl.u32 %v2610, 7
    %v2612 = vsub.s32 %v2609, %v2611
    %v2613 = vrot.slane %v2606, %v2612
    %v2615 = vmul.f32 %v2594, %v2613
    %v2617 = vrot.slane %v1846, 4
    %v2619 = vadd.f32 %v2617, %v2615
    %v2620 = vtanh.pop %v2619
    %v2621 = vsub.f32 %v1839, %v2620
    %v2623 = vrot.slane %v2594, 2
    %v2625 = vmul.f32 %v2623, %v2621
    %v2626 = vadd.f32 %v2620, %v2625
    %s2627 = scalar_lea.vmem %s7, 2
    %2628 = vst.msk [vmem:[%s2627] ss:$8 sm:$0x3] %vm1053, %v2626
    %2629 = vst.msk [vmem:[%s2627] ss:$8 sm:$0x0] %vm1053, %v2626
    %s2630 = scalar_lea.vmem [#allocation2], 3
    %v2631 = vld [vmem:[%s2630] ss:$8 sm:$0xf]
    %v2632 = vld [vmem:[%s2630] ss:$8 sm:$0x30]
    %v2633 = vor.u32 %v2631, %v2632
    %v2635 = vlaneseq
    %v2636 = vshrl.u32 %v2635, 7
    %v2637 = vsub.s32 0, %v2636
    %v2638 = vrot.slane %v2626, %v2637
    %v2639 = vlaneseq
    %v2640 = vshrl.u32 %v2639, 7
    %v2641 = vsub.s32 1, %v2640
    %v2642 = vrot.slane %v2626, %v2641
    %v2645 = vpack.c.bf16 %v2638, %v2638
    %v2646 = vpack.c.bf16 %v2642, %v2642
    %v2647 = vld [vmem:[%s3] sm:$0xff]
    %v2648 = vld [vmem:[%s3 + $0x8] sm:$0xff]
    %v2649 = vld [vmem:[%s3 + $0x10] sm:$0xff]
    %v2650 = vld [vmem:[%s3 + $0x18] sm:$0xff]
    %v2651 = vld [vmem:[%s3 + $0x20] sm:$0xff]
    %v2652 = vld [vmem:[%s3 + $0x28] sm:$0xff]
    %v2653 = vld [vmem:[%s3 + $0x30] sm:$0xff]
    %v2654 = vld [vmem:[%s3 + $0x38] sm:$0xff]
    %v2655 = vld [vmem:[%s3 + $0x40] sm:$0xff]
    %v2656 = vld [vmem:[%s3 + $0x48] sm:$0xff]
    %v2657 = vld [vmem:[%s3 + $0x50] sm:$0xff]
    %v2658 = vld [vmem:[%s3 + $0x58] sm:$0xff]
    %v2659 = vld [vmem:[%s3 + $0x60] sm:$0xff]
    %v2660 = vld [vmem:[%s3 + $0x68] sm:$0xff]
    %v2661 = vld [vmem:[%s3 + $0x70] sm:$0xff]
    %v2662 = vld [vmem:[%s3 + $0x78] sm:$0xff]
    %v2663 = vld [vmem:[%s3 + $0x80] sm:$0xff]
    %v2664 = vld [vmem:[%s3 + $0x88] sm:$0xff]
    %v2665 = vld [vmem:[%s3 + $0x90] sm:$0xff]
    %v2666 = vld [vmem:[%s3 + $0x98] sm:$0xff]
    %v2667 = vld [vmem:[%s3 + $0xa0] sm:$0xff]
    %v2668 = vld [vmem:[%s3 + $0xa8] sm:$0xff]
    %v2669 = vld [vmem:[%s3 + $0xb0] sm:$0xff]
    %v2670 = vld [vmem:[%s3 + $0xb8] sm:$0xff]
    %v2671 = vld [vmem:[%s3 + $0xc0] sm:$0xff]
    %v2672 = vld [vmem:[%s3 + $0xc8] sm:$0xff]
    %v2673 = vld [vmem:[%s3 + $0xd0] sm:$0xff]
    %v2674 = vld [vmem:[%s3 + $0xd8] sm:$0xff]
    %v2675 = vld [vmem:[%s3 + $0xe0] sm:$0xff]
    %v2676 = vld [vmem:[%s3 + $0xe8] sm:$0xff]
    %v2677 = vld [vmem:[%s3 + $0xf0] sm:$0xff]
    %v2678 = vld [vmem:[%s3 + $0xf8] sm:$0xff]
    %v2679 = vld [vmem:[%s3 + $0x100] sm:$0xff]
    %v2680 = vld [vmem:[%s3 + $0x108] sm:$0xff]
    %v2681 = vld [vmem:[%s3 + $0x110] sm:$0xff]
    %v2682 = vld [vmem:[%s3 + $0x118] sm:$0xff]
    %v2683 = vld [vmem:[%s3 + $0x120] sm:$0xff]
    %v2684 = vld [vmem:[%s3 + $0x128] sm:$0xff]
    %v2685 = vld [vmem:[%s3 + $0x130] sm:$0xff]
    %v2686 = vld [vmem:[%s3 + $0x138] sm:$0xff]
    %v2687 = vld [vmem:[%s3 + $0x140] sm:$0xff]
    %v2688 = vld [vmem:[%s3 + $0x148] sm:$0xff]
    %v2689 = vld [vmem:[%s3 + $0x150] sm:$0xff]
    %v2690 = vld [vmem:[%s3 + $0x158] sm:$0xff]
    %v2691 = vld [vmem:[%s3 + $0x160] sm:$0xff]
    %v2692 = vld [vmem:[%s3 + $0x168] sm:$0xff]
    %v2693 = vld [vmem:[%s3 + $0x170] sm:$0xff]
    %v2694 = vld [vmem:[%s3 + $0x178] sm:$0xff]
    %v2695 = vld [vmem:[%s3 + $0x180] sm:$0xff]
    %v2696 = vld [vmem:[%s3 + $0x188] sm:$0xff]
    %v2697 = vld [vmem:[%s3 + $0x190] sm:$0xff]
    %v2698 = vld [vmem:[%s3 + $0x198] sm:$0xff]
    %v2699 = vld [vmem:[%s3 + $0x1a0] sm:$0xff]
    %v2700 = vld [vmem:[%s3 + $0x1a8] sm:$0xff]
    %v2701 = vld [vmem:[%s3 + $0x1b0] sm:$0xff]
    %v2702 = vld [vmem:[%s3 + $0x1b8] sm:$0xff]
    %v2703 = vld [vmem:[%s3 + $0x1c0] sm:$0xff]
    %v2704 = vld [vmem:[%s3 + $0x1c8] sm:$0xff]
    %v2705 = vld [vmem:[%s3 + $0x1d0] sm:$0xff]
    %v2706 = vld [vmem:[%s3 + $0x1d8] sm:$0xff]
    %v2707 = vld [vmem:[%s3 + $0x1e0] sm:$0xff]
    %v2708 = vld [vmem:[%s3 + $0x1e8] sm:$0xff]
    %v2709 = vld [vmem:[%s3 + $0x1f0] sm:$0xff]
    %v2710 = vld [vmem:[%s3 + $0x1f8] sm:$0xff]
    %v2711 = vld [vmem:[%s3 + $0x200] sm:$0xff]
    %v2712 = vld [vmem:[%s3 + $0x208] sm:$0xff]
    %v2713 = vld [vmem:[%s3 + $0x210] sm:$0xff]
    %v2714 = vld [vmem:[%s3 + $0x218] sm:$0xff]
    %v2715 = vld [vmem:[%s3 + $0x220] sm:$0xff]
    %v2716 = vld [vmem:[%s3 + $0x228] sm:$0xff]
    %v2717 = vld [vmem:[%s3 + $0x230] sm:$0xff]
    %v2718 = vld [vmem:[%s3 + $0x238] sm:$0xff]
    %v2719 = vld [vmem:[%s3 + $0x240] sm:$0xff]
    %v2720 = vld [vmem:[%s3 + $0x248] sm:$0xff]
    %v2721 = vld [vmem:[%s3 + $0x250] sm:$0xff]
    %v2722 = vld [vmem:[%s3 + $0x258] sm:$0xff]
    %v2723 = vld [vmem:[%s3 + $0x260] sm:$0xff]
    %v2724 = vld [vmem:[%s3 + $0x268] sm:$0xff]
    %v2725 = vld [vmem:[%s3 + $0x270] sm:$0xff]
    %v2726 = vld [vmem:[%s3 + $0x278] sm:$0xff]
    %v2727 = vld [vmem:[%s3 + $0x280] sm:$0xff]
    %v2728 = vld [vmem:[%s3 + $0x288] sm:$0xff]
    %v2729 = vld [vmem:[%s3 + $0x290] sm:$0xff]
    %v2730 = vld [vmem:[%s3 + $0x298] sm:$0xff]
    %v2731 = vld [vmem:[%s3 + $0x2a0] sm:$0xff]
    %v2732 = vld [vmem:[%s3 + $0x2a8] sm:$0xff]
    %v2733 = vld [vmem:[%s3 + $0x2b0] sm:$0xff]
    %v2734 = vld [vmem:[%s3 + $0x2b8] sm:$0xff]
    %v2735 = vld [vmem:[%s3 + $0x2c0] sm:$0xff]
    %v2736 = vld [vmem:[%s3 + $0x2c8] sm:$0xff]
    %v2737 = vld [vmem:[%s3 + $0x2d0] sm:$0xff]
    %v2738 = vld [vmem:[%s3 + $0x2d8] sm:$0xff]
    %v2739 = vld [vmem:[%s3 + $0x2e0] sm:$0xff]
    %v2740 = vld [vmem:[%s3 + $0x2e8] sm:$0xff]
    %v2741 = vld [vmem:[%s3 + $0x2f0] sm:$0xff]
    %v2742 = vld [vmem:[%s3 + $0x2f8] sm:$0xff]
    %v2839 = vunpack.c.l.b16 %v2647
    %v2840 = vunpack.c.h.b16 %v2647
    %v2841 = vunpack.c.l.b16 %v2648
    %v2842 = vunpack.c.h.b16 %v2648
    %v2843 = vunpack.c.l.b16 %v2649
    %v2844 = vunpack.c.h.b16 %v2649
    %v2845 = vunpack.c.l.b16 %v2650
    %v2846 = vunpack.c.h.b16 %v2650
    %v2847 = vunpack.c.l.b16 %v2651
    %v2848 = vunpack.c.h.b16 %v2651
    %v2849 = vunpack.c.l.b16 %v2652
    %v2850 = vunpack.c.h.b16 %v2652
    %v2851 = vunpack.c.l.b16 %v2653
    %v2852 = vunpack.c.h.b16 %v2653
    %v2853 = vunpack.c.l.b16 %v2654
    %v2854 = vunpack.c.h.b16 %v2654
    %v2855 = vunpack.c.l.b16 %v2655
    %v2856 = vunpack.c.h.b16 %v2655
    %v2857 = vunpack.c.l.b16 %v2656
    %v2858 = vunpack.c.h.b16 %v2656
    %v2859 = vunpack.c.l.b16 %v2657
    %v2860 = vunpack.c.h.b16 %v2657
    %v2861 = vunpack.c.l.b16 %v2658
    %v2862 = vunpack.c.h.b16 %v2658
    %v2863 = vunpack.c.l.b16 %v2659
    %v2864 = vunpack.c.h.b16 %v2659
    %v2865 = vunpack.c.l.b16 %v2660
    %v2866 = vunpack.c.h.b16 %v2660
    %v2867 = vunpack.c.l.b16 %v2661
    %v2868 = vunpack.c.h.b16 %v2661
    %v2869 = vunpack.c.l.b16 %v2662
    %v2870 = vunpack.c.h.b16 %v2662
    %v2871 = vunpack.c.l.b16 %v2663
    %v2872 = vunpack.c.h.b16 %v2663
    %v2873 = vunpack.c.l.b16 %v2664
    %v2874 = vunpack.c.h.b16 %v2664
    %v2875 = vunpack.c.l.b16 %v2665
    %v2876 = vunpack.c.h.b16 %v2665
    %v2877 = vunpack.c.l.b16 %v2666
    %v2878 = vunpack.c.h.b16 %v2666
    %v2879 = vunpack.c.l.b16 %v2667
    %v2880 = vunpack.c.h.b16 %v2667
    %v2881 = vunpack.c.l.b16 %v2668
    %v2882 = vunpack.c.h.b16 %v2668
    %v2883 = vunpack.c.l.b16 %v2669
    %v2884 = vunpack.c.h.b16 %v2669
    %v2885 = vunpack.c.l.b16 %v2670
    %v2886 = vunpack.c.h.b16 %v2670
    %v2887 = vunpack.c.l.b16 %v2671
    %v2888 = vunpack.c.h.b16 %v2671
    %v2889 = vunpack.c.l.b16 %v2672
    %v2890 = vunpack.c.h.b16 %v2672
    %v2891 = vunpack.c.l.b16 %v2673
    %v2892 = vunpack.c.h.b16 %v2673
    %v2893 = vunpack.c.l.b16 %v2674
    %v2894 = vunpack.c.h.b16 %v2674
    %v2895 = vunpack.c.l.b16 %v2675
    %v2896 = vunpack.c.h.b16 %v2675
    %v2897 = vunpack.c.l.b16 %v2676
    %v2898 = vunpack.c.h.b16 %v2676
    %v2899 = vunpack.c.l.b16 %v2677
    %v2900 = vunpack.c.h.b16 %v2677
    %v2901 = vunpack.c.l.b16 %v2678
    %v2902 = vunpack.c.h.b16 %v2678
    %v2903 = vunpack.c.l.b16 %v2679
    %v2904 = vunpack.c.h.b16 %v2679
    %v2905 = vunpack.c.l.b16 %v2680
    %v2906 = vunpack.c.h.b16 %v2680
    %v2907 = vunpack.c.l.b16 %v2681
    %v2908 = vunpack.c.h.b16 %v2681
    %v2909 = vunpack.c.l.b16 %v2682
    %v2910 = vunpack.c.h.b16 %v2682
    %v2911 = vunpack.c.l.b16 %v2683
    %v2912 = vunpack.c.h.b16 %v2683
    %v2913 = vunpack.c.l.b16 %v2684
    %v2914 = vunpack.c.h.b16 %v2684
    %v2915 = vunpack.c.l.b16 %v2685
    %v2916 = vunpack.c.h.b16 %v2685
    %v2917 = vunpack.c.l.b16 %v2686
    %v2918 = vunpack.c.h.b16 %v2686
    %v2919 = vunpack.c.l.b16 %v2687
    %v2920 = vunpack.c.h.b16 %v2687
    %v2921 = vunpack.c.l.b16 %v2688
    %v2922 = vunpack.c.h.b16 %v2688
    %v2923 = vunpack.c.l.b16 %v2689
    %v2924 = vunpack.c.h.b16 %v2689
    %v2925 = vunpack.c.l.b16 %v2690
    %v2926 = vunpack.c.h.b16 %v2690
    %v2927 = vunpack.c.l.b16 %v2691
    %v2928 = vunpack.c.h.b16 %v2691
    %v2929 = vunpack.c.l.b16 %v2692
    %v2930 = vunpack.c.h.b16 %v2692
    %v2931 = vunpack.c.l.b16 %v2693
    %v2932 = vunpack.c.h.b16 %v2693
    %v2933 = vunpack.c.l.b16 %v2694
    %v2934 = vunpack.c.h.b16 %v2694
    %v2935 = vunpack.c.l.b16 %v2695
    %v2936 = vunpack.c.h.b16 %v2695
    %v2937 = vunpack.c.l.b16 %v2696
    %v2938 = vunpack.c.h.b16 %v2696
    %v2939 = vunpack.c.l.b16 %v2697
    %v2940 = vunpack.c.h.b16 %v2697
    %v2941 = vunpack.c.l.b16 %v2698
    %v2942 = vunpack.c.h.b16 %v2698
    %v2943 = vunpack.c.l.b16 %v2699
    %v2944 = vunpack.c.h.b16 %v2699
    %v2945 = vunpack.c.l.b16 %v2700
    %v2946 = vunpack.c.h.b16 %v2700
    %v2947 = vunpack.c.l.b16 %v2701
    %v2948 = vunpack.c.h.b16 %v2701
    %v2949 = vunpack.c.l.b16 %v2702
    %v2950 = vunpack.c.h.b16 %v2702
    %v2951 = vunpack.c.l.b16 %v2703
    %v2952 = vunpack.c.h.b16 %v2703
    %v2953 = vunpack.c.l.b16 %v2704
    %v2954 = vunpack.c.h.b16 %v2704
    %v2955 = vunpack.c.l.b16 %v2705
    %v2956 = vunpack.c.h.b16 %v2705
    %v2957 = vunpack.c.l.b16 %v2706
    %v2958 = vunpack.c.h.b16 %v2706
    %v2959 = vunpack.c.l.b16 %v2707
    %v2960 = vunpack.c.h.b16 %v2707
    %v2961 = vunpack.c.l.b16 %v2708
    %v2962 = vunpack.c.h.b16 %v2708
    %v2963 = vunpack.c.l.b16 %v2709
    %v2964 = vunpack.c.h.b16 %v2709
    %v2965 = vunpack.c.l.b16 %v2710
    %v2966 = vunpack.c.h.b16 %v2710
    %v2967 = vunpack.c.l.b16 %v2711
    %v2968 = vunpack.c.h.b16 %v2711
    %v2969 = vunpack.c.l.b16 %v2712
    %v2970 = vunpack.c.h.b16 %v2712
    %v2971 = vunpack.c.l.b16 %v2713
    %v2972 = vunpack.c.h.b16 %v2713
    %v2973 = vunpack.c.l.b16 %v2714
    %v2974 = vunpack.c.h.b16 %v2714
    %v2975 = vunpack.c.l.b16 %v2715
    %v2976 = vunpack.c.h.b16 %v2715
    %v2977 = vunpack.c.l.b16 %v2716
    %v2978 = vunpack.c.h.b16 %v2716
    %v2979 = vunpack.c.l.b16 %v2717
    %v2980 = vunpack.c.h.b16 %v2717
    %v2981 = vunpack.c.l.b16 %v2718
    %v2982 = vunpack.c.h.b16 %v2718
    %v2983 = vunpack.c.l.b16 %v2719
    %v2984 = vunpack.c.h.b16 %v2719
    %v2985 = vunpack.c.l.b16 %v2720
    %v2986 = vunpack.c.h.b16 %v2720
    %v2987 = vunpack.c.l.b16 %v2721
    %v2988 = vunpack.c.h.b16 %v2721
    %v2989 = vunpack.c.l.b16 %v2722
    %v2990 = vunpack.c.h.b16 %v2722
    %v2991 = vunpack.c.l.b16 %v2723
    %v2992 = vunpack.c.h.b16 %v2723
    %v2993 = vunpack.c.l.b16 %v2724
    %v2994 = vunpack.c.h.b16 %v2724
    %v2995 = vunpack.c.l.b16 %v2725
    %v2996 = vunpack.c.h.b16 %v2725
    %v2997 = vunpack.c.l.b16 %v2726
    %v2998 = vunpack.c.h.b16 %v2726
    %v2999 = vunpack.c.l.b16 %v2727
    %v3000 = vunpack.c.h.b16 %v2727
    %v3001 = vunpack.c.l.b16 %v2728
    %v3002 = vunpack.c.h.b16 %v2728
    %v3003 = vunpack.c.l.b16 %v2729
    %v3004 = vunpack.c.h.b16 %v2729
    %v3005 = vunpack.c.l.b16 %v2730
    %v3006 = vunpack.c.h.b16 %v2730
    %v3007 = vunpack.c.l.b16 %v2731
    %v3008 = vunpack.c.h.b16 %v2731
    %v3009 = vunpack.c.l.b16 %v2732
    %v3010 = vunpack.c.h.b16 %v2732
    %v3011 = vunpack.c.l.b16 %v2733
    %v3012 = vunpack.c.h.b16 %v2733
    %v3013 = vunpack.c.l.b16 %v2734
    %v3014 = vunpack.c.h.b16 %v2734
    %v3015 = vunpack.c.l.b16 %v2735
    %v3016 = vunpack.c.h.b16 %v2735
    %v3017 = vunpack.c.l.b16 %v2736
    %v3018 = vunpack.c.h.b16 %v2736
    %v3019 = vunpack.c.l.b16 %v2737
    %v3020 = vunpack.c.h.b16 %v2737
    %v3021 = vunpack.c.l.b16 %v2738
    %v3022 = vunpack.c.h.b16 %v2738
    %v3023 = vunpack.c.l.b16 %v2739
    %v3024 = vunpack.c.h.b16 %v2739
    %v3025 = vunpack.c.l.b16 %v2740
    %v3026 = vunpack.c.h.b16 %v2740
    %v3027 = vunpack.c.l.b16 %v2741
    %v3028 = vunpack.c.h.b16 %v2741
    %v3029 = vunpack.c.l.b16 %v2742
    %v3030 = vunpack.c.h.b16 %v2742
    %v3031 = vpack.c.b16 %v2845, %v2839
    %v3032 = vpack.c.b16 %v2846, %v2840
    %v3033 = vpack.c.b16 %v2847, %v2841
    %v3034 = vpack.c.b16 %v2848, %v2842
    %v3035 = vpack.c.b16 %v2849, %v2843
    %v3036 = vpack.c.b16 %v2850, %v2844
    %v3037 = vpack.c.b16 %v2857, %v2851
    %v3038 = vpack.c.b16 %v2858, %v2852
    %v3039 = vpack.c.b16 %v2859, %v2853
    %v3040 = vpack.c.b16 %v2860, %v2854
    %v3041 = vpack.c.b16 %v2861, %v2855
    %v3042 = vpack.c.b16 %v2862, %v2856
    %v3043 = vpack.c.b16 %v2869, %v2863
    %v3044 = vpack.c.b16 %v2870, %v2864
    %v3045 = vpack.c.b16 %v2871, %v2865
    %v3046 = vpack.c.b16 %v2872, %v2866
    %v3047 = vpack.c.b16 %v2873, %v2867
    %v3048 = vpack.c.b16 %v2874, %v2868
    %v3049 = vpack.c.b16 %v2881, %v2875
    %v3050 = vpack.c.b16 %v2882, %v2876
    %v3051 = vpack.c.b16 %v2883, %v2877
    %v3052 = vpack.c.b16 %v2884, %v2878
    %v3053 = vpack.c.b16 %v2885, %v2879
    %v3054 = vpack.c.b16 %v2886, %v2880
    %v3055 = vpack.c.b16 %v2893, %v2887
    %v3056 = vpack.c.b16 %v2894, %v2888
    %v3057 = vpack.c.b16 %v2895, %v2889
    %v3058 = vpack.c.b16 %v2896, %v2890
    %v3059 = vpack.c.b16 %v2897, %v2891
    %v3060 = vpack.c.b16 %v2898, %v2892
    %v3061 = vpack.c.b16 %v2905, %v2899
    %v3062 = vpack.c.b16 %v2906, %v2900
    %v3063 = vpack.c.b16 %v2907, %v2901
    %v3064 = vpack.c.b16 %v2908, %v2902
    %v3065 = vpack.c.b16 %v2909, %v2903
    %v3066 = vpack.c.b16 %v2910, %v2904
    %v3067 = vpack.c.b16 %v2917, %v2911
    %v3068 = vpack.c.b16 %v2918, %v2912
    %v3069 = vpack.c.b16 %v2919, %v2913
    %v3070 = vpack.c.b16 %v2920, %v2914
    %v3071 = vpack.c.b16 %v2921, %v2915
    %v3072 = vpack.c.b16 %v2922, %v2916
    %v3073 = vpack.c.b16 %v2929, %v2923
    %v3074 = vpack.c.b16 %v2930, %v2924
    %v3075 = vpack.c.b16 %v2931, %v2925
    %v3076 = vpack.c.b16 %v2932, %v2926
    %v3077 = vpack.c.b16 %v2933, %v2927
    %v3078 = vpack.c.b16 %v2934, %v2928
    %v3079 = vpack.c.b16 %v2941, %v2935
    %v3080 = vpack.c.b16 %v2942, %v2936
    %v3081 = vpack.c.b16 %v2943, %v2937
    %v3082 = vpack.c.b16 %v2944, %v2938
    %v3083 = vpack.c.b16 %v2945, %v2939
    %v3084 = vpack.c.b16 %v2946, %v2940
    %v3085 = vpack.c.b16 %v2953, %v2947
    %v3086 = vpack.c.b16 %v2954, %v2948
    %v3087 = vpack.c.b16 %v2955, %v2949
    %v3088 = vpack.c.b16 %v2956, %v2950
    %v3089 = vpack.c.b16 %v2957, %v2951
    %v3090 = vpack.c.b16 %v2958, %v2952
    %v3091 = vpack.c.b16 %v2965, %v2959
    %v3092 = vpack.c.b16 %v2966, %v2960
    %v3093 = vpack.c.b16 %v2967, %v2961
    %v3094 = vpack.c.b16 %v2968, %v2962
    %v3095 = vpack.c.b16 %v2969, %v2963
    %v3096 = vpack.c.b16 %v2970, %v2964
    %v3097 = vpack.c.b16 %v2977, %v2971
    %v3098 = vpack.c.b16 %v2978, %v2972
    %v3099 = vpack.c.b16 %v2979, %v2973
    %v3100 = vpack.c.b16 %v2980, %v2974
    %v3101 = vpack.c.b16 %v2981, %v2975
    %v3102 = vpack.c.b16 %v2982, %v2976
    %v3103 = vpack.c.b16 %v2989, %v2983
    %v3104 = vpack.c.b16 %v2990, %v2984
    %v3105 = vpack.c.b16 %v2991, %v2985
    %v3106 = vpack.c.b16 %v2992, %v2986
    %v3107 = vpack.c.b16 %v2993, %v2987
    %v3108 = vpack.c.b16 %v2994, %v2988
    %v3109 = vpack.c.b16 %v3001, %v2995
    %v3110 = vpack.c.b16 %v3002, %v2996
    %v3111 = vpack.c.b16 %v3003, %v2997
    %v3112 = vpack.c.b16 %v3004, %v2998
    %v3113 = vpack.c.b16 %v3005, %v2999
    %v3114 = vpack.c.b16 %v3006, %v3000
    %v3115 = vpack.c.b16 %v3013, %v3007
    %v3116 = vpack.c.b16 %v3014, %v3008
    %v3117 = vpack.c.b16 %v3015, %v3009
    %v3118 = vpack.c.b16 %v3016, %v3010
    %v3119 = vpack.c.b16 %v3017, %v3011
    %v3120 = vpack.c.b16 %v3018, %v3012
    %v3121 = vpack.c.b16 %v3025, %v3019
    %v3122 = vpack.c.b16 %v3026, %v3020
    %v3123 = vpack.c.b16 %v3027, %v3021
    %v3124 = vpack.c.b16 %v3028, %v3022
    %v3125 = vpack.c.b16 %v3029, %v3023
    %v3126 = vpack.c.b16 %v3030, %v3024
    %3223 = vmatprep.subr.bf16.mxu0 %v3032
    %3224 = vmatpush1.bf16.msra.mxu0 %v3031
    %3225 = vmatprep.subr.bf16.mxu0 %v3038
    %3226 = vmatpush1.bf16.msra.mxu0 %v3037
    %3227 = vmatprep.subr.bf16.mxu0 %v3044
    %3228 = vmatpush1.bf16.msra.mxu0 %v3043
    %3229 = vmatprep.subr.bf16.mxu0 %v3050
    %3230 = vmatpush1.bf16.msra.mxu0 %v3049
    %3231 = vmatprep.subr.bf16.mxu0 %v3056
    %3232 = vmatpush1.bf16.msra.mxu0 %v3055
    %3233 = vmatprep.subr.bf16.mxu0 %v3062
    %3234 = vmatpush1.bf16.msra.mxu0 %v3061
    %3235 = vmatprep.subr.bf16.mxu0 %v3068
    %3236 = vmatpush1.bf16.msra.mxu0 %v3067
    %3237 = vmatprep.subr.bf16.mxu0 %v3074
    %3238 = vmatpush1.bf16.msra.mxu0 %v3073
    %3239 = vmatprep.subr.bf16.mxu0 %v3080
    %3240 = vmatpush1.bf16.msra.mxu0 %v3079
    %3241 = vmatprep.subr.bf16.mxu0 %v3086
    %3242 = vmatpush1.bf16.msra.mxu0 %v3085
    %3243 = vmatprep.subr.bf16.mxu0 %v3092
    %3244 = vmatpush1.bf16.msra.mxu0 %v3091
    %3245 = vmatprep.subr.bf16.mxu0 %v3098
    %3246 = vmatpush1.bf16.msra.mxu0 %v3097
    %3247 = vmatprep.subr.bf16.mxu0 %v3104
    %3248 = vmatpush1.bf16.msra.mxu0 %v3103
    %3249 = vmatprep.subr.bf16.mxu0 %v3110
    %3250 = vmatpush1.bf16.msra.mxu0 %v3109
    %3251 = vmatprep.subr.bf16.mxu0 %v3116
    %3252 = vmatpush1.bf16.msra.mxu0 %v3115
    %3253 = vmatprep.subr.bf16.mxu0 %v3122
    %3254 = vmatpush1.bf16.msra.mxu0 %v3121
    %3255 = vmatprep.mubr.bf16.mxu0 %v2646
    %3256 = vmatmul.mubr.bf16.gmra.mrb[0].mxu0 %v2645
    %v3257 = vpop.f32.mrb[0].mxu0
    %v3258 = vadd.f32 0.0, %v3257
    %v3259 = vpop.f32.mrb[0].mxu0
    %v3260 = vadd.f32 0.0, %v3259
    %v3261 = vpop.f32.mrb[0].mxu0
    %v3262 = vpop.f32.mrb[0].mxu0
    %3263 = vdwg.mxu0
    %3264 = vmatprep.subr.bf16.mxu0 %v3034
    %3265 = vmatpush1.bf16.msra.mxu0 %v3033
    %3266 = vmatprep.subr.bf16.mxu0 %v3040
    %3267 = vmatpush1.bf16.msra.mxu0 %v3039
    %3268 = vmatprep.subr.bf16.mxu0 %v3046
    %3269 = vmatpush1.bf16.msra.mxu0 %v3045
    %3270 = vmatprep.subr.bf16.mxu0 %v3052
    %3271 = vmatpush1.bf16.msra.mxu0 %v3051
    %3272 = vmatprep.subr.bf16.mxu0 %v3058
    %3273 = vmatpush1.bf16.msra.mxu0 %v3057
    %3274 = vmatprep.subr.bf16.mxu0 %v3064
    %3275 = vmatpush1.bf16.msra.mxu0 %v3063
    %3276 = vmatprep.subr.bf16.mxu0 %v3070
    %3277 = vmatpush1.bf16.msra.mxu0 %v3069
    %3278 = vmatprep.subr.bf16.mxu0 %v3076
    %3279 = vmatpush1.bf16.msra.mxu0 %v3075
    %3280 = vmatprep.subr.bf16.mxu0 %v3082
    %3281 = vmatpush1.bf16.msra.mxu0 %v3081
    %3282 = vmatprep.subr.bf16.mxu0 %v3088
    %3283 = vmatpush1.bf16.msra.mxu0 %v3087
    %3284 = vmatprep.subr.bf16.mxu0 %v3094
    %3285 = vmatpush1.bf16.msra.mxu0 %v3093
    %3286 = vmatprep.subr.bf16.mxu0 %v3100
    %3287 = vmatpush1.bf16.msra.mxu0 %v3099
    %3288 = vmatprep.subr.bf16.mxu0 %v3106
    %3289 = vmatpush1.bf16.msra.mxu0 %v3105
    %3290 = vmatprep.subr.bf16.mxu0 %v3112
    %3291 = vmatpush1.bf16.msra.mxu0 %v3111
    %3292 = vmatprep.subr.bf16.mxu0 %v3118
    %3293 = vmatpush1.bf16.msra.mxu0 %v3117
    %3294 = vmatprep.subr.bf16.mxu0 %v3124
    %3295 = vmatpush1.bf16.msra.mxu0 %v3123
    %3296 = vmatprep.mubr.bf16.mxu0 %v2646
    %3297 = vmatmul.mubr.bf16.gmra.mrb[0].mxu0 %v2645
    %v3298 = vpop.f32.mrb[0].mxu0
    %v3299 = vadd.f32 0.0, %v3298
    %v3300 = vpop.f32.mrb[0].mxu0
    %v3301 = vadd.f32 0.0, %v3300
    %v3302 = vpop.f32.mrb[0].mxu0
    %v3303 = vpop.f32.mrb[0].mxu0
    %3304 = vdwg.mxu0
    %3305 = vmatprep.subr.bf16.mxu0 %v3036
    %3306 = vmatpush1.bf16.msra.mxu0 %v3035
    %3307 = vmatprep.subr.bf16.mxu0 %v3042
    %3308 = vmatpush1.bf16.msra.mxu0 %v3041
    %3309 = vmatprep.subr.bf16.mxu0 %v3048
    %3310 = vmatpush1.bf16.msra.mxu0 %v3047
    %3311 = vmatprep.subr.bf16.mxu0 %v3054
    %3312 = vmatpush1.bf16.msra.mxu0 %v3053
    %3313 = vmatprep.subr.bf16.mxu0 %v3060
    %3314 = vmatpush1.bf16.msra.mxu0 %v3059
    %3315 = vmatprep.subr.bf16.mxu0 %v3066
    %3316 = vmatpush1.bf16.msra.mxu0 %v3065
    %3317 = vmatprep.subr.bf16.mxu0 %v3072
    %3318 = vmatpush1.bf16.msra.mxu0 %v3071
    %3319 = vmatprep.subr.bf16.mxu0 %v3078
    %3320 = vmatpush1.bf16.msra.mxu0 %v3077
    %3321 = vmatprep.subr.bf16.mxu0 %v3084
    %3322 = vmatpush1.bf16.msra.mxu0 %v3083
    %3323 = vmatprep.subr.bf16.mxu0 %v3090
    %3324 = vmatpush1.bf16.msra.mxu0 %v3089
    %3325 = vmatprep.subr.bf16.mxu0 %v3096
    %3326 = vmatpush1.bf16.msra.mxu0 %v3095
    %3327 = vmatprep.subr.bf16.mxu0 %v3102
    %3328 = vmatpush1.bf16.msra.mxu0 %v3101
    %3329 = vmatprep.subr.bf16.mxu0 %v3108
    %3330 = vmatpush1.bf16.msra.mxu0 %v3107
    %3331 = vmatprep.subr.bf16.mxu0 %v3114
    %3332 = vmatpush1.bf16.msra.mxu0 %v3113
    %3333 = vmatprep.subr.bf16.mxu0 %v3120
    %3334 = vmatpush1.bf16.msra.mxu0 %v3119
    %3335 = vmatprep.subr.bf16.mxu0 %v3126
    %3336 = vmatpush1.bf16.msra.mxu0 %v3125
    %3337 = vmatprep.mubr.bf16.mxu0 %v2646
    %3338 = vmatmul.mubr.bf16.gmra.mrb[0].mxu0 %v2645
    %v3339 = vpop.f32.mrb[0].mxu0
    %v3340 = vadd.f32 0.0, %v3339
    %v3341 = vpop.f32.mrb[0].mxu0
    %v3342 = vadd.f32 0.0, %v3341
    %v3343 = vpop.f32.mrb[0].mxu0
    %v3344 = vpop.f32.mrb[0].mxu0
    %3345 = vdwg.mxu0
    %v3350 = vcombine.low %v3258, %v3260
    %v3351 = vcombine.low %v3299, %v3301
    %v3353 = vunpack.c.l.s4 1966171168
    %v3354 = vunpack.c.0.s8 %v3353
    %v3355 = vlaneseq
    %v3356 = vshrl.u32 %v3355, 7
    %v3357 = vsub.s32 %v3354, %v3356
    %v3358 = vrot.slane %v3350, %v3357
    %v3360 = vunpack.c.l.s4 1966171168
    %v3361 = vunpack.c.0.s8 %v3360
    %v3362 = vlaneseq
    %v3363 = vshrl.u32 %v3362, 7
    %v3364 = vsub.s32 %v3361, %v3363
    %v3365 = vrot.slane %v3351, %v3364
    %v3366 = vcombine.low %v3358, %v3365
    %v3368 = vunpack.c.l.s4 1966171168
    %v3369 = vunpack.c.0.s8 %v3368
    %v3370 = vlaneseq
    %v3371 = vshrl.u32 %v3370, 7
    %v3372 = vsub.s32 %v3369, %v3371
    %v3373 = vrot.slane %v3366, %v3372
    %v3375 = vadd.f32 %v2633, %v3373
    %v3376 = vxor.u32 %v3375, 2147483648
    %v3377 = vmul.f32 %v3376, 1.442695
    %v3378 = vpow.pop %v3377
    %v3379 = vadd.f32 %v3378, 1.0
    %v3380 = vrcp.pop %v3379
    %v3381 = vmul.f32 1.0, %v3380
    %v3382 = vadd.f32 %v3340, %v1011
    %v3383 = vadd.f32 %v3342, %v1015
    %v3386 = vcombine.low %v3382, %v3383
    %v3388 = vunpack.c.l.s4 1966171168
    %v3389 = vunpack.c.0.s8 %v3388
    %v3390 = vlaneseq
    %v3391 = vshrl.u32 %v3390, 7
    %v3392 = vsub.s32 %v3389, %v3391
    %v3393 = vrot.slane %v3386, %v3392
    %v3395 = vunpack.c.l.s4 1966171168
    %v3396 = vunpack.c.0.s8 %v3395
    %v3397 = vlaneseq
    %v3398 = vshrl.u32 %v3397, 7
    %v3399 = vsub.s32 %v3396, %v3398
    %v3400 = vrot.slane %v3393, %v3399
    %v3402 = vmul.f32 %v3381, %v3400
    %v3404 = vrot.slane %v2633, 4
    %v3406 = vadd.f32 %v3404, %v3402
    %v3407 = vtanh.pop %v3406
    %v3408 = vsub.f32 %v2626, %v3407
    %v3410 = vrot.slane %v3381, 2
    %v3412 = vmul.f32 %v3410, %v3408
    %v3413 = vadd.f32 %v3407, %v3412
    %s3414 = scalar_lea.vmem %s7, 3
    %3415 = vst.msk [vmem:[%s3414] ss:$8 sm:$0x3] %vm1053, %v3413
    %3416 = vst.msk [vmem:[%s3414] ss:$8 sm:$0x0] %vm1053, %v3413
    %s3417 = scalar_lea.vmem [#allocation2], 4
    %v3418 = vld [vmem:[%s3417] ss:$8 sm:$0xf]
    %v3419 = vld [vmem:[%s3417] ss:$8 sm:$0x30]
    %v3420 = vor.u32 %v3418, %v3419
    %v3422 = vlaneseq
    %v3423 = vshrl.u32 %v3422, 7
    %v3424 = vsub.s32 0, %v3423
    %v3425 = vrot.slane %v3413, %v3424
    %v3426 = vlaneseq
    %v3427 = vshrl.u32 %v3426, 7
    %v3428 = vsub.s32 1, %v3427
    %v3429 = vrot.slane %v3413, %v3428
    %v3432 = vpack.c.bf16 %v3425, %v3425
    %v3433 = vpack.c.bf16 %v3429, %v3429
    %v3434 = vld [vmem:[%s3] sm:$0xff]
    %v3435 = vld [vmem:[%s3 + $0x8] sm:$0xff]
    %v3436 = vld [vmem:[%s3 + $0x10] sm:$0xff]
    %v3437 = vld [vmem:[%s3 + $0x18] sm:$0xff]
    %v3438 = vld [vmem:[%s3 + $0x20] sm:$0xff]
    %v3439 = vld [vmem:[%s3 + $0x28] sm:$0xff]
    %v3440 = vld [vmem:[%s3 + $0x30] sm:$0xff]
    %v3441 = vld [vmem:[%s3 + $0x38] sm:$0xff]
    %v3442 = vld [vmem:[%s3 + $0x40] sm:$0xff]
    %v3443 = vld [vmem:[%s3 + $0x48] sm:$0xff]
    %v3444 = vld [vmem:[%s3 + $0x50] sm:$0xff]
    %v3445 = vld [vmem:[%s3 + $0x58] sm:$0xff]
    %v3446 = vld [vmem:[%s3 + $0x60] sm:$0xff]
    %v3447 = vld [vmem:[%s3 + $0x68] sm:$0xff]
    %v3448 = vld [vmem:[%s3 + $0x70] sm:$0xff]
    %v3449 = vld [vmem:[%s3 + $0x78] sm:$0xff]
    %v3450 = vld [vmem:[%s3 + $0x80] sm:$0xff]
    %v3451 = vld [vmem:[%s3 + $0x88] sm:$0xff]
    %v3452 = vld [vmem:[%s3 + $0x90] sm:$0xff]
    %v3453 = vld [vmem:[%s3 + $0x98] sm:$0xff]
    %v3454 = vld [vmem:[%s3 + $0xa0] sm:$0xff]
    %v3455 = vld [vmem:[%s3 + $0xa8] sm:$0xff]
    %v3456 = vld [vmem:[%s3 + $0xb0] sm:$0xff]
    %v3457 = vld [vmem:[%s3 + $0xb8] sm:$0xff]
    %v3458 = vld [vmem:[%s3 + $0xc0] sm:$0xff]
    %v3459 = vld [vmem:[%s3 + $0xc8] sm:$0xff]
    %v3460 = vld [vmem:[%s3 + $0xd0] sm:$0xff]
    %v3461 = vld [vmem:[%s3 + $0xd8] sm:$0xff]
    %v3462 = vld [vmem:[%s3 + $0xe0] sm:$0xff]
    %v3463 = vld [vmem:[%s3 + $0xe8] sm:$0xff]
    %v3464 = vld [vmem:[%s3 + $0xf0] sm:$0xff]
    %v3465 = vld [vmem:[%s3 + $0xf8] sm:$0xff]
    %v3466 = vld [vmem:[%s3 + $0x100] sm:$0xff]
    %v3467 = vld [vmem:[%s3 + $0x108] sm:$0xff]
    %v3468 = vld [vmem:[%s3 + $0x110] sm:$0xff]
    %v3469 = vld [vmem:[%s3 + $0x118] sm:$0xff]
    %v3470 = vld [vmem:[%s3 + $0x120] sm:$0xff]
    %v3471 = vld [vmem:[%s3 + $0x128] sm:$0xff]
    %v3472 = vld [vmem:[%s3 + $0x130] sm:$0xff]
    %v3473 = vld [vmem:[%s3 + $0x138] sm:$0xff]
    %v3474 = vld [vmem:[%s3 + $0x140] sm:$0xff]
    %v3475 = vld [vmem:[%s3 + $0x148] sm:$0xff]
    %v3476 = vld [vmem:[%s3 + $0x150] sm:$0xff]
    %v3477 = vld [vmem:[%s3 + $0x158] sm:$0xff]
    %v3478 = vld [vmem:[%s3 + $0x160] sm:$0xff]
    %v3479 = vld [vmem:[%s3 + $0x168] sm:$0xff]
    %v3480 = vld [vmem:[%s3 + $0x170] sm:$0xff]
    %v3481 = vld [vmem:[%s3 + $0x178] sm:$0xff]
    %v3482 = vld [vmem:[%s3 + $0x180] sm:$0xff]
    %v3483 = vld [vmem:[%s3 + $0x188] sm:$0xff]
    %v3484 = vld [vmem:[%s3 + $0x190] sm:$0xff]
    %v3485 = vld [vmem:[%s3 + $0x198] sm:$0xff]
    %v3486 = vld [vmem:[%s3 + $0x1a0] sm:$0xff]
    %v3487 = vld [vmem:[%s3 + $0x1a8] sm:$0xff]
    %v3488 = vld [vmem:[%s3 + $0x1b0] sm:$0xff]
    %v3489 = vld [vmem:[%s3 + $0x1b8] sm:$0xff]
    %v3490 = vld [vmem:[%s3 + $0x1c0] sm:$0xff]
    %v3491 = vld [vmem:[%s3 + $0x1c8] sm:$0xff]
    %v3492 = vld [vmem:[%s3 + $0x1d0] sm:$0xff]
    %v3493 = vld [vmem:[%s3 + $0x1d8] sm:$0xff]
    %v3494 = vld [vmem:[%s3 + $0x1e0] sm:$0xff]
    %v3495 = vld [vmem:[%s3 + $0x1e8] sm:$0xff]
    %v3496 = vld [vmem:[%s3 + $0x1f0] sm:$0xff]
    %v3497 = vld [vmem:[%s3 + $0x1f8] sm:$0xff]
    %v3498 = vld [vmem:[%s3 + $0x200] sm:$0xff]
    %v3499 = vld [vmem:[%s3 + $0x208] sm:$0xff]
    %v3500 = vld [vmem:[%s3 + $0x210] sm:$0xff]
    %v3501 = vld [vmem:[%s3 + $0x218] sm:$0xff]
    %v3502 = vld [vmem:[%s3 + $0x220] sm:$0xff]
    %v3503 = vld [vmem:[%s3 + $0x228] sm:$0xff]
    %v3504 = vld [vmem:[%s3 + $0x230] sm:$0xff]
    %v3505 = vld [vmem:[%s3 + $0x238] sm:$0xff]
    %v3506 = vld [vmem:[%s3 + $0x240] sm:$0xff]
    %v3507 = vld [vmem:[%s3 + $0x248] sm:$0xff]
    %v3508 = vld [vmem:[%s3 + $0x250] sm:$0xff]
    %v3509 = vld [vmem:[%s3 + $0x258] sm:$0xff]
    %v3510 = vld [vmem:[%s3 + $0x260] sm:$0xff]
    %v3511 = vld [vmem:[%s3 + $0x268] sm:$0xff]
    %v3512 = vld [vmem:[%s3 + $0x270] sm:$0xff]
    %v3513 = vld [vmem:[%s3 + $0x278] sm:$0xff]
    %v3514 = vld [vmem:[%s3 + $0x280] sm:$0xff]
    %v3515 = vld [vmem:[%s3 + $0x288] sm:$0xff]
    %v3516 = vld [vmem:[%s3 + $0x290] sm:$0xff]
    %v3517 = vld [vmem:[%s3 + $0x298] sm:$0xff]
    %v3518 = vld [vmem:[%s3 + $0x2a0] sm:$0xff]
    %v3519 = vld [vmem:[%s3 + $0x2a8] sm:$0xff]
    %v3520 = vld [vmem:[%s3 + $0x2b0] sm:$0xff]
    %v3521 = vld [vmem:[%s3 + $0x2b8] sm:$0xff]
    %v3522 = vld [vmem:[%s3 + $0x2c0] sm:$0xff]
    %v3523 = vld [vmem:[%s3 + $0x2c8] sm:$0xff]
    %v3524 = vld [vmem:[%s3 + $0x2d0] sm:$0xff]
    %v3525 = vld [vmem:[%s3 + $0x2d8] sm:$0xff]
    %v3526 = vld [vmem:[%s3 + $0x2e0] sm:$0xff]
    %v3527 = vld [vmem:[%s3 + $0x2e8] sm:$0xff]
    %v3528 = vld [vmem:[%s3 + $0x2f0] sm:$0xff]
    %v3529 = vld [vmem:[%s3 + $0x2f8] sm:$0xff]
    %v3626 = vunpack.c.l.b16 %v3434
    %v3627 = vunpack.c.h.b16 %v3434
    %v3628 = vunpack.c.l.b16 %v3435
    %v3629 = vunpack.c.h.b16 %v3435
    %v3630 = vunpack.c.l.b16 %v3436
    %v3631 = vunpack.c.h.b16 %v3436
    %v3632 = vunpack.c.l.b16 %v3437
    %v3633 = vunpack.c.h.b16 %v3437
    %v3634 = vunpack.c.l.b16 %v3438
    %v3635 = vunpack.c.h.b16 %v3438
    %v3636 = vunpack.c.l.b16 %v3439
    %v3637 = vunpack.c.h.b16 %v3439
    %v3638 = vunpack.c.l.b16 %v3440
    %v3639 = vunpack.c.h.b16 %v3440
    %v3640 = vunpack.c.l.b16 %v3441
    %v3641 = vunpack.c.h.b16 %v3441
    %v3642 = vunpack.c.l.b16 %v3442
    %v3643 = vunpack.c.h.b16 %v3442
    %v3644 = vunpack.c.l.b16 %v3443
    %v3645 = vunpack.c.h.b16 %v3443
    %v3646 = vunpack.c.l.b16 %v3444
    %v3647 = vunpack.c.h.b16 %v3444
    %v3648 = vunpack.c.l.b16 %v3445
    %v3649 = vunpack.c.h.b16 %v3445
    %v3650 = vunpack.c.l.b16 %v3446
    %v3651 = vunpack.c.h.b16 %v3446
    %v3652 = vunpack.c.l.b16 %v3447
    %v3653 = vunpack.c.h.b16 %v3447
    %v3654 = vunpack.c.l.b16 %v3448
    %v3655 = vunpack.c.h.b16 %v3448
    %v3656 = vunpack.c.l.b16 %v3449
    %v3657 = vunpack.c.h.b16 %v3449
    %v3658 = vunpack.c.l.b16 %v3450
    %v3659 = vunpack.c.h.b16 %v3450
    %v3660 = vunpack.c.l.b16 %v3451
    %v3661 = vunpack.c.h.b16 %v3451
    %v3662 = vunpack.c.l.b16 %v3452
    %v3663 = vunpack.c.h.b16 %v3452
    %v3664 = vunpack.c.l.b16 %v3453
    %v3665 = vunpack.c.h.b16 %v3453
    %v3666 = vunpack.c.l.b16 %v3454
    %v3667 = vunpack.c.h.b16 %v3454
    %v3668 = vunpack.c.l.b16 %v3455
    %v3669 = vunpack.c.h.b16 %v3455
    %v3670 = vunpack.c.l.b16 %v3456
    %v3671 = vunpack.c.h.b16 %v3456
    %v3672 = vunpack.c.l.b16 %v3457
    %v3673 = vunpack.c.h.b16 %v3457
    %v3674 = vunpack.c.l.b16 %v3458
    %v3675 = vunpack.c.h.b16 %v3458
    %v3676 = vunpack.c.l.b16 %v3459
    %v3677 = vunpack.c.h.b16 %v3459
    %v3678 = vunpack.c.l.b16 %v3460
    %v3679 = vunpack.c.h.b16 %v3460
    %v3680 = vunpack.c.l.b16 %v3461
    %v3681 = vunpack.c.h.b16 %v3461
    %v3682 = vunpack.c.l.b16 %v3462
    %v3683 = vunpack.c.h.b16 %v3462
    %v3684 = vunpack.c.l.b16 %v3463
    %v3685 = vunpack.c.h.b16 %v3463
    %v3686 = vunpack.c.l.b16 %v3464
    %v3687 = vunpack.c.h.b16 %v3464
    %v3688 = vunpack.c.l.b16 %v3465
    %v3689 = vunpack.c.h.b16 %v3465
    %v3690 = vunpack.c.l.b16 %v3466
    %v3691 = vunpack.c.h.b16 %v3466
    %v3692 = vunpack.c.l.b16 %v3467
    %v3693 = vunpack.c.h.b16 %v3467
    %v3694 = vunpack.c.l.b16 %v3468
    %v3695 = vunpack.c.h.b16 %v3468
    %v3696 = vunpack.c.l.b16 %v3469
    %v3697 = vunpack.c.h.b16 %v3469
    %v3698 = vunpack.c.l.b16 %v3470
    %v3699 = vunpack.c.h.b16 %v3470
    %v3700 = vunpack.c.l.b16 %v3471
    %v3701 = vunpack.c.h.b16 %v3471
    %v3702 = vunpack.c.l.b16 %v3472
    %v3703 = vunpack.c.h.b16 %v3472
    %v3704 = vunpack.c.l.b16 %v3473
    %v3705 = vunpack.c.h.b16 %v3473
    %v3706 = vunpack.c.l.b16 %v3474
    %v3707 = vunpack.c.h.b16 %v3474
    %v3708 = vunpack.c.l.b16 %v3475
    %v3709 = vunpack.c.h.b16 %v3475
    %v3710 = vunpack.c.l.b16 %v3476
    %v3711 = vunpack.c.h.b16 %v3476
    %v3712 = vunpack.c.l.b16 %v3477
    %v3713 = vunpack.c.h.b16 %v3477
    %v3714 = vunpack.c.l.b16 %v3478
    %v3715 = vunpack.c.h.b16 %v3478
    %v3716 = vunpack.c.l.b16 %v3479
    %v3717 = vunpack.c.h.b16 %v3479
    %v3718 = vunpack.c.l.b16 %v3480
    %v3719 = vunpack.c.h.b16 %v3480
    %v3720 = vunpack.c.l.b16 %v3481
    %v3721 = vunpack.c.h.b16 %v3481
    %v3722 = vunpack.c.l.b16 %v3482
    %v3723 = vunpack.c.h.b16 %v3482
    %v3724 = vunpack.c.l.b16 %v3483
    %v3725 = vunpack.c.h.b16 %v3483
    %v3726 = vunpack.c.l.b16 %v3484
    %v3727 = vunpack.c.h.b16 %v3484
    %v3728 = vunpack.c.l.b16 %v3485
    %v3729 = vunpack.c.h.b16 %v3485
    %v3730 = vunpack.c.l.b16 %v3486
    %v3731 = vunpack.c.h.b16 %v3486
    %v3732 = vunpack.c.l.b16 %v3487
    %v3733 = vunpack.c.h.b16 %v3487
    %v3734 = vunpack.c.l.b16 %v3488
    %v3735 = vunpack.c.h.b16 %v3488
    %v3736 = vunpack.c.l.b16 %v3489
    %v3737 = vunpack.c.h.b16 %v3489
    %v3738 = vunpack.c.l.b16 %v3490
    %v3739 = vunpack.c.h.b16 %v3490
    %v3740 = vunpack.c.l.b16 %v3491
    %v3741 = vunpack.c.h.b16 %v3491
    %v3742 = vunpack.c.l.b16 %v3492
    %v3743 = vunpack.c.h.b16 %v3492
    %v3744 = vunpack.c.l.b16 %v3493
    %v3745 = vunpack.c.h.b16 %v3493
    %v3746 = vunpack.c.l.b16 %v3494
    %v3747 = vunpack.c.h.b16 %v3494
    %v3748 = vunpack.c.l.b16 %v3495
    %v3749 = vunpack.c.h.b16 %v3495
    %v3750 = vunpack.c.l.b16 %v3496
    %v3751 = vunpack.c.h.b16 %v3496
    %v3752 = vunpack.c.l.b16 %v3497
    %v3753 = vunpack.c.h.b16 %v3497
    %v3754 = vunpack.c.l.b16 %v3498
    %v3755 = vunpack.c.h.b16 %v3498
    %v3756 = vunpack.c.l.b16 %v3499
    %v3757 = vunpack.c.h.b16 %v3499
    %v3758 = vunpack.c.l.b16 %v3500
    %v3759 = vunpack.c.h.b16 %v3500
    %v3760 = vunpack.c.l.b16 %v3501
    %v3761 = vunpack.c.h.b16 %v3501
    %v3762 = vunpack.c.l.b16 %v3502
    %v3763 = vunpack.c.h.b16 %v3502
    %v3764 = vunpack.c.l.b16 %v3503
    %v3765 = vunpack.c.h.b16 %v3503
    %v3766 = vunpack.c.l.b16 %v3504
    %v3767 = vunpack.c.h.b16 %v3504
    %v3768 = vunpack.c.l.b16 %v3505
    %v3769 = vunpack.c.h.b16 %v3505
    %v3770 = vunpack.c.l.b16 %v3506
    %v3771 = vunpack.c.h.b16 %v3506
    %v3772 = vunpack.c.l.b16 %v3507
    %v3773 = vunpack.c.h.b16 %v3507
    %v3774 = vunpack.c.l.b16 %v3508
    %v3775 = vunpack.c.h.b16 %v3508
    %v3776 = vunpack.c.l.b16 %v3509
    %v3777 = vunpack.c.h.b16 %v3509
    %v3778 = vunpack.c.l.b16 %v3510
    %v3779 = vunpack.c.h.b16 %v3510
    %v3780 = vunpack.c.l.b16 %v3511
    %v3781 = vunpack.c.h.b16 %v3511
    %v3782 = vunpack.c.l.b16 %v3512
    %v3783 = vunpack.c.h.b16 %v3512
    %v3784 = vunpack.c.l.b16 %v3513
    %v3785 = vunpack.c.h.b16 %v3513
    %v3786 = vunpack.c.l.b16 %v3514
    %v3787 = vunpack.c.h.b16 %v3514
    %v3788 = vunpack.c.l.b16 %v3515
    %v3789 = vunpack.c.h.b16 %v3515
    %v3790 = vunpack.c.l.b16 %v3516
    %v3791 = vunpack.c.h.b16 %v3516
    %v3792 = vunpack.c.l.b16 %v3517
    %v3793 = vunpack.c.h.b16 %v3517
    %v3794 = vunpack.c.l.b16 %v3518
    %v3795 = vunpack.c.h.b16 %v3518
    %v3796 = vunpack.c.l.b16 %v3519
    %v3797 = vunpack.c.h.b16 %v3519
    %v3798 = vunpack.c.l.b16 %v3520
    %v3799 = vunpack.c.h.b16 %v3520
    %v3800 = vunpack.c.l.b16 %v3521
    %v3801 = vunpack.c.h.b16 %v3521
    %v3802 = vunpack.c.l.b16 %v3522
    %v3803 = vunpack.c.h.b16 %v3522
    %v3804 = vunpack.c.l.b16 %v3523
    %v3805 = vunpack.c.h.b16 %v3523
    %v3806 = vunpack.c.l.b16 %v3524
    %v3807 = vunpack.c.h.b16 %v3524
    %v3808 = vunpack.c.l.b16 %v3525
    %v3809 = vunpack.c.h.b16 %v3525
    %v3810 = vunpack.c.l.b16 %v3526
    %v3811 = vunpack.c.h.b16 %v3526
    %v3812 = vunpack.c.l.b16 %v3527
    %v3813 = vunpack.c.h.b16 %v3527
    %v3814 = vunpack.c.l.b16 %v3528
    %v3815 = vunpack.c.h.b16 %v3528
    %v3816 = vunpack.c.l.b16 %v3529
    %v3817 = vunpack.c.h.b16 %v3529
    %v3818 = vpack.c.b16 %v3632, %v3626
    %v3819 = vpack.c.b16 %v3633, %v3627
    %v3820 = vpack.c.b16 %v3634, %v3628
    %v3821 = vpack.c.b16 %v3635, %v3629
    %v3822 = vpack.c.b16 %v3636, %v3630
    %v3823 = vpack.c.b16 %v3637, %v3631
    %v3824 = vpack.c.b16 %v3644, %v3638
    %v3825 = vpack.c.b16 %v3645, %v3639
    %v3826 = vpack.c.b16 %v3646, %v3640
    %v3827 = vpack.c.b16 %v3647, %v3641
    %v3828 = vpack.c.b16 %v3648, %v3642
    %v3829 = vpack.c.b16 %v3649, %v3643
    %v3830 = vpack.c.b16 %v3656, %v3650
    %v3831 = vpack.c.b16 %v3657, %v3651
    %v3832 = vpack.c.b16 %v3658, %v3652
    %v3833 = vpack.c.b16 %v3659, %v3653
    %v3834 = vpack.c.b16 %v3660, %v3654
    %v3835 = vpack.c.b16 %v3661, %v3655
    %v3836 = vpack.c.b16 %v3668, %v3662
    %v3837 = vpack.c.b16 %v3669, %v3663
    %v3838 = vpack.c.b16 %v3670, %v3664
    %v3839 = vpack.c.b16 %v3671, %v3665
    %v3840 = vpack.c.b16 %v3672, %v3666
    %v3841 = vpack.c.b16 %v3673, %v3667
    %v3842 = vpack.c.b16 %v3680, %v3674
    %v3843 = vpack.c.b16 %v3681, %v3675
    %v3844 = vpack.c.b16 %v3682, %v3676
    %v3845 = vpack.c.b16 %v3683, %v3677
    %v3846 = vpack.c.b16 %v3684, %v3678
    %v3847 = vpack.c.b16 %v3685, %v3679
    %v3848 = vpack.c.b16 %v3692, %v3686
    %v3849 = vpack.c.b16 %v3693, %v3687
    %v3850 = vpack.c.b16 %v3694, %v3688
    %v3851 = vpack.c.b16 %v3695, %v3689
    %v3852 = vpack.c.b16 %v3696, %v3690
    %v3853 = vpack.c.b16 %v3697, %v3691
    %v3854 = vpack.c.b16 %v3704, %v3698
    %v3855 = vpack.c.b16 %v3705, %v3699
    %v3856 = vpack.c.b16 %v3706, %v3700
    %v3857 = vpack.c.b16 %v3707, %v3701
    %v3858 = vpack.c.b16 %v3708, %v3702
    %v3859 = vpack.c.b16 %v3709, %v3703
    %v3860 = vpack.c.b16 %v3716, %v3710
    %v3861 = vpack.c.b16 %v3717, %v3711
    %v3862 = vpack.c.b16 %v3718, %v3712
    %v3863 = vpack.c.b16 %v3719, %v3713
    %v3864 = vpack.c.b16 %v3720, %v3714
    %v3865 = vpack.c.b16 %v3721, %v3715
    %v3866 = vpack.c.b16 %v3728, %v3722
    %v3867 = vpack.c.b16 %v3729, %v3723
    %v3868 = vpack.c.b16 %v3730, %v3724
    %v3869 = vpack.c.b16 %v3731, %v3725
    %v3870 = vpack.c.b16 %v3732, %v3726
    %v3871 = vpack.c.b16 %v3733, %v3727
    %v3872 = vpack.c.b16 %v3740, %v3734
    %v3873 = vpack.c.b16 %v3741, %v3735
    %v3874 = vpack.c.b16 %v3742, %v3736
    %v3875 = vpack.c.b16 %v3743, %v3737
    %v3876 = vpack.c.b16 %v3744, %v3738
    %v3877 = vpack.c.b16 %v3745, %v3739
    %v3878 = vpack.c.b16 %v3752, %v3746
    %v3879 = vpack.c.b16 %v3753, %v3747
    %v3880 = vpack.c.b16 %v3754, %v3748
    %v3881 = vpack.c.b16 %v3755, %v3749
    %v3882 = vpack.c.b16 %v3756, %v3750
    %v3883 = vpack.c.b16 %v3757, %v3751
    %v3884 = vpack.c.b16 %v3764, %v3758
    %v3885 = vpack.c.b16 %v3765, %v3759
    %v3886 = vpack.c.b16 %v3766, %v3760
    %v3887 = vpack.c.b16 %v3767, %v3761
    %v3888 = vpack.c.b16 %v3768, %v3762
    %v3889 = vpack.c.b16 %v3769, %v3763
    %v3890 = vpack.c.b16 %v3776, %v3770
    %v3891 = vpack.c.b16 %v3777, %v3771
    %v3892 = vpack.c.b16 %v3778, %v3772
    %v3893 = vpack.c.b16 %v3779, %v3773
    %v3894 = vpack.c.b16 %v3780, %v3774
    %v3895 = vpack.c.b16 %v3781, %v3775
    %v3896 = vpack.c.b16 %v3788, %v3782
    %v3897 = vpack.c.b16 %v3789, %v3783
    %v3898 = vpack.c.b16 %v3790, %v3784
    %v3899 = vpack.c.b16 %v3791, %v3785
    %v3900 = vpack.c.b16 %v3792, %v3786
    %v3901 = vpack.c.b16 %v3793, %v3787
    %v3902 = vpack.c.b16 %v3800, %v3794
    %v3903 = vpack.c.b16 %v3801, %v3795
    %v3904 = vpack.c.b16 %v3802, %v3796
    %v3905 = vpack.c.b16 %v3803, %v3797
    %v3906 = vpack.c.b16 %v3804, %v3798
    %v3907 = vpack.c.b16 %v3805, %v3799
    %v3908 = vpack.c.b16 %v3812, %v3806
    %v3909 = vpack.c.b16 %v3813, %v3807
    %v3910 = vpack.c.b16 %v3814, %v3808
    %v3911 = vpack.c.b16 %v3815, %v3809
    %v3912 = vpack.c.b16 %v3816, %v3810
    %v3913 = vpack.c.b16 %v3817, %v3811
    %4010 = vmatprep.subr.bf16.mxu0 %v3819
    %4011 = vmatpush1.bf16.msra.mxu0 %v3818
    %4012 = vmatprep.subr.bf16.mxu0 %v3825
    %4013 = vmatpush1.bf16.msra.mxu0 %v3824
    %4014 = vmatprep.subr.bf16.mxu0 %v3831
    %4015 = vmatpush1.bf16.msra.mxu0 %v3830
    %4016 = vmatprep.subr.bf16.mxu0 %v3837
    %4017 = vmatpush1.bf16.msra.mxu0 %v3836
    %4018 = vmatprep.subr.bf16.mxu0 %v3843
    %4019 = vmatpush1.bf16.msra.mxu0 %v3842
    %4020 = vmatprep.subr.bf16.mxu0 %v3849
    %4021 = vmatpush1.bf16.msra.mxu0 %v3848
    %4022 = vmatprep.subr.bf16.mxu0 %v3855
    %4023 = vmatpush1.bf16.msra.mxu0 %v3854
    %4024 = vmatprep.subr.bf16.mxu0 %v3861
    %4025 = vmatpush1.bf16.msra.mxu0 %v3860
    %4026 = vmatprep.subr.bf16.mxu0 %v3867
    %4027 = vmatpush1.bf16.msra.mxu0 %v3866
    %4028 = vmatprep.subr.bf16.mxu0 %v3873
    %4029 = vmatpush1.bf16.msra.mxu0 %v3872
    %4030 = vmatprep.subr.bf16.mxu0 %v3879
    %4031 = vmatpush1.bf16.msra.mxu0 %v3878
    %4032 = vmatprep.subr.bf16.mxu0 %v3885
    %4033 = vmatpush1.bf16.msra.mxu0 %v3884
    %4034 = vmatprep.subr.bf16.mxu0 %v3891
    %4035 = vmatpush1.bf16.msra.mxu0 %v3890
    %4036 = vmatprep.subr.bf16.mxu0 %v3897
    %4037 = vmatpush1.bf16.msra.mxu0 %v3896
    %4038 = vmatprep.subr.bf16.mxu0 %v3903
    %4039 = vmatpush1.bf16.msra.mxu0 %v3902
    %4040 = vmatprep.subr.bf16.mxu0 %v3909
    %4041 = vmatpush1.bf16.msra.mxu0 %v3908
    %4042 = vmatprep.mubr.bf16.mxu0 %v3433
    %4043 = vmatmul.mubr.bf16.gmra.mrb[0].mxu0 %v3432
    %v4044 = vpop.f32.mrb[0].mxu0
    %v4045 = vadd.f32 0.0, %v4044
    %v4046 = vpop.f32.mrb[0].mxu0
    %v4047 = vadd.f32 0.0, %v4046
    %v4048 = vpop.f32.mrb[0].mxu0
    %v4049 = vpop.f32.mrb[0].mxu0
    %4050 = vdwg.mxu0
    %4051 = vmatprep.subr.bf16.mxu0 %v3821
    %4052 = vmatpush1.bf16.msra.mxu0 %v3820
    %4053 = vmatprep.subr.bf16.mxu0 %v3827
    %4054 = vmatpush1.bf16.msra.mxu0 %v3826
    %4055 = vmatprep.subr.bf16.mxu0 %v3833
    %4056 = vmatpush1.bf16.msra.mxu0 %v3832
    %4057 = vmatprep.subr.bf16.mxu0 %v3839
    %4058 = vmatpush1.bf16.msra.mxu0 %v3838
    %4059 = vmatprep.subr.bf16.mxu0 %v3845
    %4060 = vmatpush1.bf16.msra.mxu0 %v3844
    %4061 = vmatprep.subr.bf16.mxu0 %v3851
    %4062 = vmatpush1.bf16.msra.mxu0 %v3850
    %4063 = vmatprep.subr.bf16.mxu0 %v3857
    %4064 = vmatpush1.bf16.msra.mxu0 %v3856
    %4065 = vmatprep.subr.bf16.mxu0 %v3863
    %4066 = vmatpush1.bf16.msra.mxu0 %v3862
    %4067 = vmatprep.subr.bf16.mxu0 %v3869
    %4068 = vmatpush1.bf16.msra.mxu0 %v3868
    %4069 = vmatprep.subr.bf16.mxu0 %v3875
    %4070 = vmatpush1.bf16.msra.mxu0 %v3874
    %4071 = vmatprep.subr.bf16.mxu0 %v3881
    %4072 = vmatpush1.bf16.msra.mxu0 %v3880
    %4073 = vmatprep.subr.bf16.mxu0 %v3887
    %4074 = vmatpush1.bf16.msra.mxu0 %v3886
    %4075 = vmatprep.subr.bf16.mxu0 %v3893
    %4076 = vmatpush1.bf16.msra.mxu0 %v3892
    %4077 = vmatprep.subr.bf16.mxu0 %v3899
    %4078 = vmatpush1.bf16.msra.mxu0 %v3898
    %4079 = vmatprep.subr.bf16.mxu0 %v3905
    %4080 = vmatpush1.bf16.msra.mxu0 %v3904
    %4081 = vmatprep.subr.bf16.mxu0 %v3911
    %4082 = vmatpush1.bf16.msra.mxu0 %v3910
    %4083 = vmatprep.mubr.bf16.mxu0 %v3433
    %4084 = vmatmul.mubr.bf16.gmra.mrb[0].mxu0 %v3432
    %v4085 = vpop.f32.mrb[0].mxu0
    %v4086 = vadd.f32 0.0, %v4085
    %v4087 = vpop.f32.mrb[0].mxu0
    %v4088 = vadd.f32 0.0, %v4087
    %v4089 = vpop.f32.mrb[0].mxu0
    %v4090 = vpop.f32.mrb[0].mxu0
    %4091 = vdwg.mxu0
    %4092 = vmatprep.subr.bf16.mxu0 %v3823
    %4093 = vmatpush1.bf16.msra.mxu0 %v3822
    %4094 = vmatprep.subr.bf16.mxu0 %v3829
    %4095 = vmatpush1.bf16.msra.mxu0 %v3828
    %4096 = vmatprep.subr.bf16.mxu0 %v3835
    %4097 = vmatpush1.bf16.msra.mxu0 %v3834
    %4098 = vmatprep.subr.bf16.mxu0 %v3841
    %4099 = vmatpush1.bf16.msra.mxu0 %v3840
    %4100 = vmatprep.subr.bf16.mxu0 %v3847
    %4101 = vmatpush1.bf16.msra.mxu0 %v3846
    %4102 = vmatprep.subr.bf16.mxu0 %v3853
    %4103 = vmatpush1.bf16.msra.mxu0 %v3852
    %4104 = vmatprep.subr.bf16.mxu0 %v3859
    %4105 = vmatpush1.bf16.msra.mxu0 %v3858
    %4106 = vmatprep.subr.bf16.mxu0 %v3865
    %4107 = vmatpush1.bf16.msra.mxu0 %v3864
    %4108 = vmatprep.subr.bf16.mxu0 %v3871
    %4109 = vmatpush1.bf16.msra.mxu0 %v3870
    %4110 = vmatprep.subr.bf16.mxu0 %v3877
    %4111 = vmatpush1.bf16.msra.mxu0 %v3876
    %4112 = vmatprep.subr.bf16.mxu0 %v3883
    %4113 = vmatpush1.bf16.msra.mxu0 %v3882
    %4114 = vmatprep.subr.bf16.mxu0 %v3889
    %4115 = vmatpush1.bf16.msra.mxu0 %v3888
    %4116 = vmatprep.subr.bf16.mxu0 %v3895
    %4117 = vmatpush1.bf16.msra.mxu0 %v3894
    %4118 = vmatprep.subr.bf16.mxu0 %v3901
    %4119 = vmatpush1.bf16.msra.mxu0 %v3900
    %4120 = vmatprep.subr.bf16.mxu0 %v3907
    %4121 = vmatpush1.bf16.msra.mxu0 %v3906
    %4122 = vmatprep.subr.bf16.mxu0 %v3913
    %4123 = vmatpush1.bf16.msra.mxu0 %v3912
    %4124 = vmatprep.mubr.bf16.mxu0 %v3433
    %4125 = vmatmul.mubr.bf16.gmra.mrb[0].mxu0 %v3432
    %v4126 = vpop.f32.mrb[0].mxu0
    %v4127 = vadd.f32 0.0, %v4126
    %v4128 = vpop.f32.mrb[0].mxu0
    %v4129 = vadd.f32 0.0, %v4128
    %v4130 = vpop.f32.mrb[0].mxu0
    %v4131 = vpop.f32.mrb[0].mxu0
    %4132 = vdwg.mxu0
    %v4137 = vcombine.low %v4045, %v4047
    %v4138 = vcombine.low %v4086, %v4088
    %v4140 = vunpack.c.l.s4 1966171168
    %v4141 = vunpack.c.0.s8 %v4140
    %v4142 = vlaneseq
    %v4143 = vshrl.u32 %v4142, 7
    %v4144 = vsub.s32 %v4141, %v4143
    %v4145 = vrot.slane %v4137, %v4144
    %v4147 = vunpack.c.l.s4 1966171168
    %v4148 = vunpack.c.0.s8 %v4147
    %v4149 = vlaneseq
    %v4150 = vshrl.u32 %v4149, 7
    %v4151 = vsub.s32 %v4148, %v4150
    %v4152 = vrot.slane %v4138, %v4151
    %v4153 = vcombine.low %v4145, %v4152
    %v4155 = vunpack.c.l.s4 1966171168
    %v4156 = vunpack.c.0.s8 %v4155
    %v4157 = vlaneseq
    %v4158 = vshrl.u32 %v4157, 7
    %v4159 = vsub.s32 %v4156, %v4158
    %v4160 = vrot.slane %v4153, %v4159
    %v4162 = vadd.f32 %v3420, %v4160
    %v4163 = vxor.u32 %v4162, 2147483648
    %v4164 = vmul.f32 %v4163, 1.442695
    %v4165 = vpow.pop %v4164
    %v4166 = vadd.f32 %v4165, 1.0
    %v4167 = vrcp.pop %v4166
    %v4168 = vmul.f32 1.0, %v4167
    %v4169 = vadd.f32 %v4127, %v1011
    %v4170 = vadd.f32 %v4129, %v1015
    %v4173 = vcombine.low %v4169, %v4170
    %v4175 = vunpack.c.l.s4 1966171168
    %v4176 = vunpack.c.0.s8 %v4175
    %v4177 = vlaneseq
    %v4178 = vshrl.u32 %v4177, 7
    %v4179 = vsub.s32 %v4176, %v4178
    %v4180 = vrot.slane %v4173, %v4179
    %v4182 = vunpack.c.l.s4 1966171168
    %v4183 = vunpack.c.0.s8 %v4182
    %v4184 = vlaneseq
    %v4185 = vshrl.u32 %v4184, 7
    %v4186 = vsub.s32 %v4183, %v4185
    %v4187 = vrot.slane %v4180, %v4186
    %v4189 = vmul.f32 %v4168, %v4187
    %v4191 = vrot.slane %v3420, 4
    %v4193 = vadd.f32 %v4191, %v4189
    %v4194 = vtanh.pop %v4193
    %v4195 = vsub.f32 %v3413, %v4194
    %v4197 = vrot.slane %v4168, 2
    %v4199 = vmul.f32 %v4197, %v4195
    %v4200 = vadd.f32 %v4194, %v4199
    %s4201 = scalar_lea.vmem %s7, 4
    %4202 = vst.msk [vmem:[%s4201] ss:$8 sm:$0x3] %vm1053, %v4200
    %4203 = vst.msk [vmem:[%s4201] ss:$8 sm:$0x0] %vm1053, %v4200
    %s4204 = scalar_lea.vmem [#allocation2], 5
    %v4205 = vld [vmem:[%s4204] ss:$8 sm:$0xf]
    %v4206 = vld [vmem:[%s4204] ss:$8 sm:$0x30]
    %v4207 = vor.u32 %v4205, %v4206
    %v4209 = vlaneseq
    %v4210 = vshrl.u32 %v4209, 7
    %v4211 = vsub.s32 0, %v4210
    %v4212 = vrot.slane %v4200, %v4211
    %v4213 = vlaneseq
    %v4214 = vshrl.u32 %v4213, 7
    %v4215 = vsub.s32 1, %v4214
    %v4216 = vrot.slane %v4200, %v4215
    %v4219 = vpack.c.bf16 %v4212, %v4212
    %v4220 = vpack.c.bf16 %v4216, %v4216
    %v4221 = vld [vmem:[%s3] sm:$0xff]
    %v4222 = vld [vmem:[%s3 + $0x8] sm:$0xff]
    %v4223 = vld [vmem:[%s3 + $0x10] sm:$0xff]
    %v4224 = vld [vmem:[%s3 + $0x18] sm:$0xff]
    %v4225 = vld [vmem:[%s3 + $0x20] sm:$0xff]
    %v4226 = vld [vmem:[%s3 + $0x28] sm:$0xff]
    %v4227 = vld [vmem:[%s3 + $0x30] sm:$0xff]
    %v4228 = vld [vmem:[%s3 + $0x38] sm:$0xff]
    %v4229 = vld [vmem:[%s3 + $0x40] sm:$0xff]
    %v4230 = vld [vmem:[%s3 + $0x48] sm:$0xff]
    %v4231 = vld [vmem:[%s3 + $0x50] sm:$0xff]
    %v4232 = vld [vmem:[%s3 + $0x58] sm:$0xff]
    %v4233 = vld [vmem:[%s3 + $0x60] sm:$0xff]
    %v4234 = vld [vmem:[%s3 + $0x68] sm:$0xff]
    %v4235 = vld [vmem:[%s3 + $0x70] sm:$0xff]
    %v4236 = vld [vmem:[%s3 + $0x78] sm:$0xff]
    %v4237 = vld [vmem:[%s3 + $0x80] sm:$0xff]
    %v4238 = vld [vmem:[%s3 + $0x88] sm:$0xff]
    %v4239 = vld [vmem:[%s3 + $0x90] sm:$0xff]
    %v4240 = vld [vmem:[%s3 + $0x98] sm:$0xff]
    %v4241 = vld [vmem:[%s3 + $0xa0] sm:$0xff]
    %v4242 = vld [vmem:[%s3 + $0xa8] sm:$0xff]
    %v4243 = vld [vmem:[%s3 + $0xb0] sm:$0xff]
    %v4244 = vld [vmem:[%s3 + $0xb8] sm:$0xff]
    %v4245 = vld [vmem:[%s3 + $0xc0] sm:$0xff]
    %v4246 = vld [vmem:[%s3 + $0xc8] sm:$0xff]
    %v4247 = vld [vmem:[%s3 + $0xd0] sm:$0xff]
    %v4248 = vld [vmem:[%s3 + $0xd8] sm:$0xff]
    %v4249 = vld [vmem:[%s3 + $0xe0] sm:$0xff]
    %v4250 = vld [vmem:[%s3 + $0xe8] sm:$0xff]
    %v4251 = vld [vmem:[%s3 + $0xf0] sm:$0xff]
    %v4252 = vld [vmem:[%s3 + $0xf8] sm:$0xff]
    %v4253 = vld [vmem:[%s3 + $0x100] sm:$0xff]
    %v4254 = vld [vmem:[%s3 + $0x108] sm:$0xff]
    %v4255 = vld [vmem:[%s3 + $0x110] sm:$0xff]
    %v4256 = vld [vmem:[%s3 + $0x118] sm:$0xff]
    %v4257 = vld [vmem:[%s3 + $0x120] sm:$0xff]
    %v4258 = vld [vmem:[%s3 + $0x128] sm:$0xff]
    %v4259 = vld [vmem:[%s3 + $0x130] sm:$0xff]
    %v4260 = vld [vmem:[%s3 + $0x138] sm:$0xff]
    %v4261 = vld [vmem:[%s3 + $0x140] sm:$0xff]
    %v4262 = vld [vmem:[%s3 + $0x148] sm:$0xff]
    %v4263 = vld [vmem:[%s3 + $0x150] sm:$0xff]
    %v4264 = vld [vmem:[%s3 + $0x158] sm:$0xff]
    %v4265 = vld [vmem:[%s3 + $0x160] sm:$0xff]
    %v4266 = vld [vmem:[%s3 + $0x168] sm:$0xff]
    %v4267 = vld [vmem:[%s3 + $0x170] sm:$0xff]
    %v4268 = vld [vmem:[%s3 + $0x178] sm:$0xff]
    %v4269 = vld [vmem:[%s3 + $0x180] sm:$0xff]
    %v4270 = vld [vmem:[%s3 + $0x188] sm:$0xff]
    %v4271 = vld [vmem:[%s3 + $0x190] sm:$0xff]
    %v4272 = vld [vmem:[%s3 + $0x198] sm:$0xff]
    %v4273 = vld [vmem:[%s3 + $0x1a0] sm:$0xff]
    %v4274 = vld [vmem:[%s3 + $0x1a8] sm:$0xff]
    %v4275 = vld [vmem:[%s3 + $0x1b0] sm:$0xff]
    %v4276 = vld [vmem:[%s3 + $0x1b8] sm:$0xff]
    %v4277 = vld [vmem:[%s3 + $0x1c0] sm:$0xff]
    %v4278 = vld [vmem:[%s3 + $0x1c8] sm:$0xff]
    %v4279 = vld [vmem:[%s3 + $0x1d0] sm:$0xff]
    %v4280 = vld [vmem:[%s3 + $0x1d8] sm:$0xff]
    %v4281 = vld [vmem:[%s3 + $0x1e0] sm:$0xff]
    %v4282 = vld [vmem:[%s3 + $0x1e8] sm:$0xff]
    %v4283 = vld [vmem:[%s3 + $0x1f0] sm:$0xff]
    %v4284 = vld [vmem:[%s3 + $0x1f8] sm:$0xff]
    %v4285 = vld [vmem:[%s3 + $0x200] sm:$0xff]
    %v4286 = vld [vmem:[%s3 + $0x208] sm:$0xff]
    %v4287 = vld [vmem:[%s3 + $0x210] sm:$0xff]
    %v4288 = vld [vmem:[%s3 + $0x218] sm:$0xff]
    %v4289 = vld [vmem:[%s3 + $0x220] sm:$0xff]
    %v4290 = vld [vmem:[%s3 + $0x228] sm:$0xff]
    %v4291 = vld [vmem:[%s3 + $0x230] sm:$0xff]
    %v4292 = vld [vmem:[%s3 + $0x238] sm:$0xff]
    %v4293 = vld [vmem:[%s3 + $0x240] sm:$0xff]
    %v4294 = vld [vmem:[%s3 + $0x248] sm:$0xff]
    %v4295 = vld [vmem:[%s3 + $0x250] sm:$0xff]
    %v4296 = vld [vmem:[%s3 + $0x258] sm:$0xff]
    %v4297 = vld [vmem:[%s3 + $0x260] sm:$0xff]
    %v4298 = vld [vmem:[%s3 + $0x268] sm:$0xff]
    %v4299 = vld [vmem:[%s3 + $0x270] sm:$0xff]
    %v4300 = vld [vmem:[%s3 + $0x278] sm:$0xff]
    %v4301 = vld [vmem:[%s3 + $0x280] sm:$0xff]
    %v4302 = vld [vmem:[%s3 + $0x288] sm:$0xff]
    %v4303 = vld [vmem:[%s3 + $0x290] sm:$0xff]
    %v4304 = vld [vmem:[%s3 + $0x298] sm:$0xff]
    %v4305 = vld [vmem:[%s3 + $0x2a0] sm:$0xff]
    %v4306 = vld [vmem:[%s3 + $0x2a8] sm:$0xff]
    %v4307 = vld [vmem:[%s3 + $0x2b0] sm:$0xff]
    %v4308 = vld [vmem:[%s3 + $0x2b8] sm:$0xff]
    %v4309 = vld [vmem:[%s3 + $0x2c0] sm:$0xff]
    %v4310 = vld [vmem:[%s3 + $0x2c8] sm:$0xff]
    %v4311 = vld [vmem:[%s3 + $0x2d0] sm:$0xff]
    %v4312 = vld [vmem:[%s3 + $0x2d8] sm:$0xff]
    %v4313 = vld [vmem:[%s3 + $0x2e0] sm:$0xff]
    %v4314 = vld [vmem:[%s3 + $0x2e8] sm:$0xff]
    %v4315 = vld [vmem:[%s3 + $0x2f0] sm:$0xff]
    %v4316 = vld [vmem:[%s3 + $0x2f8] sm:$0xff]
    %v4413 = vunpack.c.l.b16 %v4221
    %v4414 = vunpack.c.h.b16 %v4221
    %v4415 = vunpack.c.l.b16 %v4222
    %v4416 = vunpack.c.h.b16 %v4222
    %v4417 = vunpack.c.l.b16 %v4223
    %v4418 = vunpack.c.h.b16 %v4223
    %v4419 = vunpack.c.l.b16 %v4224
    %v4420 = vunpack.c.h.b16 %v4224
    %v4421 = vunpack.c.l.b16 %v4225
    %v4422 = vunpack.c.h.b16 %v4225
    %v4423 = vunpack.c.l.b16 %v4226
    %v4424 = vunpack.c.h.b16 %v4226
    %v4425 = vunpack.c.l.b16 %v4227
    %v4426 = vunpack.c.h.b16 %v4227
    %v4427 = vunpack.c.l.b16 %v4228
    %v4428 = vunpack.c.h.b16 %v4228
    %v4429 = vunpack.c.l.b16 %v4229
    %v4430 = vunpack.c.h.b16 %v4229
    %v4431 = vunpack.c.l.b16 %v4230
    %v4432 = vunpack.c.h.b16 %v4230
    %v4433 = vunpack.c.l.b16 %v4231
    %v4434 = vunpack.c.h.b16 %v4231
    %v4435 = vunpack.c.l.b16 %v4232
    %v4436 = vunpack.c.h.b16 %v4232
    %v4437 = vunpack.c.l.b16 %v4233
    %v4438 = vunpack.c.h.b16 %v4233
    %v4439 = vunpack.c.l.b16 %v4234
    %v4440 = vunpack.c.h.b16 %v4234
    %v4441 = vunpack.c.l.b16 %v4235
    %v4442 = vunpack.c.h.b16 %v4235
    %v4443 = vunpack.c.l.b16 %v4236
    %v4444 = vunpack.c.h.b16 %v4236
    %v4445 = vunpack.c.l.b16 %v4237
    %v4446 = vunpack.c.h.b16 %v4237
    %v4447 = vunpack.c.l.b16 %v4238
    %v4448 = vunpack.c.h.b16 %v4238
    %v4449 = vunpack.c.l.b16 %v4239
    %v4450 = vunpack.c.h.b16 %v4239
    %v4451 = vunpack.c.l.b16 %v4240
    %v4452 = vunpack.c.h.b16 %v4240
    %v4453 = vunpack.c.l.b16 %v4241
    %v4454 = vunpack.c.h.b16 %v4241
    %v4455 = vunpack.c.l.b16 %v4242
    %v4456 = vunpack.c.h.b16 %v4242
    %v4457 = vunpack.c.l.b16 %v4243
    %v4458 = vunpack.c.h.b16 %v4243
    %v4459 = vunpack.c.l.b16 %v4244
    %v4460 = vunpack.c.h.b16 %v4244
    %v4461 = vunpack.c.l.b16 %v4245
    %v4462 = vunpack.c.h.b16 %v4245
    %v4463 = vunpack.c.l.b16 %v4246
    %v4464 = vunpack.c.h.b16 %v4246
    %v4465 = vunpack.c.l.b16 %v4247
    %v4466 = vunpack.c.h.b16 %v4247
    %v4467 = vunpack.c.l.b16 %v4248
    %v4468 = vunpack.c.h.b16 %v4248
    %v4469 = vunpack.c.l.b16 %v4249
    %v4470 = vunpack.c.h.b16 %v4249
    %v4471 = vunpack.c.l.b16 %v4250
    %v4472 = vunpack.c.h.b16 %v4250
    %v4473 = vunpack.c.l.b16 %v4251
    %v4474 = vunpack.c.h.b16 %v4251
    %v4475 = vunpack.c.l.b16 %v4252
    %v4476 = vunpack.c.h.b16 %v4252
    %v4477 = vunpack.c.l.b16 %v4253
    %v4478 = vunpack.c.h.b16 %v4253
    %v4479 = vunpack.c.l.b16 %v4254
    %v4480 = vunpack.c.h.b16 %v4254
    %v4481 = vunpack.c.l.b16 %v4255
    %v4482 = vunpack.c.h.b16 %v4255
    %v4483 = vunpack.c.l.b16 %v4256
    %v4484 = vunpack.c.h.b16 %v4256
    %v4485 = vunpack.c.l.b16 %v4257
    %v4486 = vunpack.c.h.b16 %v4257
    %v4487 = vunpack.c.l.b16 %v4258
    %v4488 = vunpack.c.h.b16 %v4258
    %v4489 = vunpack.c.l.b16 %v4259
    %v4490 = vunpack.c.h.b16 %v4259
    %v4491 = vunpack.c.l.b16 %v4260
    %v4492 = vunpack.c.h.b16 %v4260
    %v4493 = vunpack.c.l.b16 %v4261
    %v4494 = vunpack.c.h.b16 %v4261
    %v4495 = vunpack.c.l.b16 %v4262
    %v4496 = vunpack.c.h.b16 %v4262
    %v4497 = vunpack.c.l.b16 %v4263
    %v4498 = vunpack.c.h.b16 %v4263
    %v4499 = vunpack.c.l.b16 %v4264
    %v4500 = vunpack.c.h.b16 %v4264
    %v4501 = vunpack.c.l.b16 %v4265
    %v4502 = vunpack.c.h.b16 %v4265
    %v4503 = vunpack.c.l.b16 %v4266
    %v4504 = vunpack.c.h.b16 %v4266
    %v4505 = vunpack.c.l.b16 %v4267
    %v4506 = vunpack.c.h.b16 %v4267
    %v4507 = vunpack.c.l.b16 %v4268
    %v4508 = vunpack.c.h.b16 %v4268
    %v4509 = vunpack.c.l.b16 %v4269
    %v4510 = vunpack.c.h.b16 %v4269
    %v4511 = vunpack.c.l.b16 %v4270
    %v4512 = vunpack.c.h.b16 %v4270
    %v4513 = vunpack.c.l.b16 %v4271
    %v4514 = vunpack.c.h.b16 %v4271
    %v4515 = vunpack.c.l.b16 %v4272
    %v4516 = vunpack.c.h.b16 %v4272
    %v4517 = vunpack.c.l.b16 %v4273
    %v4518 = vunpack.c.h.b16 %v4273
    %v4519 = vunpack.c.l.b16 %v4274
    %v4520 = vunpack.c.h.b16 %v4274
    %v4521 = vunpack.c.l.b16 %v4275
    %v4522 = vunpack.c.h.b16 %v4275
    %v4523 = vunpack.c.l.b16 %v4276
    %v4524 = vunpack.c.h.b16 %v4276
    %v4525 = vunpack.c.l.b16 %v4277
    %v4526 = vunpack.c.h.b16 %v4277
    %v4527 = vunpack.c.l.b16 %v4278
    %v4528 = vunpack.c.h.b16 %v4278
    %v4529 = vunpack.c.l.b16 %v4279
    %v4530 = vunpack.c.h.b16 %v4279
    %v4531 = vunpack.c.l.b16 %v4280
    %v4532 = vunpack.c.h.b16 %v4280
    %v4533 = vunpack.c.l.b16 %v4281
    %v4534 = vunpack.c.h.b16 %v4281
    %v4535 = vunpack.c.l.b16 %v4282
    %v4536 = vunpack.c.h.b16 %v4282
    %v4537 = vunpack.c.l.b16 %v4283
    %v4538 = vunpack.c.h.b16 %v4283
    %v4539 = vunpack.c.l.b16 %v4284
    %v4540 = vunpack.c.h.b16 %v4284
    %v4541 = vunpack.c.l.b16 %v4285
    %v4542 = vunpack.c.h.b16 %v4285
    %v4543 = vunpack.c.l.b16 %v4286
    %v4544 = vunpack.c.h.b16 %v4286
    %v4545 = vunpack.c.l.b16 %v4287
    %v4546 = vunpack.c.h.b16 %v4287
    %v4547 = vunpack.c.l.b16 %v4288
    %v4548 = vunpack.c.h.b16 %v4288
    %v4549 = vunpack.c.l.b16 %v4289
    %v4550 = vunpack.c.h.b16 %v4289
    %v4551 = vunpack.c.l.b16 %v4290
    %v4552 = vunpack.c.h.b16 %v4290
    %v4553 = vunpack.c.l.b16 %v4291
    %v4554 = vunpack.c.h.b16 %v4291
    %v4555 = vunpack.c.l.b16 %v4292
    %v4556 = vunpack.c.h.b16 %v4292
    %v4557 = vunpack.c.l.b16 %v4293
    %v4558 = vunpack.c.h.b16 %v4293
    %v4559 = vunpack.c.l.b16 %v4294
    %v4560 = vunpack.c.h.b16 %v4294
    %v4561 = vunpack.c.l.b16 %v4295
    %v4562 = vunpack.c.h.b16 %v4295
    %v4563 = vunpack.c.l.b16 %v4296
    %v4564 = vunpack.c.h.b16 %v4296
    %v4565 = vunpack.c.l.b16 %v4297
    %v4566 = vunpack.c.h.b16 %v4297
    %v4567 = vunpack.c.l.b16 %v4298
    %v4568 = vunpack.c.h.b16 %v4298
    %v4569 = vunpack.c.l.b16 %v4299
    %v4570 = vunpack.c.h.b16 %v4299
    %v4571 = vunpack.c.l.b16 %v4300
    %v4572 = vunpack.c.h.b16 %v4300
    %v4573 = vunpack.c.l.b16 %v4301
    %v4574 = vunpack.c.h.b16 %v4301
    %v4575 = vunpack.c.l.b16 %v4302
    %v4576 = vunpack.c.h.b16 %v4302
    %v4577 = vunpack.c.l.b16 %v4303
    %v4578 = vunpack.c.h.b16 %v4303
    %v4579 = vunpack.c.l.b16 %v4304
    %v4580 = vunpack.c.h.b16 %v4304
    %v4581 = vunpack.c.l.b16 %v4305
    %v4582 = vunpack.c.h.b16 %v4305
    %v4583 = vunpack.c.l.b16 %v4306
    %v4584 = vunpack.c.h.b16 %v4306
    %v4585 = vunpack.c.l.b16 %v4307
    %v4586 = vunpack.c.h.b16 %v4307
    %v4587 = vunpack.c.l.b16 %v4308
    %v4588 = vunpack.c.h.b16 %v4308
    %v4589 = vunpack.c.l.b16 %v4309
    %v4590 = vunpack.c.h.b16 %v4309
    %v4591 = vunpack.c.l.b16 %v4310
    %v4592 = vunpack.c.h.b16 %v4310
    %v4593 = vunpack.c.l.b16 %v4311
    %v4594 = vunpack.c.h.b16 %v4311
    %v4595 = vunpack.c.l.b16 %v4312
    %v4596 = vunpack.c.h.b16 %v4312
    %v4597 = vunpack.c.l.b16 %v4313
    %v4598 = vunpack.c.h.b16 %v4313
    %v4599 = vunpack.c.l.b16 %v4314
    %v4600 = vunpack.c.h.b16 %v4314
    %v4601 = vunpack.c.l.b16 %v4315
    %v4602 = vunpack.c.h.b16 %v4315
    %v4603 = vunpack.c.l.b16 %v4316
    %v4604 = vunpack.c.h.b16 %v4316
    %v4605 = vpack.c.b16 %v4419, %v4413
    %v4606 = vpack.c.b16 %v4420, %v4414
    %v4607 = vpack.c.b16 %v4421, %v4415
    %v4608 = vpack.c.b16 %v4422, %v4416
    %v4609 = vpack.c.b16 %v4423, %v4417
    %v4610 = vpack.c.b16 %v4424, %v4418
    %v4611 = vpack.c.b16 %v4431, %v4425
    %v4612 = vpack.c.b16 %v4432, %v4426
    %v4613 = vpack.c.b16 %v4433, %v4427
    %v4614 = vpack.c.b16 %v4434, %v4428
    %v4615 = vpack.c.b16 %v4435, %v4429
    %v4616 = vpack.c.b16 %v4436, %v4430
    %v4617 = vpack.c.b16 %v4443, %v4437
    %v4618 = vpack.c.b16 %v4444, %v4438
    %v4619 = vpack.c.b16 %v4445, %v4439
    %v4620 = vpack.c.b16 %v4446, %v4440
    %v4621 = vpack.c.b16 %v4447, %v4441
    %v4622 = vpack.c.b16 %v4448, %v4442
    %v4623 = vpack.c.b16 %v4455, %v4449
    %v4624 = vpack.c.b16 %v4456, %v4450
    %v4625 = vpack.c.b16 %v4457, %v4451
    %v4626 = vpack.c.b16 %v4458, %v4452
    %v4627 = vpack.c.b16 %v4459, %v4453
    %v4628 = vpack.c.b16 %v4460, %v4454
    %v4629 = vpack.c.b16 %v4467, %v4461
    %v4630 = vpack.c.b16 %v4468, %v4462
    %v4631 = vpack.c.b16 %v4469, %v4463
    %v4632 = vpack.c.b16 %v4470, %v4464
    %v4633 = vpack.c.b16 %v4471, %v4465
    %v4634 = vpack.c.b16 %v4472, %v4466
    %v4635 = vpack.c.b16 %v4479, %v4473
    %v4636 = vpack.c.b16 %v4480, %v4474
    %v4637 = vpack.c.b16 %v4481, %v4475
    %v4638 = vpack.c.b16 %v4482, %v4476
    %v4639 = vpack.c.b16 %v4483, %v4477
    %v4640 = vpack.c.b16 %v4484, %v4478
    %v4641 = vpack.c.b16 %v4491, %v4485
    %v4642 = vpack.c.b16 %v4492, %v4486
    %v4643 = vpack.c.b16 %v4493, %v4487
    %v4644 = vpack.c.b16 %v4494, %v4488
    %v4645 = vpack.c.b16 %v4495, %v4489
    %v4646 = vpack.c.b16 %v4496, %v4490
    %v4647 = vpack.c.b16 %v4503, %v4497
    %v4648 = vpack.c.b16 %v4504, %v4498
    %v4649 = vpack.c.b16 %v4505, %v4499
    %v4650 = vpack.c.b16 %v4506, %v4500
    %v4651 = vpack.c.b16 %v4507, %v4501
    %v4652 = vpack.c.b16 %v4508, %v4502
    %v4653 = vpack.c.b16 %v4515, %v4509
    %v4654 = vpack.c.b16 %v4516, %v4510
    %v4655 = vpack.c.b16 %v4517, %v4511
    %v4656 = vpack.c.b16 %v4518, %v4512
    %v4657 = vpack.c.b16 %v4519, %v4513
    %v4658 = vpack.c.b16 %v4520, %v4514
    %v4659 = vpack.c.b16 %v4527, %v4521
    %v4660 = vpack.c.b16 %v4528, %v4522
    %v4661 = vpack.c.b16 %v4529, %v4523
    %v4662 = vpack.c.b16 %v4530, %v4524
    %v4663 = vpack.c.b16 %v4531, %v4525
    %v4664 = vpack.c.b16 %v4532, %v4526
    %v4665 = vpack.c.b16 %v4539, %v4533
    %v4666 = vpack.c.b16 %v4540, %v4534
    %v4667 = vpack.c.b16 %v4541, %v4535
    %v4668 = vpack.c.b16 %v4542, %v4536
    %v4669 = vpack.c.b16 %v4543, %v4537
    %v4670 = vpack.c.b16 %v4544, %v4538
    %v4671 = vpack.c.b16 %v4551, %v4545
    %v4672 = vpack.c.b16 %v4552, %v4546
    %v4673 = vpack.c.b16 %v4553, %v4547
    %v4674 = vpack.c.b16 %v4554, %v4548
    %v4675 = vpack.c.b16 %v4555, %v4549
    %v4676 = vpack.c.b16 %v4556, %v4550
    %v4677 = vpack.c.b16 %v4563, %v4557
    %v4678 = vpack.c.b16 %v4564, %v4558
    %v4679 = vpack.c.b16 %v4565, %v4559
    %v4680 = vpack.c.b16 %v4566, %v4560
    %v4681 = vpack.c.b16 %v4567, %v4561
    %v4682 = vpack.c.b16 %v4568, %v4562
    %v4683 = vpack.c.b16 %v4575, %v4569
    %v4684 = vpack.c.b16 %v4576, %v4570
    %v4685 = vpack.c.b16 %v4577, %v4571
    %v4686 = vpack.c.b16 %v4578, %v4572
    %v4687 = vpack.c.b16 %v4579, %v4573
    %v4688 = vpack.c.b16 %v4580, %v4574
    %v4689 = vpack.c.b16 %v4587, %v4581
    %v4690 = vpack.c.b16 %v4588, %v4582
    %v4691 = vpack.c.b16 %v4589, %v4583
    %v4692 = vpack.c.b16 %v4590, %v4584
    %v4693 = vpack.c.b16 %v4591, %v4585
    %v4694 = vpack.c.b16 %v4592, %v4586
    %v4695 = vpack.c.b16 %v4599, %v4593
    %v4696 = vpack.c.b16 %v4600, %v4594
    %v4697 = vpack.c.b16 %v4601, %v4595
    %v4698 = vpack.c.b16 %v4602, %v4596
    %v4699 = vpack.c.b16 %v4603, %v4597
    %v4700 = vpack.c.b16 %v4604, %v4598
    %4797 = vmatprep.subr.bf16.mxu0 %v4606
    %4798 = vmatpush1.bf16.msra.mxu0 %v4605
    %4799 = vmatprep.subr.bf16.mxu0 %v4612
    %4800 = vmatpush1.bf16.msra.mxu0 %v4611
    %4801 = vmatprep.subr.bf16.mxu0 %v4618
    %4802 = vmatpush1.bf16.msra.mxu0 %v4617
    %4803 = vmatprep.subr.bf16.mxu0 %v4624
    %4804 = vmatpush1.bf16.msra.mxu0 %v4623
    %4805 = vmatprep.subr.bf16.mxu0 %v4630
    %4806 = vmatpush1.bf16.msra.mxu0 %v4629
    %4807 = vmatprep.subr.bf16.mxu0 %v4636
    %4808 = vmatpush1.bf16.msra.mxu0 %v4635
    %4809 = vmatprep.subr.bf16.mxu0 %v4642
    %4810 = vmatpush1.bf16.msra.mxu0 %v4641
    %4811 = vmatprep.subr.bf16.mxu0 %v4648
    %4812 = vmatpush1.bf16.msra.mxu0 %v4647
    %4813 = vmatprep.subr.bf16.mxu0 %v4654
    %4814 = vmatpush1.bf16.msra.mxu0 %v4653
    %4815 = vmatprep.subr.bf16.mxu0 %v4660
    %4816 = vmatpush1.bf16.msra.mxu0 %v4659
    %4817 = vmatprep.subr.bf16.mxu0 %v4666
    %4818 = vmatpush1.bf16.msra.mxu0 %v4665
    %4819 = vmatprep.subr.bf16.mxu0 %v4672
    %4820 = vmatpush1.bf16.msra.mxu0 %v4671
    %4821 = vmatprep.subr.bf16.mxu0 %v4678
    %4822 = vmatpush1.bf16.msra.mxu0 %v4677
    %4823 = vmatprep.subr.bf16.mxu0 %v4684
    %4824 = vmatpush1.bf16.msra.mxu0 %v4683
    %4825 = vmatprep.subr.bf16.mxu0 %v4690
    %4826 = vmatpush1.bf16.msra.mxu0 %v4689
    %4827 = vmatprep.subr.bf16.mxu0 %v4696
    %4828 = vmatpush1.bf16.msra.mxu0 %v4695
    %4829 = vmatprep.mubr.bf16.mxu0 %v4220
    %4830 = vmatmul.mubr.bf16.gmra.mrb[0].mxu0 %v4219
    %v4831 = vpop.f32.mrb[0].mxu0
    %v4832 = vadd.f32 0.0, %v4831
    %v4833 = vpop.f32.mrb[0].mxu0
    %v4834 = vadd.f32 0.0, %v4833
    %v4835 = vpop.f32.mrb[0].mxu0
    %v4836 = vpop.f32.mrb[0].mxu0
    %4837 = vdwg.mxu0
    %4838 = vmatprep.subr.bf16.mxu0 %v4608
    %4839 = vmatpush1.bf16.msra.mxu0 %v4607
    %4840 = vmatprep.subr.bf16.mxu0 %v4614
    %4841 = vmatpush1.bf16.msra.mxu0 %v4613
    %4842 = vmatprep.subr.bf16.mxu0 %v4620
    %4843 = vmatpush1.bf16.msra.mxu0 %v4619
    %4844 = vmatprep.subr.bf16.mxu0 %v4626
    %4845 = vmatpush1.bf16.msra.mxu0 %v4625
    %4846 = vmatprep.subr.bf16.mxu0 %v4632
    %4847 = vmatpush1.bf16.msra.mxu0 %v4631
    %4848 = vmatprep.subr.bf16.mxu0 %v4638
    %4849 = vmatpush1.bf16.msra.mxu0 %v4637
    %4850 = vmatprep.subr.bf16.mxu0 %v4644
    %4851 = vmatpush1.bf16.msra.mxu0 %v4643
    %4852 = vmatprep.subr.bf16.mxu0 %v4650
    %4853 = vmatpush1.bf16.msra.mxu0 %v4649
    %4854 = vmatprep.subr.bf16.mxu0 %v4656
    %4855 = vmatpush1.bf16.msra.mxu0 %v4655
    %4856 = vmatprep.subr.bf16.mxu0 %v4662
    %4857 = vmatpush1.bf16.msra.mxu0 %v4661
    %4858 = vmatprep.subr.bf16.mxu0 %v4668
    %4859 = vmatpush1.bf16.msra.mxu0 %v4667
    %4860 = vmatprep.subr.bf16.mxu0 %v4674
    %4861 = vmatpush1.bf16.msra.mxu0 %v4673
    %4862 = vmatprep.subr.bf16.mxu0 %v4680
    %4863 = vmatpush1.bf16.msra.mxu0 %v4679
    %4864 = vmatprep.subr.bf16.mxu0 %v4686
    %4865 = vmatpush1.bf16.msra.mxu0 %v4685
    %4866 = vmatprep.subr.bf16.mxu0 %v4692
    %4867 = vmatpush1.bf16.msra.mxu0 %v4691
    %4868 = vmatprep.subr.bf16.mxu0 %v4698
    %4869 = vmatpush1.bf16.msra.mxu0 %v4697
    %4870 = vmatprep.mubr.bf16.mxu0 %v4220
    %4871 = vmatmul.mubr.bf16.gmra.mrb[0].mxu0 %v4219
    %v4872 = vpop.f32.mrb[0].mxu0
    %v4873 = vadd.f32 0.0, %v4872
    %v4874 = vpop.f32.mrb[0].mxu0
    %v4875 = vadd.f32 0.0, %v4874
    %v4876 = vpop.f32.mrb[0].mxu0
    %v4877 = vpop.f32.mrb[0].mxu0
    %4878 = vdwg.mxu0
    %4879 = vmatprep.subr.bf16.mxu0 %v4610
    %4880 = vmatpush1.bf16.msra.mxu0 %v4609
    %4881 = vmatprep.subr.bf16.mxu0 %v4616
    %4882 = vmatpush1.bf16.msra.mxu0 %v4615
    %4883 = vmatprep.subr.bf16.mxu0 %v4622
    %4884 = vmatpush1.bf16.msra.mxu0 %v4621
    %4885 = vmatprep.subr.bf16.mxu0 %v4628
    %4886 = vmatpush1.bf16.msra.mxu0 %v4627
    %4887 = vmatprep.subr.bf16.mxu0 %v4634
    %4888 = vmatpush1.bf16.msra.mxu0 %v4633
    %4889 = vmatprep.subr.bf16.mxu0 %v4640
    %4890 = vmatpush1.bf16.msra.mxu0 %v4639
    %4891 = vmatprep.subr.bf16.mxu0 %v4646
    %4892 = vmatpush1.bf16.msra.mxu0 %v4645
    %4893 = vmatprep.subr.bf16.mxu0 %v4652
    %4894 = vmatpush1.bf16.msra.mxu0 %v4651
    %4895 = vmatprep.subr.bf16.mxu0 %v4658
    %4896 = vmatpush1.bf16.msra.mxu0 %v4657
    %4897 = vmatprep.subr.bf16.mxu0 %v4664
    %4898 = vmatpush1.bf16.msra.mxu0 %v4663
    %4899 = vmatprep.subr.bf16.mxu0 %v4670
    %4900 = vmatpush1.bf16.msra.mxu0 %v4669
    %4901 = vmatprep.subr.bf16.mxu0 %v4676
    %4902 = vmatpush1.bf16.msra.mxu0 %v4675
    %4903 = vmatprep.subr.bf16.mxu0 %v4682
    %4904 = vmatpush1.bf16.msra.mxu0 %v4681
    %4905 = vmatprep.subr.bf16.mxu0 %v4688
    %4906 = vmatpush1.bf16.msra.mxu0 %v4687
    %4907 = vmatprep.subr.bf16.mxu0 %v4694
    %4908 = vmatpush1.bf16.msra.mxu0 %v4693
    %4909 = vmatprep.subr.bf16.mxu0 %v4700
    %4910 = vmatpush1.bf16.msra.mxu0 %v4699
    %4911 = vmatprep.mubr.bf16.mxu0 %v4220
    %4912 = vmatmul.mubr.bf16.gmra.mrb[0].mxu0 %v4219
    %v4913 = vpop.f32.mrb[0].mxu0
    %v4914 = vadd.f32 0.0, %v4913
    %v4915 = vpop.f32.mrb[0].mxu0
    %v4916 = vadd.f32 0.0, %v4915
    %v4917 = vpop.f32.mrb[0].mxu0
    %v4918 = vpop.f32.mrb[0].mxu0
    %4919 = vdwg.mxu0
    %v4924 = vcombine.low %v4832, %v4834
    %v4925 = vcombine.low %v4873, %v4875
    %v4927 = vunpack.c.l.s4 1966171168
    %v4928 = vunpack.c.0.s8 %v4927
    %v4929 = vlaneseq
    %v4930 = vshrl.u32 %v4929, 7
    %v4931 = vsub.s32 %v4928, %v4930
    %v4932 = vrot.slane %v4924, %v4931
    %v4934 = vunpack.c.l.s4 1966171168
    %v4935 = vunpack.c.0.s8 %v4934
    %v4936 = vlaneseq
    %v4937 = vshrl.u32 %v4936, 7
    %v4938 = vsub.s32 %v4935, %v4937
    %v4939 = vrot.slane %v4925, %v4938
    %v4940 = vcombine.low %v4932, %v4939
    %v4942 = vunpack.c.l.s4 1966171168
    %v4943 = vunpack.c.0.s8 %v4942
    %v4944 = vlaneseq
    %v4945 = vshrl.u32 %v4944, 7
    %v4946 = vsub.s32 %v4943, %v4945
    %v4947 = vrot.slane %v4940, %v4946
    %v4949 = vadd.f32 %v4207, %v4947
    %v4950 = vxor.u32 %v4949, 2147483648
    %v4951 = vmul.f32 %v4950, 1.442695
    %v4952 = vpow.pop %v4951
    %v4953 = vadd.f32 %v4952, 1.0
    %v4954 = vrcp.pop %v4953
    %v4955 = vmul.f32 1.0, %v4954
    %v4956 = vadd.f32 %v4914, %v1011
    %v4957 = vadd.f32 %v4916, %v1015
    %v4960 = vcombine.low %v4956, %v4957
    %v4962 = vunpack.c.l.s4 1966171168
    %v4963 = vunpack.c.0.s8 %v4962
    %v4964 = vlaneseq
    %v4965 = vshrl.u32 %v4964, 7
    %v4966 = vsub.s32 %v4963, %v4965
    %v4967 = vrot.slane %v4960, %v4966
    %v4969 = vunpack.c.l.s4 1966171168
    %v4970 = vunpack.c.0.s8 %v4969
    %v4971 = vlaneseq
    %v4972 = vshrl.u32 %v4971, 7
    %v4973 = vsub.s32 %v4970, %v4972
    %v4974 = vrot.slane %v4967, %v4973
    %v4976 = vmul.f32 %v4955, %v4974
    %v4978 = vrot.slane %v4207, 4
    %v4980 = vadd.f32 %v4978, %v4976
    %v4981 = vtanh.pop %v4980
    %v4982 = vsub.f32 %v4200, %v4981
    %v4984 = vrot.slane %v4955, 2
    %v4986 = vmul.f32 %v4984, %v4982
    %v4987 = vadd.f32 %v4981, %v4986
    %s4988 = scalar_lea.vmem %s7, 5
    %4989 = vst.msk [vmem:[%s4988] ss:$8 sm:$0x3] %vm1053, %v4987
    %4990 = vst.msk [vmem:[%s4988] ss:$8 sm:$0x0] %vm1053, %v4987
    %s4991 = scalar_lea.vmem [#allocation2], 6
    %v4992 = vld [vmem:[%s4991] ss:$8 sm:$0xf]
    %v4993 = vld [vmem:[%s4991] ss:$8 sm:$0x30]
    %v4994 = vor.u32 %v4992, %v4993
    %v4996 = vlaneseq
    %v4997 = vshrl.u32 %v4996, 7
    %v4998 = vsub.s32 0, %v4997
    %v4999 = vrot.slane %v4987, %v4998
    %v5000 = vlaneseq
    %v5001 = vshrl.u32 %v5000, 7
    %v5002 = vsub.s32 1, %v5001
    %v5003 = vrot.slane %v4987, %v5002
    %v5006 = vpack.c.bf16 %v4999, %v4999
    %v5007 = vpack.c.bf16 %v5003, %v5003
    %v5008 = vld [vmem:[%s3] sm:$0xff]
    %v5009 = vld [vmem:[%s3 + $0x8] sm:$0xff]
    %v5010 = vld [vmem:[%s3 + $0x10] sm:$0xff]
    %v5011 = vld [vmem:[%s3 + $0x18] sm:$0xff]
    %v5012 = vld [vmem:[%s3 + $0x20] sm:$0xff]
    %v5013 = vld [vmem:[%s3 + $0x28] sm:$0xff]
    %v5014 = vld [vmem:[%s3 + $0x30] sm:$0xff]
    %v5015 = vld [vmem:[%s3 + $0x38] sm:$0xff]
    %v5016 = vld [vmem:[%s3 + $0x40] sm:$0xff]
    %v5017 = vld [vmem:[%s3 + $0x48] sm:$0xff]
    %v5018 = vld [vmem:[%s3 + $0x50] sm:$0xff]
    %v5019 = vld [vmem:[%s3 + $0x58] sm:$0xff]
    %v5020 = vld [vmem:[%s3 + $0x60] sm:$0xff]
    %v5021 = vld [vmem:[%s3 + $0x68] sm:$0xff]
    %v5022 = vld [vmem:[%s3 + $0x70] sm:$0xff]
    %v5023 = vld [vmem:[%s3 + $0x78] sm:$0xff]
    %v5024 = vld [vmem:[%s3 + $0x80] sm:$0xff]
    %v5025 = vld [vmem:[%s3 + $0x88] sm:$0xff]
    %v5026 = vld [vmem:[%s3 + $0x90] sm:$0xff]
    %v5027 = vld [vmem:[%s3 + $0x98] sm:$0xff]
    %v5028 = vld [vmem:[%s3 + $0xa0] sm:$0xff]
    %v5029 = vld [vmem:[%s3 + $0xa8] sm:$0xff]
    %v5030 = vld [vmem:[%s3 + $0xb0] sm:$0xff]
    %v5031 = vld [vmem:[%s3 + $0xb8] sm:$0xff]
    %v5032 = vld [vmem:[%s3 + $0xc0] sm:$0xff]
    %v5033 = vld [vmem:[%s3 + $0xc8] sm:$0xff]
    %v5034 = vld [vmem:[%s3 + $0xd0] sm:$0xff]
    %v5035 = vld [vmem:[%s3 + $0xd8] sm:$0xff]
    %v5036 = vld [vmem:[%s3 + $0xe0] sm:$0xff]
    %v5037 = vld [vmem:[%s3 + $0xe8] sm:$0xff]
    %v5038 = vld [vmem:[%s3 + $0xf0] sm:$0xff]
    %v5039 = vld [vmem:[%s3 + $0xf8] sm:$0xff]
    %v5040 = vld [vmem:[%s3 + $0x100] sm:$0xff]
    %v5041 = vld [vmem:[%s3 + $0x108] sm:$0xff]
    %v5042 = vld [vmem:[%s3 + $0x110] sm:$0xff]
    %v5043 = vld [vmem:[%s3 + $0x118] sm:$0xff]
    %v5044 = vld [vmem:[%s3 + $0x120] sm:$0xff]
    %v5045 = vld [vmem:[%s3 + $0x128] sm:$0xff]
    %v5046 = vld [vmem:[%s3 + $0x130] sm:$0xff]
    %v5047 = vld [vmem:[%s3 + $0x138] sm:$0xff]
    %v5048 = vld [vmem:[%s3 + $0x140] sm:$0xff]
    %v5049 = vld [vmem:[%s3 + $0x148] sm:$0xff]
    %v5050 = vld [vmem:[%s3 + $0x150] sm:$0xff]
    %v5051 = vld [vmem:[%s3 + $0x158] sm:$0xff]
    %v5052 = vld [vmem:[%s3 + $0x160] sm:$0xff]
    %v5053 = vld [vmem:[%s3 + $0x168] sm:$0xff]
    %v5054 = vld [vmem:[%s3 + $0x170] sm:$0xff]
    %v5055 = vld [vmem:[%s3 + $0x178] sm:$0xff]
    %v5056 = vld [vmem:[%s3 + $0x180] sm:$0xff]
    %v5057 = vld [vmem:[%s3 + $0x188] sm:$0xff]
    %v5058 = vld [vmem:[%s3 + $0x190] sm:$0xff]
    %v5059 = vld [vmem:[%s3 + $0x198] sm:$0xff]
    %v5060 = vld [vmem:[%s3 + $0x1a0] sm:$0xff]
    %v5061 = vld [vmem:[%s3 + $0x1a8] sm:$0xff]
    %v5062 = vld [vmem:[%s3 + $0x1b0] sm:$0xff]
    %v5063 = vld [vmem:[%s3 + $0x1b8] sm:$0xff]
    %v5064 = vld [vmem:[%s3 + $0x1c0] sm:$0xff]
    %v5065 = vld [vmem:[%s3 + $0x1c8] sm:$0xff]
    %v5066 = vld [vmem:[%s3 + $0x1d0] sm:$0xff]
    %v5067 = vld [vmem:[%s3 + $0x1d8] sm:$0xff]
    %v5068 = vld [vmem:[%s3 + $0x1e0] sm:$0xff]
    %v5069 = vld [vmem:[%s3 + $0x1e8] sm:$0xff]
    %v5070 = vld [vmem:[%s3 + $0x1f0] sm:$0xff]
    %v5071 = vld [vmem:[%s3 + $0x1f8] sm:$0xff]
    %v5072 = vld [vmem:[%s3 + $0x200] sm:$0xff]
    %v5073 = vld [vmem:[%s3 + $0x208] sm:$0xff]
    %v5074 = vld [vmem:[%s3 + $0x210] sm:$0xff]
    %v5075 = vld [vmem:[%s3 + $0x218] sm:$0xff]
    %v5076 = vld [vmem:[%s3 + $0x220] sm:$0xff]
    %v5077 = vld [vmem:[%s3 + $0x228] sm:$0xff]
    %v5078 = vld [vmem:[%s3 + $0x230] sm:$0xff]
    %v5079 = vld [vmem:[%s3 + $0x238] sm:$0xff]
    %v5080 = vld [vmem:[%s3 + $0x240] sm:$0xff]
    %v5081 = vld [vmem:[%s3 + $0x248] sm:$0xff]
    %v5082 = vld [vmem:[%s3 + $0x250] sm:$0xff]
    %v5083 = vld [vmem:[%s3 + $0x258] sm:$0xff]
    %v5084 = vld [vmem:[%s3 + $0x260] sm:$0xff]
    %v5085 = vld [vmem:[%s3 + $0x268] sm:$0xff]
    %v5086 = vld [vmem:[%s3 + $0x270] sm:$0xff]
    %v5087 = vld [vmem:[%s3 + $0x278] sm:$0xff]
    %v5088 = vld [vmem:[%s3 + $0x280] sm:$0xff]
    %v5089 = vld [vmem:[%s3 + $0x288] sm:$0xff]
    %v5090 = vld [vmem:[%s3 + $0x290] sm:$0xff]
    %v5091 = vld [vmem:[%s3 + $0x298] sm:$0xff]
    %v5092 = vld [vmem:[%s3 + $0x2a0] sm:$0xff]
    %v5093 = vld [vmem:[%s3 + $0x2a8] sm:$0xff]
    %v5094 = vld [vmem:[%s3 + $0x2b0] sm:$0xff]
    %v5095 = vld [vmem:[%s3 + $0x2b8] sm:$0xff]
    %v5096 = vld [vmem:[%s3 + $0x2c0] sm:$0xff]
    %v5097 = vld [vmem:[%s3 + $0x2c8] sm:$0xff]
    %v5098 = vld [vmem:[%s3 + $0x2d0] sm:$0xff]
    %v5099 = vld [vmem:[%s3 + $0x2d8] sm:$0xff]
    %v5100 = vld [vmem:[%s3 + $0x2e0] sm:$0xff]
    %v5101 = vld [vmem:[%s3 + $0x2e8] sm:$0xff]
    %v5102 = vld [vmem:[%s3 + $0x2f0] sm:$0xff]
    %v5103 = vld [vmem:[%s3 + $0x2f8] sm:$0xff]
    %v5200 = vunpack.c.l.b16 %v5008
    %v5201 = vunpack.c.h.b16 %v5008
    %v5202 = vunpack.c.l.b16 %v5009
    %v5203 = vunpack.c.h.b16 %v5009
    %v5204 = vunpack.c.l.b16 %v5010
    %v5205 = vunpack.c.h.b16 %v5010
    %v5206 = vunpack.c.l.b16 %v5011
    %v5207 = vunpack.c.h.b16 %v5011
    %v5208 = vunpack.c.l.b16 %v5012
    %v5209 = vunpack.c.h.b16 %v5012
    %v5210 = vunpack.c.l.b16 %v5013
    %v5211 = vunpack.c.h.b16 %v5013
    %v5212 = vunpack.c.l.b16 %v5014
    %v5213 = vunpack.c.h.b16 %v5014
    %v5214 = vunpack.c.l.b16 %v5015
    %v5215 = vunpack.c.h.b16 %v5015
    %v5216 = vunpack.c.l.b16 %v5016
    %v5217 = vunpack.c.h.b16 %v5016
    %v5218 = vunpack.c.l.b16 %v5017
    %v5219 = vunpack.c.h.b16 %v5017
    %v5220 = vunpack.c.l.b16 %v5018
    %v5221 = vunpack.c.h.b16 %v5018
    %v5222 = vunpack.c.l.b16 %v5019
    %v5223 = vunpack.c.h.b16 %v5019
    %v5224 = vunpack.c.l.b16 %v5020
    %v5225 = vunpack.c.h.b16 %v5020
    %v5226 = vunpack.c.l.b16 %v5021
    %v5227 = vunpack.c.h.b16 %v5021
    %v5228 = vunpack.c.l.b16 %v5022
    %v5229 = vunpack.c.h.b16 %v5022
    %v5230 = vunpack.c.l.b16 %v5023
    %v5231 = vunpack.c.h.b16 %v5023
    %v5232 = vunpack.c.l.b16 %v5024
    %v5233 = vunpack.c.h.b16 %v5024
    %v5234 = vunpack.c.l.b16 %v5025
    %v5235 = vunpack.c.h.b16 %v5025
    %v5236 = vunpack.c.l.b16 %v5026
    %v5237 = vunpack.c.h.b16 %v5026
    %v5238 = vunpack.c.l.b16 %v5027
    %v5239 = vunpack.c.h.b16 %v5027
    %v5240 = vunpack.c.l.b16 %v5028
    %v5241 = vunpack.c.h.b16 %v5028
    %v5242 = vunpack.c.l.b16 %v5029
    %v5243 = vunpack.c.h.b16 %v5029
    %v5244 = vunpack.c.l.b16 %v5030
    %v5245 = vunpack.c.h.b16 %v5030
    %v5246 = vunpack.c.l.b16 %v5031
    %v5247 = vunpack.c.h.b16 %v5031
    %v5248 = vunpack.c.l.b16 %v5032
    %v5249 = vunpack.c.h.b16 %v5032
    %v5250 = vunpack.c.l.b16 %v5033
    %v5251 = vunpack.c.h.b16 %v5033
    %v5252 = vunpack.c.l.b16 %v5034
    %v5253 = vunpack.c.h.b16 %v5034
    %v5254 = vunpack.c.l.b16 %v5035
    %v5255 = vunpack.c.h.b16 %v5035
    %v5256 = vunpack.c.l.b16 %v5036
    %v5257 = vunpack.c.h.b16 %v5036
    %v5258 = vunpack.c.l.b16 %v5037
    %v5259 = vunpack.c.h.b16 %v5037
    %v5260 = vunpack.c.l.b16 %v5038
    %v5261 = vunpack.c.h.b16 %v5038
    %v5262 = vunpack.c.l.b16 %v5039
    %v5263 = vunpack.c.h.b16 %v5039
    %v5264 = vunpack.c.l.b16 %v5040
    %v5265 = vunpack.c.h.b16 %v5040
    %v5266 = vunpack.c.l.b16 %v5041
    %v5267 = vunpack.c.h.b16 %v5041
    %v5268 = vunpack.c.l.b16 %v5042
    %v5269 = vunpack.c.h.b16 %v5042
    %v5270 = vunpack.c.l.b16 %v5043
    %v5271 = vunpack.c.h.b16 %v5043
    %v5272 = vunpack.c.l.b16 %v5044
    %v5273 = vunpack.c.h.b16 %v5044
    %v5274 = vunpack.c.l.b16 %v5045
    %v5275 = vunpack.c.h.b16 %v5045
    %v5276 = vunpack.c.l.b16 %v5046
    %v5277 = vunpack.c.h.b16 %v5046
    %v5278 = vunpack.c.l.b16 %v5047
    %v5279 = vunpack.c.h.b16 %v5047
    %v5280 = vunpack.c.l.b16 %v5048
    %v5281 = vunpack.c.h.b16 %v5048
    %v5282 = vunpack.c.l.b16 %v5049
    %v5283 = vunpack.c.h.b16 %v5049
    %v5284 = vunpack.c.l.b16 %v5050
    %v5285 = vunpack.c.h.b16 %v5050
    %v5286 = vunpack.c.l.b16 %v5051
    %v5287 = vunpack.c.h.b16 %v5051
    %v5288 = vunpack.c.l.b16 %v5052
    %v5289 = vunpack.c.h.b16 %v5052
    %v5290 = vunpack.c.l.b16 %v5053
    %v5291 = vunpack.c.h.b16 %v5053
    %v5292 = vunpack.c.l.b16 %v5054
    %v5293 = vunpack.c.h.b16 %v5054
    %v5294 = vunpack.c.l.b16 %v5055
    %v5295 = vunpack.c.h.b16 %v5055
    %v5296 = vunpack.c.l.b16 %v5056
    %v5297 = vunpack.c.h.b16 %v5056
    %v5298 = vunpack.c.l.b16 %v5057
    %v5299 = vunpack.c.h.b16 %v5057
    %v5300 = vunpack.c.l.b16 %v5058
    %v5301 = vunpack.c.h.b16 %v5058
    %v5302 = vunpack.c.l.b16 %v5059
    %v5303 = vunpack.c.h.b16 %v5059
    %v5304 = vunpack.c.l.b16 %v5060
    %v5305 = vunpack.c.h.b16 %v5060
    %v5306 = vunpack.c.l.b16 %v5061
    %v5307 = vunpack.c.h.b16 %v5061
    %v5308 = vunpack.c.l.b16 %v5062
    %v5309 = vunpack.c.h.b16 %v5062
    %v5310 = vunpack.c.l.b16 %v5063
    %v5311 = vunpack.c.h.b16 %v5063
    %v5312 = vunpack.c.l.b16 %v5064
    %v5313 = vunpack.c.h.b16 %v5064
    %v5314 = vunpack.c.l.b16 %v5065
    %v5315 = vunpack.c.h.b16 %v5065
    %v5316 = vunpack.c.l.b16 %v5066
    %v5317 = vunpack.c.h.b16 %v5066
    %v5318 = vunpack.c.l.b16 %v5067
    %v5319 = vunpack.c.h.b16 %v5067
    %v5320 = vunpack.c.l.b16 %v5068
    %v5321 = vunpack.c.h.b16 %v5068
    %v5322 = vunpack.c.l.b16 %v5069
    %v5323 = vunpack.c.h.b16 %v5069
    %v5324 = vunpack.c.l.b16 %v5070
    %v5325 = vunpack.c.h.b16 %v5070
    %v5326 = vunpack.c.l.b16 %v5071
    %v5327 = vunpack.c.h.b16 %v5071
    %v5328 = vunpack.c.l.b16 %v5072
    %v5329 = vunpack.c.h.b16 %v5072
    %v5330 = vunpack.c.l.b16 %v5073
    %v5331 = vunpack.c.h.b16 %v5073
    %v5332 = vunpack.c.l.b16 %v5074
    %v5333 = vunpack.c.h.b16 %v5074
    %v5334 = vunpack.c.l.b16 %v5075
    %v5335 = vunpack.c.h.b16 %v5075
    %v5336 = vunpack.c.l.b16 %v5076
    %v5337 = vunpack.c.h.b16 %v5076
    %v5338 = vunpack.c.l.b16 %v5077
    %v5339 = vunpack.c.h.b16 %v5077
    %v5340 = vunpack.c.l.b16 %v5078
    %v5341 = vunpack.c.h.b16 %v5078
    %v5342 = vunpack.c.l.b16 %v5079
    %v5343 = vunpack.c.h.b16 %v5079
    %v5344 = vunpack.c.l.b16 %v5080
    %v5345 = vunpack.c.h.b16 %v5080
    %v5346 = vunpack.c.l.b16 %v5081
    %v5347 = vunpack.c.h.b16 %v5081
    %v5348 = vunpack.c.l.b16 %v5082
    %v5349 = vunpack.c.h.b16 %v5082
    %v5350 = vunpack.c.l.b16 %v5083
    %v5351 = vunpack.c.h.b16 %v5083
    %v5352 = vunpack.c.l.b16 %v5084
    %v5353 = vunpack.c.h.b16 %v5084
    %v5354 = vunpack.c.l.b16 %v5085
    %v5355 = vunpack.c.h.b16 %v5085
    %v5356 = vunpack.c.l.b16 %v5086
    %v5357 = vunpack.c.h.b16 %v5086
    %v5358 = vunpack.c.l.b16 %v5087
    %v5359 = vunpack.c.h.b16 %v5087
    %v5360 = vunpack.c.l.b16 %v5088
    %v5361 = vunpack.c.h.b16 %v5088
    %v5362 = vunpack.c.l.b16 %v5089
    %v5363 = vunpack.c.h.b16 %v5089
    %v5364 = vunpack.c.l.b16 %v5090
    %v5365 = vunpack.c.h.b16 %v5090
    %v5366 = vunpack.c.l.b16 %v5091
    %v5367 = vunpack.c.h.b16 %v5091
    %v5368 = vunpack.c.l.b16 %v5092
    %v5369 = vunpack.c.h.b16 %v5092
    %v5370 = vunpack.c.l.b16 %v5093
    %v5371 = vunpack.c.h.b16 %v5093
    %v5372 = vunpack.c.l.b16 %v5094
    %v5373 = vunpack.c.h.b16 %v5094
    %v5374 = vunpack.c.l.b16 %v5095
    %v5375 = vunpack.c.h.b16 %v5095
    %v5376 = vunpack.c.l.b16 %v5096
    %v5377 = vunpack.c.h.b16 %v5096
    %v5378 = vunpack.c.l.b16 %v5097
    %v5379 = vunpack.c.h.b16 %v5097
    %v5380 = vunpack.c.l.b16 %v5098
    %v5381 = vunpack.c.h.b16 %v5098
    %v5382 = vunpack.c.l.b16 %v5099
    %v5383 = vunpack.c.h.b16 %v5099
    %v5384 = vunpack.c.l.b16 %v5100
    %v5385 = vunpack.c.h.b16 %v5100
    %v5386 = vunpack.c.l.b16 %v5101
    %v5387 = vunpack.c.h.b16 %v5101
    %v5388 = vunpack.c.l.b16 %v5102
    %v5389 = vunpack.c.h.b16 %v5102
    %v5390 = vunpack.c.l.b16 %v5103
    %v5391 = vunpack.c.h.b16 %v5103
    %v5392 = vpack.c.b16 %v5206, %v5200
    %v5393 = vpack.c.b16 %v5207, %v5201
    %v5394 = vpack.c.b16 %v5208, %v5202
    %v5395 = vpack.c.b16 %v5209, %v5203
    %v5396 = vpack.c.b16 %v5210, %v5204
    %v5397 = vpack.c.b16 %v5211, %v5205
    %v5398 = vpack.c.b16 %v5218, %v5212
    %v5399 = vpack.c.b16 %v5219, %v5213
    %v5400 = vpack.c.b16 %v5220, %v5214
    %v5401 = vpack.c.b16 %v5221, %v5215
    %v5402 = vpack.c.b16 %v5222, %v5216
    %v5403 = vpack.c.b16 %v5223, %v5217
    %v5404 = vpack.c.b16 %v5230, %v5224
    %v5405 = vpack.c.b16 %v5231, %v5225
    %v5406 = vpack.c.b16 %v5232, %v5226
    %v5407 = vpack.c.b16 %v5233, %v5227
    %v5408 = vpack.c.b16 %v5234, %v5228
    %v5409 = vpack.c.b16 %v5235, %v5229
    %v5410 = vpack.c.b16 %v5242, %v5236
    %v5411 = vpack.c.b16 %v5243, %v5237
    %v5412 = vpack.c.b16 %v5244, %v5238
    %v5413 = vpack.c.b16 %v5245, %v5239
    %v5414 = vpack.c.b16 %v5246, %v5240
    %v5415 = vpack.c.b16 %v5247, %v5241
    %v5416 = vpack.c.b16 %v5254, %v5248
    %v5417 = vpack.c.b16 %v5255, %v5249
    %v5418 = vpack.c.b16 %v5256, %v5250
    %v5419 = vpack.c.b16 %v5257, %v5251
    %v5420 = vpack.c.b16 %v5258, %v5252
    %v5421 = vpack.c.b16 %v5259, %v5253
    %v5422 = vpack.c.b16 %v5266, %v5260
    %v5423 = vpack.c.b16 %v5267, %v5261
    %v5424 = vpack.c.b16 %v5268, %v5262
    %v5425 = vpack.c.b16 %v5269, %v5263
    %v5426 = vpack.c.b16 %v5270, %v5264
    %v5427 = vpack.c.b16 %v5271, %v5265
    %v5428 = vpack.c.b16 %v5278, %v5272
    %v5429 = vpack.c.b16 %v5279, %v5273
    %v5430 = vpack.c.b16 %v5280, %v5274
    %v5431 = vpack.c.b16 %v5281, %v5275
    %v5432 = vpack.c.b16 %v5282, %v5276
    %v5433 = vpack.c.b16 %v5283, %v5277
    %v5434 = vpack.c.b16 %v5290, %v5284
    %v5435 = vpack.c.b16 %v5291, %v5285
    %v5436 = vpack.c.b16 %v5292, %v5286
    %v5437 = vpack.c.b16 %v5293, %v5287
    %v5438 = vpack.c.b16 %v5294, %v5288
    %v5439 = vpack.c.b16 %v5295, %v5289
    %v5440 = vpack.c.b16 %v5302, %v5296
    %v5441 = vpack.c.b16 %v5303, %v5297
    %v5442 = vpack.c.b16 %v5304, %v5298
    %v5443 = vpack.c.b16 %v5305, %v5299
    %v5444 = vpack.c.b16 %v5306, %v5300
    %v5445 = vpack.c.b16 %v5307, %v5301
    %v5446 = vpack.c.b16 %v5314, %v5308
    %v5447 = vpack.c.b16 %v5315, %v5309
    %v5448 = vpack.c.b16 %v5316, %v5310
    %v5449 = vpack.c.b16 %v5317, %v5311
    %v5450 = vpack.c.b16 %v5318, %v5312
    %v5451 = vpack.c.b16 %v5319, %v5313
    %v5452 = vpack.c.b16 %v5326, %v5320
    %v5453 = vpack.c.b16 %v5327, %v5321
    %v5454 = vpack.c.b16 %v5328, %v5322
    %v5455 = vpack.c.b16 %v5329, %v5323
    %v5456 = vpack.c.b16 %v5330, %v5324
    %v5457 = vpack.c.b16 %v5331, %v5325
    %v5458 = vpack.c.b16 %v5338, %v5332
    %v5459 = vpack.c.b16 %v5339, %v5333
    %v5460 = vpack.c.b16 %v5340, %v5334
    %v5461 = vpack.c.b16 %v5341, %v5335
    %v5462 = vpack.c.b16 %v5342, %v5336
    %v5463 = vpack.c.b16 %v5343, %v5337
    %v5464 = vpack.c.b16 %v5350, %v5344
    %v5465 = vpack.c.b16 %v5351, %v5345
    %v5466 = vpack.c.b16 %v5352, %v5346
    %v5467 = vpack.c.b16 %v5353, %v5347
    %v5468 = vpack.c.b16 %v5354, %v5348
    %v5469 = vpack.c.b16 %v5355, %v5349
    %v5470 = vpack.c.b16 %v5362, %v5356
    %v5471 = vpack.c.b16 %v5363, %v5357
    %v5472 = vpack.c.b16 %v5364, %v5358
    %v5473 = vpack.c.b16 %v5365, %v5359
    %v5474 = vpack.c.b16 %v5366, %v5360
    %v5475 = vpack.c.b16 %v5367, %v5361
    %v5476 = vpack.c.b16 %v5374, %v5368
    %v5477 = vpack.c.b16 %v5375, %v5369
    %v5478 = vpack.c.b16 %v5376, %v5370
    %v5479 = vpack.c.b16 %v5377, %v5371
    %v5480 = vpack.c.b16 %v5378, %v5372
    %v5481 = vpack.c.b16 %v5379, %v5373
    %v5482 = vpack.c.b16 %v5386, %v5380
    %v5483 = vpack.c.b16 %v5387, %v5381
    %v5484 = vpack.c.b16 %v5388, %v5382
    %v5485 = vpack.c.b16 %v5389, %v5383
    %v5486 = vpack.c.b16 %v5390, %v5384
    %v5487 = vpack.c.b16 %v5391, %v5385
    %5584 = vmatprep.subr.bf16.mxu0 %v5393
    %5585 = vmatpush1.bf16.msra.mxu0 %v5392
    %5586 = vmatprep.subr.bf16.mxu0 %v5399
    %5587 = vmatpush1.bf16.msra.mxu0 %v5398
    %5588 = vmatprep.subr.bf16.mxu0 %v5405
    %5589 = vmatpush1.bf16.msra.mxu0 %v5404
    %5590 = vmatprep.subr.bf16.mxu0 %v5411
    %5591 = vmatpush1.bf16.msra.mxu0 %v5410
    %5592 = vmatprep.subr.bf16.mxu0 %v5417
    %5593 = vmatpush1.bf16.msra.mxu0 %v5416
    %5594 = vmatprep.subr.bf16.mxu0 %v5423
    %5595 = vmatpush1.bf16.msra.mxu0 %v5422
    %5596 = vmatprep.subr.bf16.mxu0 %v5429
    %5597 = vmatpush1.bf16.msra.mxu0 %v5428
    %5598 = vmatprep.subr.bf16.mxu0 %v5435
    %5599 = vmatpush1.bf16.msra.mxu0 %v5434
    %5600 = vmatprep.subr.bf16.mxu0 %v5441
    %5601 = vmatpush1.bf16.msra.mxu0 %v5440
    %5602 = vmatprep.subr.bf16.mxu0 %v5447
    %5603 = vmatpush1.bf16.msra.mxu0 %v5446
    %5604 = vmatprep.subr.bf16.mxu0 %v5453
    %5605 = vmatpush1.bf16.msra.mxu0 %v5452
    %5606 = vmatprep.subr.bf16.mxu0 %v5459
    %5607 = vmatpush1.bf16.msra.mxu0 %v5458
    %5608 = vmatprep.subr.bf16.mxu0 %v5465
    %5609 = vmatpush1.bf16.msra.mxu0 %v5464
    %5610 = vmatprep.subr.bf16.mxu0 %v5471
    %5611 = vmatpush1.bf16.msra.mxu0 %v5470
    %5612 = vmatprep.subr.bf16.mxu0 %v5477
    %5613 = vmatpush1.bf16.msra.mxu0 %v5476
    %5614 = vmatprep.subr.bf16.mxu0 %v5483
    %5615 = vmatpush1.bf16.msra.mxu0 %v5482
    %5616 = vmatprep.mubr.bf16.mxu0 %v5007
    %5617 = vmatmul.mubr.bf16.gmra.mrb[0].mxu0 %v5006
    %v5618 = vpop.f32.mrb[0].mxu0
    %v5619 = vadd.f32 0.0, %v5618
    %v5620 = vpop.f32.mrb[0].mxu0
    %v5621 = vadd.f32 0.0, %v5620
    %v5622 = vpop.f32.mrb[0].mxu0
    %v5623 = vpop.f32.mrb[0].mxu0
    %5624 = vdwg.mxu0
    %5625 = vmatprep.subr.bf16.mxu0 %v5395
    %5626 = vmatpush1.bf16.msra.mxu0 %v5394
    %5627 = vmatprep.subr.bf16.mxu0 %v5401
    %5628 = vmatpush1.bf16.msra.mxu0 %v5400
    %5629 = vmatprep.subr.bf16.mxu0 %v5407
    %5630 = vmatpush1.bf16.msra.mxu0 %v5406
    %5631 = vmatprep.subr.bf16.mxu0 %v5413
    %5632 = vmatpush1.bf16.msra.mxu0 %v5412
    %5633 = vmatprep.subr.bf16.mxu0 %v5419
    %5634 = vmatpush1.bf16.msra.mxu0 %v5418
    %5635 = vmatprep.subr.bf16.mxu0 %v5425
    %5636 = vmatpush1.bf16.msra.mxu0 %v5424
    %5637 = vmatprep.subr.bf16.mxu0 %v5431
    %5638 = vmatpush1.bf16.msra.mxu0 %v5430
    %5639 = vmatprep.subr.bf16.mxu0 %v5437
    %5640 = vmatpush1.bf16.msra.mxu0 %v5436
    %5641 = vmatprep.subr.bf16.mxu0 %v5443
    %5642 = vmatpush1.bf16.msra.mxu0 %v5442
    %5643 = vmatprep.subr.bf16.mxu0 %v5449
    %5644 = vmatpush1.bf16.msra.mxu0 %v5448
    %5645 = vmatprep.subr.bf16.mxu0 %v5455
    %5646 = vmatpush1.bf16.msra.mxu0 %v5454
    %5647 = vmatprep.subr.bf16.mxu0 %v5461
    %5648 = vmatpush1.bf16.msra.mxu0 %v5460
    %5649 = vmatprep.subr.bf16.mxu0 %v5467
    %5650 = vmatpush1.bf16.msra.mxu0 %v5466
    %5651 = vmatprep.subr.bf16.mxu0 %v5473
    %5652 = vmatpush1.bf16.msra.mxu0 %v5472
    %5653 = vmatprep.subr.bf16.mxu0 %v5479
    %5654 = vmatpush1.bf16.msra.mxu0 %v5478
    %5655 = vmatprep.subr.bf16.mxu0 %v5485
    %5656 = vmatpush1.bf16.msra.mxu0 %v5484
    %5657 = vmatprep.mubr.bf16.mxu0 %v5007
    %5658 = vmatmul.mubr.bf16.gmra.mrb[0].mxu0 %v5006
    %v5659 = vpop.f32.mrb[0].mxu0
    %v5660 = vadd.f32 0.0, %v5659
    %v5661 = vpop.f32.mrb[0].mxu0
    %v5662 = vadd.f32 0.0, %v5661
    %v5663 = vpop.f32.mrb[0].mxu0
    %v5664 = vpop.f32.mrb[0].mxu0
    %5665 = vdwg.mxu0
    %5666 = vmatprep.subr.bf16.mxu0 %v5397
    %5667 = vmatpush1.bf16.msra.mxu0 %v5396
    %5668 = vmatprep.subr.bf16.mxu0 %v5403
    %5669 = vmatpush1.bf16.msra.mxu0 %v5402
    %5670 = vmatprep.subr.bf16.mxu0 %v5409
    %5671 = vmatpush1.bf16.msra.mxu0 %v5408
    %5672 = vmatprep.subr.bf16.mxu0 %v5415
    %5673 = vmatpush1.bf16.msra.mxu0 %v5414
    %5674 = vmatprep.subr.bf16.mxu0 %v5421
    %5675 = vmatpush1.bf16.msra.mxu0 %v5420
    %5676 = vmatprep.subr.bf16.mxu0 %v5427
    %5677 = vmatpush1.bf16.msra.mxu0 %v5426
    %5678 = vmatprep.subr.bf16.mxu0 %v5433
    %5679 = vmatpush1.bf16.msra.mxu0 %v5432
    %5680 = vmatprep.subr.bf16.mxu0 %v5439
    %5681 = vmatpush1.bf16.msra.mxu0 %v5438
    %5682 = vmatprep.subr.bf16.mxu0 %v5445
    %5683 = vmatpush1.bf16.msra.mxu0 %v5444
    %5684 = vmatprep.subr.bf16.mxu0 %v5451
    %5685 = vmatpush1.bf16.msra.mxu0 %v5450
    %5686 = vmatprep.subr.bf16.mxu0 %v5457
    %5687 = vmatpush1.bf16.msra.mxu0 %v5456
    %5688 = vmatprep.subr.bf16.mxu0 %v5463
    %5689 = vmatpush1.bf16.msra.mxu0 %v5462
    %5690 = vmatprep.subr.bf16.mxu0 %v5469
    %5691 = vmatpush1.bf16.msra.mxu0 %v5468
    %5692 = vmatprep.subr.bf16.mxu0 %v5475
    %5693 = vmatpush1.bf16.msra.mxu0 %v5474
    %5694 = vmatprep.subr.bf16.mxu0 %v5481
    %5695 = vmatpush1.bf16.msra.mxu0 %v5480
    %5696 = vmatprep.subr.bf16.mxu0 %v5487
    %5697 = vmatpush1.bf16.msra.mxu0 %v5486
    %5698 = vmatprep.mubr.bf16.mxu0 %v5007
    %5699 = vmatmul.mubr.bf16.gmra.mrb[0].mxu0 %v5006
    %v5700 = vpop.f32.mrb[0].mxu0
    %v5701 = vadd.f32 0.0, %v5700
    %v5702 = vpop.f32.mrb[0].mxu0
    %v5703 = vadd.f32 0.0, %v5702
    %v5704 = vpop.f32.mrb[0].mxu0
    %v5705 = vpop.f32.mrb[0].mxu0
    %5706 = vdwg.mxu0
    %v5711 = vcombine.low %v5619, %v5621
    %v5712 = vcombine.low %v5660, %v5662
    %v5714 = vunpack.c.l.s4 1966171168
    %v5715 = vunpack.c.0.s8 %v5714
    %v5716 = vlaneseq
    %v5717 = vshrl.u32 %v5716, 7
    %v5718 = vsub.s32 %v5715, %v5717
    %v5719 = vrot.slane %v5711, %v5718
    %v5721 = vunpack.c.l.s4 1966171168
    %v5722 = vunpack.c.0.s8 %v5721
    %v5723 = vlaneseq
    %v5724 = vshrl.u32 %v5723, 7
    %v5725 = vsub.s32 %v5722, %v5724
    %v5726 = vrot.slane %v5712, %v5725
    %v5727 = vcombine.low %v5719, %v5726
    %v5729 = vunpack.c.l.s4 1966171168
    %v5730 = vunpack.c.0.s8 %v5729
    %v5731 = vlaneseq
    %v5732 = vshrl.u32 %v5731, 7
    %v5733 = vsub.s32 %v5730, %v5732
    %v5734 = vrot.slane %v5727, %v5733
    %v5736 = vadd.f32 %v4994, %v5734
    %v5737 = vxor.u32 %v5736, 2147483648
    %v5738 = vmul.f32 %v5737, 1.442695
    %v5739 = vpow.pop %v5738
    %v5740 = vadd.f32 %v5739, 1.0
    %v5741 = vrcp.pop %v5740
    %v5742 = vmul.f32 1.0, %v5741
    %v5743 = vadd.f32 %v5701, %v1011
    %v5744 = vadd.f32 %v5703, %v1015
    %v5747 = vcombine.low %v5743, %v5744
    %v5749 = vunpack.c.l.s4 1966171168
    %v5750 = vunpack.c.0.s8 %v5749
    %v5751 = vlaneseq
    %v5752 = vshrl.u32 %v5751, 7
    %v5753 = vsub.s32 %v5750, %v5752
    %v5754 = vrot.slane %v5747, %v5753
    %v5756 = vunpack.c.l.s4 1966171168
    %v5757 = vunpack.c.0.s8 %v5756
    %v5758 = vlaneseq
    %v5759 = vshrl.u32 %v5758, 7
    %v5760 = vsub.s32 %v5757, %v5759
    %v5761 = vrot.slane %v5754, %v5760
    %v5763 = vmul.f32 %v5742, %v5761
    %v5765 = vrot.slane %v4994, 4
    %v5767 = vadd.f32 %v5765, %v5763
    %v5768 = vtanh.pop %v5767
    %v5769 = vsub.f32 %v4987, %v5768
    %v5771 = vrot.slane %v5742, 2
    %v5773 = vmul.f32 %v5771, %v5769
    %v5774 = vadd.f32 %v5768, %v5773
    %s5775 = scalar_lea.vmem %s7, 6
    %5776 = vst.msk [vmem:[%s5775] ss:$8 sm:$0x3] %vm1053, %v5774
    %5777 = vst.msk [vmem:[%s5775] ss:$8 sm:$0x0] %vm1053, %v5774
    %s5778 = scalar_lea.vmem [#allocation2], 7
    %v5779 = vld [vmem:[%s5778] ss:$8 sm:$0xf]
    %v5780 = vld [vmem:[%s5778] ss:$8 sm:$0x30]
    %v5781 = vor.u32 %v5779, %v5780
    %v5783 = vlaneseq
    %v5784 = vshrl.u32 %v5783, 7
    %v5785 = vsub.s32 0, %v5784
    %v5786 = vrot.slane %v5774, %v5785
    %v5787 = vlaneseq
    %v5788 = vshrl.u32 %v5787, 7
    %v5789 = vsub.s32 1, %v5788
    %v5790 = vrot.slane %v5774, %v5789
    %v5793 = vpack.c.bf16 %v5786, %v5786
    %v5794 = vpack.c.bf16 %v5790, %v5790
    %v5795 = vld [vmem:[%s3] sm:$0xff]
    %v5796 = vld [vmem:[%s3 + $0x8] sm:$0xff]
    %v5797 = vld [vmem:[%s3 + $0x10] sm:$0xff]
    %v5798 = vld [vmem:[%s3 + $0x18] sm:$0xff]
    %v5799 = vld [vmem:[%s3 + $0x20] sm:$0xff]
    %v5800 = vld [vmem:[%s3 + $0x28] sm:$0xff]
    %v5801 = vld [vmem:[%s3 + $0x30] sm:$0xff]
    %v5802 = vld [vmem:[%s3 + $0x38] sm:$0xff]
    %v5803 = vld [vmem:[%s3 + $0x40] sm:$0xff]
    %v5804 = vld [vmem:[%s3 + $0x48] sm:$0xff]
    %v5805 = vld [vmem:[%s3 + $0x50] sm:$0xff]
    %v5806 = vld [vmem:[%s3 + $0x58] sm:$0xff]
    %v5807 = vld [vmem:[%s3 + $0x60] sm:$0xff]
    %v5808 = vld [vmem:[%s3 + $0x68] sm:$0xff]
    %v5809 = vld [vmem:[%s3 + $0x70] sm:$0xff]
    %v5810 = vld [vmem:[%s3 + $0x78] sm:$0xff]
    %v5811 = vld [vmem:[%s3 + $0x80] sm:$0xff]
    %v5812 = vld [vmem:[%s3 + $0x88] sm:$0xff]
    %v5813 = vld [vmem:[%s3 + $0x90] sm:$0xff]
    %v5814 = vld [vmem:[%s3 + $0x98] sm:$0xff]
    %v5815 = vld [vmem:[%s3 + $0xa0] sm:$0xff]
    %v5816 = vld [vmem:[%s3 + $0xa8] sm:$0xff]
    %v5817 = vld [vmem:[%s3 + $0xb0] sm:$0xff]
    %v5818 = vld [vmem:[%s3 + $0xb8] sm:$0xff]
    %v5819 = vld [vmem:[%s3 + $0xc0] sm:$0xff]
    %v5820 = vld [vmem:[%s3 + $0xc8] sm:$0xff]
    %v5821 = vld [vmem:[%s3 + $0xd0] sm:$0xff]
    %v5822 = vld [vmem:[%s3 + $0xd8] sm:$0xff]
    %v5823 = vld [vmem:[%s3 + $0xe0] sm:$0xff]
    %v5824 = vld [vmem:[%s3 + $0xe8] sm:$0xff]
    %v5825 = vld [vmem:[%s3 + $0xf0] sm:$0xff]
    %v5826 = vld [vmem:[%s3 + $0xf8] sm:$0xff]
    %v5827 = vld [vmem:[%s3 + $0x100] sm:$0xff]
    %v5828 = vld [vmem:[%s3 + $0x108] sm:$0xff]
    %v5829 = vld [vmem:[%s3 + $0x110] sm:$0xff]
    %v5830 = vld [vmem:[%s3 + $0x118] sm:$0xff]
    %v5831 = vld [vmem:[%s3 + $0x120] sm:$0xff]
    %v5832 = vld [vmem:[%s3 + $0x128] sm:$0xff]
    %v5833 = vld [vmem:[%s3 + $0x130] sm:$0xff]
    %v5834 = vld [vmem:[%s3 + $0x138] sm:$0xff]
    %v5835 = vld [vmem:[%s3 + $0x140] sm:$0xff]
    %v5836 = vld [vmem:[%s3 + $0x148] sm:$0xff]
    %v5837 = vld [vmem:[%s3 + $0x150] sm:$0xff]
    %v5838 = vld [vmem:[%s3 + $0x158] sm:$0xff]
    %v5839 = vld [vmem:[%s3 + $0x160] sm:$0xff]
    %v5840 = vld [vmem:[%s3 + $0x168] sm:$0xff]
    %v5841 = vld [vmem:[%s3 + $0x170] sm:$0xff]
    %v5842 = vld [vmem:[%s3 + $0x178] sm:$0xff]
    %v5843 = vld [vmem:[%s3 + $0x180] sm:$0xff]
    %v5844 = vld [vmem:[%s3 + $0x188] sm:$0xff]
    %v5845 = vld [vmem:[%s3 + $0x190] sm:$0xff]
    %v5846 = vld [vmem:[%s3 + $0x198] sm:$0xff]
    %v5847 = vld [vmem:[%s3 + $0x1a0] sm:$0xff]
    %v5848 = vld [vmem:[%s3 + $0x1a8] sm:$0xff]
    %v5849 = vld [vmem:[%s3 + $0x1b0] sm:$0xff]
    %v5850 = vld [vmem:[%s3 + $0x1b8] sm:$0xff]
    %v5851 = vld [vmem:[%s3 + $0x1c0] sm:$0xff]
    %v5852 = vld [vmem:[%s3 + $0x1c8] sm:$0xff]
    %v5853 = vld [vmem:[%s3 + $0x1d0] sm:$0xff]
    %v5854 = vld [vmem:[%s3 + $0x1d8] sm:$0xff]
    %v5855 = vld [vmem:[%s3 + $0x1e0] sm:$0xff]
    %v5856 = vld [vmem:[%s3 + $0x1e8] sm:$0xff]
    %v5857 = vld [vmem:[%s3 + $0x1f0] sm:$0xff]
    %v5858 = vld [vmem:[%s3 + $0x1f8] sm:$0xff]
    %v5859 = vld [vmem:[%s3 + $0x200] sm:$0xff]
    %v5860 = vld [vmem:[%s3 + $0x208] sm:$0xff]
    %v5861 = vld [vmem:[%s3 + $0x210] sm:$0xff]
    %v5862 = vld [vmem:[%s3 + $0x218] sm:$0xff]
    %v5863 = vld [vmem:[%s3 + $0x220] sm:$0xff]
    %v5864 = vld [vmem:[%s3 + $0x228] sm:$0xff]
    %v5865 = vld [vmem:[%s3 + $0x230] sm:$0xff]
    %v5866 = vld [vmem:[%s3 + $0x238] sm:$0xff]
    %v5867 = vld [vmem:[%s3 + $0x240] sm:$0xff]
    %v5868 = vld [vmem:[%s3 + $0x248] sm:$0xff]
    %v5869 = vld [vmem:[%s3 + $0x250] sm:$0xff]
    %v5870 = vld [vmem:[%s3 + $0x258] sm:$0xff]
    %v5871 = vld [vmem:[%s3 + $0x260] sm:$0xff]
    %v5872 = vld [vmem:[%s3 + $0x268] sm:$0xff]
    %v5873 = vld [vmem:[%s3 + $0x270] sm:$0xff]
    %v5874 = vld [vmem:[%s3 + $0x278] sm:$0xff]
    %v5875 = vld [vmem:[%s3 + $0x280] sm:$0xff]
    %v5876 = vld [vmem:[%s3 + $0x288] sm:$0xff]
    %v5877 = vld [vmem:[%s3 + $0x290] sm:$0xff]
    %v5878 = vld [vmem:[%s3 + $0x298] sm:$0xff]
    %v5879 = vld [vmem:[%s3 + $0x2a0] sm:$0xff]
    %v5880 = vld [vmem:[%s3 + $0x2a8] sm:$0xff]
    %v5881 = vld [vmem:[%s3 + $0x2b0] sm:$0xff]
    %v5882 = vld [vmem:[%s3 + $0x2b8] sm:$0xff]
    %v5883 = vld [vmem:[%s3 + $0x2c0] sm:$0xff]
    %v5884 = vld [vmem:[%s3 + $0x2c8] sm:$0xff]
    %v5885 = vld [vmem:[%s3 + $0x2d0] sm:$0xff]
    %v5886 = vld [vmem:[%s3 + $0x2d8] sm:$0xff]
    %v5887 = vld [vmem:[%s3 + $0x2e0] sm:$0xff]
    %v5888 = vld [vmem:[%s3 + $0x2e8] sm:$0xff]
    %v5889 = vld [vmem:[%s3 + $0x2f0] sm:$0xff]
    %v5890 = vld [vmem:[%s3 + $0x2f8] sm:$0xff]
    %v5987 = vunpack.c.l.b16 %v5795
    %v5988 = vunpack.c.h.b16 %v5795
    %v5989 = vunpack.c.l.b16 %v5796
    %v5990 = vunpack.c.h.b16 %v5796
    %v5991 = vunpack.c.l.b16 %v5797
    %v5992 = vunpack.c.h.b16 %v5797
    %v5993 = vunpack.c.l.b16 %v5798
    %v5994 = vunpack.c.h.b16 %v5798
    %v5995 = vunpack.c.l.b16 %v5799
    %v5996 = vunpack.c.h.b16 %v5799
    %v5997 = vunpack.c.l.b16 %v5800
    %v5998 = vunpack.c.h.b16 %v5800
    %v5999 = vunpack.c.l.b16 %v5801
    %v6000 = vunpack.c.h.b16 %v5801
    %v6001 = vunpack.c.l.b16 %v5802
    %v6002 = vunpack.c.h.b16 %v5802
    %v6003 = vunpack.c.l.b16 %v5803
    %v6004 = vunpack.c.h.b16 %v5803
    %v6005 = vunpack.c.l.b16 %v5804
    %v6006 = vunpack.c.h.b16 %v5804
    %v6007 = vunpack.c.l.b16 %v5805
    %v6008 = vunpack.c.h.b16 %v5805
    %v6009 = vunpack.c.l.b16 %v5806
    %v6010 = vunpack.c.h.b16 %v5806
    %v6011 = vunpack.c.l.b16 %v5807
    %v6012 = vunpack.c.h.b16 %v5807
    %v6013 = vunpack.c.l.b16 %v5808
    %v6014 = vunpack.c.h.b16 %v5808
    %v6015 = vunpack.c.l.b16 %v5809
    %v6016 = vunpack.c.h.b16 %v5809
    %v6017 = vunpack.c.l.b16 %v5810
    %v6018 = vunpack.c.h.b16 %v5810
    %v6019 = vunpack.c.l.b16 %v5811
    %v6020 = vunpack.c.h.b16 %v5811
    %v6021 = vunpack.c.l.b16 %v5812
    %v6022 = vunpack.c.h.b16 %v5812
    %v6023 = vunpack.c.l.b16 %v5813
    %v6024 = vunpack.c.h.b16 %v5813
    %v6025 = vunpack.c.l.b16 %v5814
    %v6026 = vunpack.c.h.b16 %v5814
    %v6027 = vunpack.c.l.b16 %v5815
    %v6028 = vunpack.c.h.b16 %v5815
    %v6029 = vunpack.c.l.b16 %v5816
    %v6030 = vunpack.c.h.b16 %v5816
    %v6031 = vunpack.c.l.b16 %v5817
    %v6032 = vunpack.c.h.b16 %v5817
    %v6033 = vunpack.c.l.b16 %v5818
    %v6034 = vunpack.c.h.b16 %v5818
    %v6035 = vunpack.c.l.b16 %v5819
    %v6036 = vunpack.c.h.b16 %v5819
    %v6037 = vunpack.c.l.b16 %v5820
    %v6038 = vunpack.c.h.b16 %v5820
    %v6039 = vunpack.c.l.b16 %v5821
    %v6040 = vunpack.c.h.b16 %v5821
    %v6041 = vunpack.c.l.b16 %v5822
    %v6042 = vunpack.c.h.b16 %v5822
    %v6043 = vunpack.c.l.b16 %v5823
    %v6044 = vunpack.c.h.b16 %v5823
    %v6045 = vunpack.c.l.b16 %v5824
    %v6046 = vunpack.c.h.b16 %v5824
    %v6047 = vunpack.c.l.b16 %v5825
    %v6048 = vunpack.c.h.b16 %v5825
    %v6049 = vunpack.c.l.b16 %v5826
    %v6050 = vunpack.c.h.b16 %v5826
    %v6051 = vunpack.c.l.b16 %v5827
    %v6052 = vunpack.c.h.b16 %v5827
    %v6053 = vunpack.c.l.b16 %v5828
    %v6054 = vunpack.c.h.b16 %v5828
    %v6055 = vunpack.c.l.b16 %v5829
    %v6056 = vunpack.c.h.b16 %v5829
    %v6057 = vunpack.c.l.b16 %v5830
    %v6058 = vunpack.c.h.b16 %v5830
    %v6059 = vunpack.c.l.b16 %v5831
    %v6060 = vunpack.c.h.b16 %v5831
    %v6061 = vunpack.c.l.b16 %v5832
    %v6062 = vunpack.c.h.b16 %v5832
    %v6063 = vunpack.c.l.b16 %v5833
    %v6064 = vunpack.c.h.b16 %v5833
    %v6065 = vunpack.c.l.b16 %v5834
    %v6066 = vunpack.c.h.b16 %v5834
    %v6067 = vunpack.c.l.b16 %v5835
    %v6068 = vunpack.c.h.b16 %v5835
    %v6069 = vunpack.c.l.b16 %v5836
    %v6070 = vunpack.c.h.b16 %v5836
    %v6071 = vunpack.c.l.b16 %v5837
    %v6072 = vunpack.c.h.b16 %v5837
    %v6073 = vunpack.c.l.b16 %v5838
    %v6074 = vunpack.c.h.b16 %v5838
    %v6075 = vunpack.c.l.b16 %v5839
    %v6076 = vunpack.c.h.b16 %v5839
    %v6077 = vunpack.c.l.b16 %v5840
    %v6078 = vunpack.c.h.b16 %v5840
    %v6079 = vunpack.c.l.b16 %v5841
    %v6080 = vunpack.c.h.b16 %v5841
    %v6081 = vunpack.c.l.b16 %v5842
    %v6082 = vunpack.c.h.b16 %v5842
    %v6083 = vunpack.c.l.b16 %v5843
    %v6084 = vunpack.c.h.b16 %v5843
    %v6085 = vunpack.c.l.b16 %v5844
    %v6086 = vunpack.c.h.b16 %v5844
    %v6087 = vunpack.c.l.b16 %v5845
    %v6088 = vunpack.c.h.b16 %v5845
    %v6089 = vunpack.c.l.b16 %v5846
    %v6090 = vunpack.c.h.b16 %v5846
    %v6091 = vunpack.c.l.b16 %v5847
    %v6092 = vunpack.c.h.b16 %v5847
    %v6093 = vunpack.c.l.b16 %v5848
    %v6094 = vunpack.c.h.b16 %v5848
    %v6095 = vunpack.c.l.b16 %v5849
    %v6096 = vunpack.c.h.b16 %v5849
    %v6097 = vunpack.c.l.b16 %v5850
    %v6098 = vunpack.c.h.b16 %v5850
    %v6099 = vunpack.c.l.b16 %v5851
    %v6100 = vunpack.c.h.b16 %v5851
    %v6101 = vunpack.c.l.b16 %v5852
    %v6102 = vunpack.c.h.b16 %v5852
    %v6103 = vunpack.c.l.b16 %v5853
    %v6104 = vunpack.c.h.b16 %v5853
    %v6105 = vunpack.c.l.b16 %v5854
    %v6106 = vunpack.c.h.b16 %v5854
    %v6107 = vunpack.c.l.b16 %v5855
    %v6108 = vunpack.c.h.b16 %v5855
    %v6109 = vunpack.c.l.b16 %v5856
    %v6110 = vunpack.c.h.b16 %v5856
    %v6111 = vunpack.c.l.b16 %v5857
    %v6112 = vunpack.c.h.b16 %v5857
    %v6113 = vunpack.c.l.b16 %v5858
    %v6114 = vunpack.c.h.b16 %v5858
    %v6115 = vunpack.c.l.b16 %v5859
    %v6116 = vunpack.c.h.b16 %v5859
    %v6117 = vunpack.c.l.b16 %v5860
    %v6118 = vunpack.c.h.b16 %v5860
    %v6119 = vunpack.c.l.b16 %v5861
    %v6120 = vunpack.c.h.b16 %v5861
    %v6121 = vunpack.c.l.b16 %v5862
    %v6122 = vunpack.c.h.b16 %v5862
    %v6123 = vunpack.c.l.b16 %v5863
    %v6124 = vunpack.c.h.b16 %v5863
    %v6125 = vunpack.c.l.b16 %v5864
    %v6126 = vunpack.c.h.b16 %v5864
    %v6127 = vunpack.c.l.b16 %v5865
    %v6128 = vunpack.c.h.b16 %v5865
    %v6129 = vunpack.c.l.b16 %v5866
    %v6130 = vunpack.c.h.b16 %v5866
    %v6131 = vunpack.c.l.b16 %v5867
    %v6132 = vunpack.c.h.b16 %v5867
    %v6133 = vunpack.c.l.b16 %v5868
    %v6134 = vunpack.c.h.b16 %v5868
    %v6135 = vunpack.c.l.b16 %v5869
    %v6136 = vunpack.c.h.b16 %v5869
    %v6137 = vunpack.c.l.b16 %v5870
    %v6138 = vunpack.c.h.b16 %v5870
    %v6139 = vunpack.c.l.b16 %v5871
    %v6140 = vunpack.c.h.b16 %v5871
    %v6141 = vunpack.c.l.b16 %v5872
    %v6142 = vunpack.c.h.b16 %v5872
    %v6143 = vunpack.c.l.b16 %v5873
    %v6144 = vunpack.c.h.b16 %v5873
    %v6145 = vunpack.c.l.b16 %v5874
    %v6146 = vunpack.c.h.b16 %v5874
    %v6147 = vunpack.c.l.b16 %v5875
    %v6148 = vunpack.c.h.b16 %v5875
    %v6149 = vunpack.c.l.b16 %v5876
    %v6150 = vunpack.c.h.b16 %v5876
    %v6151 = vunpack.c.l.b16 %v5877
    %v6152 = vunpack.c.h.b16 %v5877
    %v6153 = vunpack.c.l.b16 %v5878
    %v6154 = vunpack.c.h.b16 %v5878
    %v6155 = vunpack.c.l.b16 %v5879
    %v6156 = vunpack.c.h.b16 %v5879
    %v6157 = vunpack.c.l.b16 %v5880
    %v6158 = vunpack.c.h.b16 %v5880
    %v6159 = vunpack.c.l.b16 %v5881
    %v6160 = vunpack.c.h.b16 %v5881
    %v6161 = vunpack.c.l.b16 %v5882
    %v6162 = vunpack.c.h.b16 %v5882
    %v6163 = vunpack.c.l.b16 %v5883
    %v6164 = vunpack.c.h.b16 %v5883
    %v6165 = vunpack.c.l.b16 %v5884
    %v6166 = vunpack.c.h.b16 %v5884
    %v6167 = vunpack.c.l.b16 %v5885
    %v6168 = vunpack.c.h.b16 %v5885
    %v6169 = vunpack.c.l.b16 %v5886
    %v6170 = vunpack.c.h.b16 %v5886
    %v6171 = vunpack.c.l.b16 %v5887
    %v6172 = vunpack.c.h.b16 %v5887
    %v6173 = vunpack.c.l.b16 %v5888
    %v6174 = vunpack.c.h.b16 %v5888
    %v6175 = vunpack.c.l.b16 %v5889
    %v6176 = vunpack.c.h.b16 %v5889
    %v6177 = vunpack.c.l.b16 %v5890
    %v6178 = vunpack.c.h.b16 %v5890
    %v6179 = vpack.c.b16 %v5993, %v5987
    %v6180 = vpack.c.b16 %v5994, %v5988
    %v6181 = vpack.c.b16 %v5995, %v5989
    %v6182 = vpack.c.b16 %v5996, %v5990
    %v6183 = vpack.c.b16 %v5997, %v5991
    %v6184 = vpack.c.b16 %v5998, %v5992
    %v6185 = vpack.c.b16 %v6005, %v5999
    %v6186 = vpack.c.b16 %v6006, %v6000
    %v6187 = vpack.c.b16 %v6007, %v6001
    %v6188 = vpack.c.b16 %v6008, %v6002
    %v6189 = vpack.c.b16 %v6009, %v6003
    %v6190 = vpack.c.b16 %v6010, %v6004
    %v6191 = vpack.c.b16 %v6017, %v6011
    %v6192 = vpack.c.b16 %v6018, %v6012
    %v6193 = vpack.c.b16 %v6019, %v6013
    %v6194 = vpack.c.b16 %v6020, %v6014
    %v6195 = vpack.c.b16 %v6021, %v6015
    %v6196 = vpack.c.b16 %v6022, %v6016
    %v6197 = vpack.c.b16 %v6029, %v6023
    %v6198 = vpack.c.b16 %v6030, %v6024
    %v6199 = vpack.c.b16 %v6031, %v6025
    %v6200 = vpack.c.b16 %v6032, %v6026
    %v6201 = vpack.c.b16 %v6033, %v6027
    %v6202 = vpack.c.b16 %v6034, %v6028
    %v6203 = vpack.c.b16 %v6041, %v6035
    %v6204 = vpack.c.b16 %v6042, %v6036
    %v6205 = vpack.c.b16 %v6043, %v6037
    %v6206 = vpack.c.b16 %v6044, %v6038
    %v6207 = vpack.c.b16 %v6045, %v6039
    %v6208 = vpack.c.b16 %v6046, %v6040
    %v6209 = vpack.c.b16 %v6053, %v6047
    %v6210 = vpack.c.b16 %v6054, %v6048
    %v6211 = vpack.c.b16 %v6055, %v6049
    %v6212 = vpack.c.b16 %v6056, %v6050
    %v6213 = vpack.c.b16 %v6057, %v6051
    %v6214 = vpack.c.b16 %v6058, %v6052
    %v6215 = vpack.c.b16 %v6065, %v6059
    %v6216 = vpack.c.b16 %v6066, %v6060
    %v6217 = vpack.c.b16 %v6067, %v6061
    %v6218 = vpack.c.b16 %v6068, %v6062
    %v6219 = vpack.c.b16 %v6069, %v6063
    %v6220 = vpack.c.b16 %v6070, %v6064
    %v6221 = vpack.c.b16 %v6077, %v6071
    %v6222 = vpack.c.b16 %v6078, %v6072
    %v6223 = vpack.c.b16 %v6079, %v6073
    %v6224 = vpack.c.b16 %v6080, %v6074
    %v6225 = vpack.c.b16 %v6081, %v6075
    %v6226 = vpack.c.b16 %v6082, %v6076
    %v6227 = vpack.c.b16 %v6089, %v6083
    %v6228 = vpack.c.b16 %v6090, %v6084
    %v6229 = vpack.c.b16 %v6091, %v6085
    %v6230 = vpack.c.b16 %v6092, %v6086
    %v6231 = vpack.c.b16 %v6093, %v6087
    %v6232 = vpack.c.b16 %v6094, %v6088
    %v6233 = vpack.c.b16 %v6101, %v6095
    %v6234 = vpack.c.b16 %v6102, %v6096
    %v6235 = vpack.c.b16 %v6103, %v6097
    %v6236 = vpack.c.b16 %v6104, %v6098
    %v6237 = vpack.c.b16 %v6105, %v6099
    %v6238 = vpack.c.b16 %v6106, %v6100
    %v6239 = vpack.c.b16 %v6113, %v6107
    %v6240 = vpack.c.b16 %v6114, %v6108
    %v6241 = vpack.c.b16 %v6115, %v6109
    %v6242 = vpack.c.b16 %v6116, %v6110
    %v6243 = vpack.c.b16 %v6117, %v6111
    %v6244 = vpack.c.b16 %v6118, %v6112
    %v6245 = vpack.c.b16 %v6125, %v6119
    %v6246 = vpack.c.b16 %v6126, %v6120
    %v6247 = vpack.c.b16 %v6127, %v6121
    %v6248 = vpack.c.b16 %v6128, %v6122
    %v6249 = vpack.c.b16 %v6129, %v6123
    %v6250 = vpack.c.b16 %v6130, %v6124
    %v6251 = vpack.c.b16 %v6137, %v6131
    %v6252 = vpack.c.b16 %v6138, %v6132
    %v6253 = vpack.c.b16 %v6139, %v6133
    %v6254 = vpack.c.b16 %v6140, %v6134
    %v6255 = vpack.c.b16 %v6141, %v6135
    %v6256 = vpack.c.b16 %v6142, %v6136
    %v6257 = vpack.c.b16 %v6149, %v6143
    %v6258 = vpack.c.b16 %v6150, %v6144
    %v6259 = vpack.c.b16 %v6151, %v6145
    %v6260 = vpack.c.b16 %v6152, %v6146
    %v6261 = vpack.c.b16 %v6153, %v6147
    %v6262 = vpack.c.b16 %v6154, %v6148
    %v6263 = vpack.c.b16 %v6161, %v6155
    %v6264 = vpack.c.b16 %v6162, %v6156
    %v6265 = vpack.c.b16 %v6163, %v6157
    %v6266 = vpack.c.b16 %v6164, %v6158
    %v6267 = vpack.c.b16 %v6165, %v6159
    %v6268 = vpack.c.b16 %v6166, %v6160
    %v6269 = vpack.c.b16 %v6173, %v6167
    %v6270 = vpack.c.b16 %v6174, %v6168
    %v6271 = vpack.c.b16 %v6175, %v6169
    %v6272 = vpack.c.b16 %v6176, %v6170
    %v6273 = vpack.c.b16 %v6177, %v6171
    %v6274 = vpack.c.b16 %v6178, %v6172
    %6371 = vmatprep.subr.bf16.mxu0 %v6180
    %6372 = vmatpush1.bf16.msra.mxu0 %v6179
    %6373 = vmatprep.subr.bf16.mxu0 %v6186
    %6374 = vmatpush1.bf16.msra.mxu0 %v6185
    %6375 = vmatprep.subr.bf16.mxu0 %v6192
    %6376 = vmatpush1.bf16.msra.mxu0 %v6191
    %6377 = vmatprep.subr.bf16.mxu0 %v6198
    %6378 = vmatpush1.bf16.msra.mxu0 %v6197
    %6379 = vmatprep.subr.bf16.mxu0 %v6204
    %6380 = vmatpush1.bf16.msra.mxu0 %v6203
    %6381 = vmatprep.subr.bf16.mxu0 %v6210
    %6382 = vmatpush1.bf16.msra.mxu0 %v6209
    %6383 = vmatprep.subr.bf16.mxu0 %v6216
    %6384 = vmatpush1.bf16.msra.mxu0 %v6215
    %6385 = vmatprep.subr.bf16.mxu0 %v6222
    %6386 = vmatpush1.bf16.msra.mxu0 %v6221
    %6387 = vmatprep.subr.bf16.mxu0 %v6228
    %6388 = vmatpush1.bf16.msra.mxu0 %v6227
    %6389 = vmatprep.subr.bf16.mxu0 %v6234
    %6390 = vmatpush1.bf16.msra.mxu0 %v6233
    %6391 = vmatprep.subr.bf16.mxu0 %v6240
    %6392 = vmatpush1.bf16.msra.mxu0 %v6239
    %6393 = vmatprep.subr.bf16.mxu0 %v6246
    %6394 = vmatpush1.bf16.msra.mxu0 %v6245
    %6395 = vmatprep.subr.bf16.mxu0 %v6252
    %6396 = vmatpush1.bf16.msra.mxu0 %v6251
    %6397 = vmatprep.subr.bf16.mxu0 %v6258
    %6398 = vmatpush1.bf16.msra.mxu0 %v6257
    %6399 = vmatprep.subr.bf16.mxu0 %v6264
    %6400 = vmatpush1.bf16.msra.mxu0 %v6263
    %6401 = vmatprep.subr.bf16.mxu0 %v6270
    %6402 = vmatpush1.bf16.msra.mxu0 %v6269
    %6403 = vmatprep.mubr.bf16.mxu0 %v5794
    %6404 = vmatmul.mubr.bf16.gmra.mrb[0].mxu0 %v5793
    %v6405 = vpop.f32.mrb[0].mxu0
    %v6406 = vadd.f32 0.0, %v6405
    %v6407 = vpop.f32.mrb[0].mxu0
    %v6408 = vadd.f32 0.0, %v6407
    %v6409 = vpop.f32.mrb[0].mxu0
    %v6410 = vpop.f32.mrb[0].mxu0
    %6411 = vdwg.mxu0
    %6412 = vmatprep.subr.bf16.mxu0 %v6182
    %6413 = vmatpush1.bf16.msra.mxu0 %v6181
    %6414 = vmatprep.subr.bf16.mxu0 %v6188
    %6415 = vmatpush1.bf16.msra.mxu0 %v6187
    %6416 = vmatprep.subr.bf16.mxu0 %v6194
    %6417 = vmatpush1.bf16.msra.mxu0 %v6193
    %6418 = vmatprep.subr.bf16.mxu0 %v6200
    %6419 = vmatpush1.bf16.msra.mxu0 %v6199
    %6420 = vmatprep.subr.bf16.mxu0 %v6206
    %6421 = vmatpush1.bf16.msra.mxu0 %v6205
    %6422 = vmatprep.subr.bf16.mxu0 %v6212
    %6423 = vmatpush1.bf16.msra.mxu0 %v6211
    %6424 = vmatprep.subr.bf16.mxu0 %v6218
    %6425 = vmatpush1.bf16.msra.mxu0 %v6217
    %6426 = vmatprep.subr.bf16.mxu0 %v6224
    %6427 = vmatpush1.bf16.msra.mxu0 %v6223
    %6428 = vmatprep.subr.bf16.mxu0 %v6230
    %6429 = vmatpush1.bf16.msra.mxu0 %v6229
    %6430 = vmatprep.subr.bf16.mxu0 %v6236
    %6431 = vmatpush1.bf16.msra.mxu0 %v6235
    %6432 = vmatprep.subr.bf16.mxu0 %v6242
    %6433 = vmatpush1.bf16.msra.mxu0 %v6241
    %6434 = vmatprep.subr.bf16.mxu0 %v6248
    %6435 = vmatpush1.bf16.msra.mxu0 %v6247
    %6436 = vmatprep.subr.bf16.mxu0 %v6254
    %6437 = vmatpush1.bf16.msra.mxu0 %v6253
    %6438 = vmatprep.subr.bf16.mxu0 %v6260
    %6439 = vmatpush1.bf16.msra.mxu0 %v6259
    %6440 = vmatprep.subr.bf16.mxu0 %v6266
    %6441 = vmatpush1.bf16.msra.mxu0 %v6265
    %6442 = vmatprep.subr.bf16.mxu0 %v6272
    %6443 = vmatpush1.bf16.msra.mxu0 %v6271
    %6444 = vmatprep.mubr.bf16.mxu0 %v5794
    %6445 = vmatmul.mubr.bf16.gmra.mrb[0].mxu0 %v5793
    %v6446 = vpop.f32.mrb[0].mxu0
    %v6447 = vadd.f32 0.0, %v6446
    %v6448 = vpop.f32.mrb[0].mxu0
    %v6449 = vadd.f32 0.0, %v6448
    %v6450 = vpop.f32.mrb[0].mxu0
    %v6451 = vpop.f32.mrb[0].mxu0
    %6452 = vdwg.mxu0
    %6453 = vmatprep.subr.bf16.mxu0 %v6184
    %6454 = vmatpush1.bf16.msra.mxu0 %v6183
    %6455 = vmatprep.subr.bf16.mxu0 %v6190
    %6456 = vmatpush1.bf16.msra.mxu0 %v6189
    %6457 = vmatprep.subr.bf16.mxu0 %v6196
    %6458 = vmatpush1.bf16.msra.mxu0 %v6195
    %6459 = vmatprep.subr.bf16.mxu0 %v6202
    %6460 = vmatpush1.bf16.msra.mxu0 %v6201
    %6461 = vmatprep.subr.bf16.mxu0 %v6208
    %6462 = vmatpush1.bf16.msra.mxu0 %v6207
    %6463 = vmatprep.subr.bf16.mxu0 %v6214
    %6464 = vmatpush1.bf16.msra.mxu0 %v6213
    %6465 = vmatprep.subr.bf16.mxu0 %v6220
    %6466 = vmatpush1.bf16.msra.mxu0 %v6219
    %6467 = vmatprep.subr.bf16.mxu0 %v6226
    %6468 = vmatpush1.bf16.msra.mxu0 %v6225
    %6469 = vmatprep.subr.bf16.mxu0 %v6232
    %6470 = vmatpush1.bf16.msra.mxu0 %v6231
    %6471 = vmatprep.subr.bf16.mxu0 %v6238
    %6472 = vmatpush1.bf16.msra.mxu0 %v6237
    %6473 = vmatprep.subr.bf16.mxu0 %v6244
    %6474 = vmatpush1.bf16.msra.mxu0 %v6243
    %6475 = vmatprep.subr.bf16.mxu0 %v6250
    %6476 = vmatpush1.bf16.msra.mxu0 %v6249
    %6477 = vmatprep.subr.bf16.mxu0 %v6256
    %6478 = vmatpush1.bf16.msra.mxu0 %v6255
    %6479 = vmatprep.subr.bf16.mxu0 %v6262
    %6480 = vmatpush1.bf16.msra.mxu0 %v6261
    %6481 = vmatprep.subr.bf16.mxu0 %v6268
    %6482 = vmatpush1.bf16.msra.mxu0 %v6267
    %6483 = vmatprep.subr.bf16.mxu0 %v6274
    %6484 = vmatpush1.bf16.msra.mxu0 %v6273
    %6485 = vmatprep.mubr.bf16.mxu0 %v5794
    %6486 = vmatmul.mubr.bf16.gmra.mrb[0].mxu0 %v5793
    %v6487 = vpop.f32.mrb[0].mxu0
    %v6488 = vadd.f32 0.0, %v6487
    %v6489 = vpop.f32.mrb[0].mxu0
    %v6490 = vadd.f32 0.0, %v6489
    %v6491 = vpop.f32.mrb[0].mxu0
    %v6492 = vpop.f32.mrb[0].mxu0
    %6493 = vdwg.mxu0
    %v6498 = vcombine.low %v6406, %v6408
    %v6499 = vcombine.low %v6447, %v6449
    %v6501 = vunpack.c.l.s4 1966171168
    %v6502 = vunpack.c.0.s8 %v6501
    %v6503 = vlaneseq
    %v6504 = vshrl.u32 %v6503, 7
    %v6505 = vsub.s32 %v6502, %v6504
    %v6506 = vrot.slane %v6498, %v6505
    %v6508 = vunpack.c.l.s4 1966171168
    %v6509 = vunpack.c.0.s8 %v6508
    %v6510 = vlaneseq
    %v6511 = vshrl.u32 %v6510, 7
    %v6512 = vsub.s32 %v6509, %v6511
    %v6513 = vrot.slane %v6499, %v6512
    %v6514 = vcombine.low %v6506, %v6513
    %v6516 = vunpack.c.l.s4 1966171168
    %v6517 = vunpack.c.0.s8 %v6516
    %v6518 = vlaneseq
    %v6519 = vshrl.u32 %v6518, 7
    %v6520 = vsub.s32 %v6517, %v6519
    %v6521 = vrot.slane %v6514, %v6520
    %v6523 = vadd.f32 %v5781, %v6521
    %v6524 = vxor.u32 %v6523, 2147483648
    %v6525 = vmul.f32 %v6524, 1.442695
    %v6526 = vpow.pop %v6525
    %v6527 = vadd.f32 %v6526, 1.0
    %v6528 = vrcp.pop %v6527
    %v6529 = vmul.f32 1.0, %v6528
    %v6530 = vadd.f32 %v6488, %v1011
    %v6531 = vadd.f32 %v6490, %v1015
    %v6534 = vcombine.low %v6530, %v6531
    %v6536 = vunpack.c.l.s4 1966171168
    %v6537 = vunpack.c.0.s8 %v6536
    %v6538 = vlaneseq
    %v6539 = vshrl.u32 %v6538, 7
    %v6540 = vsub.s32 %v6537, %v6539
    %v6541 = vrot.slane %v6534, %v6540
    %v6543 = vunpack.c.l.s4 1966171168
    %v6544 = vunpack.c.0.s8 %v6543
    %v6545 = vlaneseq
    %v6546 = vshrl.u32 %v6545, 7
    %v6547 = vsub.s32 %v6544, %v6546
    %v6548 = vrot.slane %v6541, %v6547
    %v6550 = vmul.f32 %v6529, %v6548
    %v6552 = vrot.slane %v5781, 4
    %v6554 = vadd.f32 %v6552, %v6550
    %v6555 = vtanh.pop %v6554
    %v6556 = vsub.f32 %v5774, %v6555
    %v6558 = vrot.slane %v6529, 2
    %v6560 = vmul.f32 %v6558, %v6556
    %v6561 = vadd.f32 %v6555, %v6560
    %s6562 = scalar_lea.vmem %s7, 7
    %6563 = vst.msk [vmem:[%s6562] ss:$8 sm:$0x3] %vm1053, %v6561
    %6564 = vst.msk [vmem:[%s6562] ss:$8 sm:$0x0] %vm1053, %v6561
    %v6566 = vlaneseq
    %v6567 = vshrl.u32 %v6566, 7
    %v6568 = vsub.s32 0, %v6567
    %v6569 = vrot.slane %v6561, %v6568
    %v6570 = vlaneseq
    %v6571 = vshrl.u32 %v6570, 7
    %v6572 = vsub.s32 1, %v6571
    %v6573 = vrot.slane %v6561, %v6572
    %v6576 = vpack.c.bf16 %v6569, %v6569
    %v6577 = vpack.c.bf16 %v6573, %v6573
    %v6578 = vld [vmem:[%s5] sm:$0xf]
    %v6579 = vld [vmem:[%s5 + $0x4] sm:$0xf]
    %v6580 = vld [vmem:[%s5 + $0x8] sm:$0xf]
    %v6581 = vld [vmem:[%s5 + $0xc] sm:$0xf]
    %v6582 = vld [vmem:[%s5 + $0x10] sm:$0xf]
    %v6583 = vld [vmem:[%s5 + $0x14] sm:$0xf]
    %v6584 = vld [vmem:[%s5 + $0x18] sm:$0xf]
    %v6585 = vld [vmem:[%s5 + $0x1c] sm:$0xf]
    %v6586 = vld [vmem:[%s5 + $0x20] sm:$0xf]
    %v6587 = vld [vmem:[%s5 + $0x24] sm:$0xf]
    %v6588 = vld [vmem:[%s5 + $0x28] sm:$0xf]
    %v6589 = vld [vmem:[%s5 + $0x2c] sm:$0xf]
    %v6590 = vld [vmem:[%s5 + $0x30] sm:$0xf]
    %v6591 = vld [vmem:[%s5 + $0x34] sm:$0xf]
    %v6592 = vld [vmem:[%s5 + $0x38] sm:$0xf]
    %v6593 = vld [vmem:[%s5 + $0x3c] sm:$0xf]
    %v6594 = vld [vmem:[%s5 + $0x40] sm:$0xf]
    %v6595 = vld [vmem:[%s5 + $0x44] sm:$0xf]
    %v6596 = vld [vmem:[%s5 + $0x48] sm:$0xf]
    %v6597 = vld [vmem:[%s5 + $0x4c] sm:$0xf]
    %v6598 = vld [vmem:[%s5 + $0x50] sm:$0xf]
    %v6599 = vld [vmem:[%s5 + $0x54] sm:$0xf]
    %v6600 = vld [vmem:[%s5 + $0x58] sm:$0xf]
    %v6601 = vld [vmem:[%s5 + $0x5c] sm:$0xf]
    %v6602 = vld [vmem:[%s5 + $0x60] sm:$0xf]
    %v6603 = vld [vmem:[%s5 + $0x64] sm:$0xf]
    %v6604 = vld [vmem:[%s5 + $0x68] sm:$0xf]
    %v6605 = vld [vmem:[%s5 + $0x6c] sm:$0xf]
    %v6606 = vld [vmem:[%s5 + $0x70] sm:$0xf]
    %v6607 = vld [vmem:[%s5 + $0x74] sm:$0xf]
    %v6608 = vld [vmem:[%s5 + $0x78] sm:$0xf]
    %v6609 = vld [vmem:[%s5 + $0x7c] sm:$0xf]
    %v6610 = vld [vmem:[%s6] sm:$0x1]
    %v6643 = vunpack.c.l.b16 %v6578
    %v6644 = vunpack.c.l.b16 %v6579
    %v6645 = vunpack.c.l.b16 %v6580
    %v6646 = vunpack.c.l.b16 %v6581
    %v6647 = vunpack.c.l.b16 %v6582
    %v6648 = vunpack.c.l.b16 %v6583
    %v6649 = vunpack.c.l.b16 %v6584
    %v6650 = vunpack.c.l.b16 %v6585
    %v6651 = vunpack.c.l.b16 %v6586
    %v6652 = vunpack.c.l.b16 %v6587
    %v6653 = vunpack.c.l.b16 %v6588
    %v6654 = vunpack.c.l.b16 %v6589
    %v6655 = vunpack.c.l.b16 %v6590
    %v6656 = vunpack.c.l.b16 %v6591
    %v6657 = vunpack.c.l.b16 %v6592
    %v6658 = vunpack.c.l.b16 %v6593
    %v6659 = vunpack.c.l.b16 %v6594
    %v6660 = vunpack.c.l.b16 %v6595
    %v6661 = vunpack.c.l.b16 %v6596
    %v6662 = vunpack.c.l.b16 %v6597
    %v6663 = vunpack.c.l.b16 %v6598
    %v6664 = vunpack.c.l.b16 %v6599
    %v6665 = vunpack.c.l.b16 %v6600
    %v6666 = vunpack.c.l.b16 %v6601
    %v6667 = vunpack.c.l.b16 %v6602
    %v6668 = vunpack.c.l.b16 %v6603
    %v6669 = vunpack.c.l.b16 %v6604
    %v6670 = vunpack.c.l.b16 %v6605
    %v6671 = vunpack.c.l.b16 %v6606
    %v6672 = vunpack.c.l.b16 %v6607
    %v6673 = vunpack.c.l.b16 %v6608
    %v6674 = vunpack.c.l.b16 %v6609
    %v6675 = vpack.c.b16 %v6644, %v6643
    %v6676 = vpack.c.b16 %v6646, %v6645
    %v6677 = vpack.c.b16 %v6648, %v6647
    %v6678 = vpack.c.b16 %v6650, %v6649
    %v6679 = vpack.c.b16 %v6652, %v6651
    %v6680 = vpack.c.b16 %v6654, %v6653
    %v6681 = vpack.c.b16 %v6656, %v6655
    %v6682 = vpack.c.b16 %v6658, %v6657
    %v6683 = vpack.c.b16 %v6660, %v6659
    %v6684 = vpack.c.b16 %v6662, %v6661
    %v6685 = vpack.c.b16 %v6664, %v6663
    %v6686 = vpack.c.b16 %v6666, %v6665
    %v6687 = vpack.c.b16 %v6668, %v6667
    %v6688 = vpack.c.b16 %v6670, %v6669
    %v6689 = vpack.c.b16 %v6672, %v6671
    %v6690 = vpack.c.b16 %v6674, %v6673
    %6707 = vmatprep.subr.bf16.mxu0 0
    %6708 = vmatpush1.bf16.msra.mxu0 %v6675
    %6709 = vmatprep.subr.bf16.mxu0 0
    %6710 = vmatpush1.bf16.msra.mxu0 %v6676
    %6711 = vmatprep.subr.bf16.mxu0 0
    %6712 = vmatpush1.bf16.msra.mxu0 %v6677
    %6713 = vmatprep.subr.bf16.mxu0 0
    %6714 = vmatpush1.bf16.msra.mxu0 %v6678
    %6715 = vmatprep.subr.bf16.mxu0 0
    %6716 = vmatpush1.bf16.msra.mxu0 %v6679
    %6717 = vmatprep.subr.bf16.mxu0 0
    %6718 = vmatpush1.bf16.msra.mxu0 %v6680
    %6719 = vmatprep.subr.bf16.mxu0 0
    %6720 = vmatpush1.bf16.msra.mxu0 %v6681
    %6721 = vmatprep.subr.bf16.mxu0 0
    %6722 = vmatpush1.bf16.msra.mxu0 %v6682
    %6723 = vmatprep.subr.bf16.mxu0 0
    %6724 = vmatpush1.bf16.msra.mxu0 %v6683
    %6725 = vmatprep.subr.bf16.mxu0 0
    %6726 = vmatpush1.bf16.msra.mxu0 %v6684
    %6727 = vmatprep.subr.bf16.mxu0 0
    %6728 = vmatpush1.bf16.msra.mxu0 %v6685
    %6729 = vmatprep.subr.bf16.mxu0 0
    %6730 = vmatpush1.bf16.msra.mxu0 %v6686
    %6731 = vmatprep.subr.bf16.mxu0 0
    %6732 = vmatpush1.bf16.msra.mxu0 %v6687
    %6733 = vmatprep.subr.bf16.mxu0 0
    %6734 = vmatpush1.bf16.msra.mxu0 %v6688
    %6735 = vmatprep.subr.bf16.mxu0 0
    %6736 = vmatpush1.bf16.msra.mxu0 %v6689
    %6737 = vmatprep.subr.bf16.mxu0 0
    %6738 = vmatpush1.bf16.msra.mxu0 %v6690
    %6739 = vmatprep.mubr.bf16.mxu0 %v6577
    %6740 = vmatmul.mubr.bf16.gmra.mrb[0].mxu0 %v6576
    %v6741 = vpop.f32.mrb[0].mxu0
    %v6742 = vadd.f32 %v6610, %v6741
    %v6743 = vpop.f32.mrb[0].mxu0
    %v6744 = vpop.f32.mrb[0].mxu0
    %v6745 = vpop.f32.mrb[0].mxu0
    %6746 = vdwg.mxu0
    %v6747 = vtanh.pop %v6742
    %6748 = vst [vmem:[#allocation3] sm:$0x1] %v6747
    // Predicated region
    $region30: #{encoder_rnn_forward.1} parent=1 // pred_check
      _
    $region31: #{encoder_rnn_forward.1} parent=1 // pred_check_branch
      %6750 = sbr.rel (0) target = $region33
    $region32: #{encoder_rnn_forward.1} parent=1 // pred_region
      _
    $region33: #{encoder_rnn_forward.1} parent=1 // pred_fallthru
      _
    // Predicated region
    $region34: #{encoder_rnn_forward.1} parent=1 // pred_check
      _
    $region35: #{encoder_rnn_forward.1} parent=1 // pred_check_branch
      %6752 = sbr.rel (0) target = $region37
    $region36: #{encoder_rnn_forward.1} parent=1 // pred_region
      %s6754 = ssub.s32 16, 16
      %6755 = vsyncadd [#allocation4], %s6754
      %s6757 = sshll.u32 [#allocation3], 4
      %s6758 = int_to_ptr.vmem [resolvable:$true] %s6757
      %6760 = dma.vmem_to_hbm [thread:$0]  %s6758, 16, %s8, [#allocation4]
    $region37: #{encoder_rnn_forward.1} parent=1 // pred_fallthru
      _
    // Predicated region
    $region38: #{encoder_rnn_forward.1} parent=1 // pred_check
      _
    $region39: #{encoder_rnn_forward.1} parent=1 // pred_check_branch
      %6762 = sbr.rel (0) target = $region41
    $region40: #{encoder_rnn_forward.1} parent=1 // pred_region
      _
    $region41: #{encoder_rnn_forward.1} parent=1 // pred_fallthru
      _
    // Predicated region
    $region42: #{encoder_rnn_forward.1} parent=1 // pred_check
      _
    $region43: #{encoder_rnn_forward.1} parent=1 // pred_check_branch
      %6764 = sbr.rel (0) target = $region45
    $region44: #{encoder_rnn_forward.1} parent=1 // pred_region
      %6765 = dma.done [#allocation4], 16
    $region45: #{encoder_rnn_forward.1} parent=1 // pred_fallthru
      _
    %6766 = vsyncpa [#allocation4], 1

</llo_original>
